<compile_context>
chip_gen: v5e
topology: v5e:2x2
jax: 0.10.0
libtpu: 0.0.40
codegen_flags: <defaults>
</compile_context>

<pallas_src>
from functools import partial

import jax
import jax.numpy as jnp
from jax import lax
from jax.experimental import pallas as pl
from jax.experimental.pallas import tpu as pltpu


def talking_head_attn_kernel(
    x_ref,       # (1, N, C)   VMEM  tokens of this batch (q rows sliced out)
    wq_ref,      # (C, C)      VMEM  transposed q weight        (mm dtype)
    wk_ref,      # (C, C)      VMEM  transposed k weight        (mm dtype)
    wv_ref,      # (C, C)      VMEM  transposed v weight        (mm dtype)
    wl_ref,      # (H, H)      SMEM  proj_l weight * scale      (f32)
    ww_ref,      # (H, H)      SMEM  proj_w weight              (f32)
    bwrep_ref,   # (1, C)      VMEM  repeat(proj_w bias, D)     (f32)
    wproj_ref,   # (C, C)      VMEM  transposed proj weight     (mm dtype)
    bproj_ref,   # (1, C)      VMEM  proj bias                  (f32)
    o_ref,       # (1, TQ, C)  VMEM
    q_scratch,   # (TQ, C)     VMEM  mm   per-tile q projection
    k_cache,     # (N, C)      VMEM  mm   cached across query tiles
    v_cache,     # (N, C)      VMEM  mm   cached across query tiles
    vsum_cache,  # (1, C)      VMEM  f32  sum_n v[n, :] (proj_w bias fold)
    s_scratch,   # (H, TQ, N)  VMEM  f32  pre-softmax (pre-mix) logits
    p_scratch,   # (H, TQ, N)  VMEM  mm   softmax probabilities
    *,
    num_heads,
    q_tile,
):
    C = x_ref.shape[2]
    H = num_heads
    D = C // H
    TQ = q_tile
    qi = pl.program_id(1)

    mm = wq_ref.dtype                       # matmul operand dtype (f32 or bf16)
    approx_rcp = jnp.dtype(mm) != jnp.dtype(jnp.float32)

    # ---- Stage 0: once per batch row, project K / V and cache them. -------
    @pl.when(qi == 0)
    def _():
        xkv = x_ref[0].astype(mm)                                      # (N, C)
        k = jnp.dot(xkv, wk_ref[...], preferred_element_type=jnp.float32)
        v = jnp.dot(xkv, wv_ref[...], preferred_element_type=jnp.float32)
        k_cache[...] = k.astype(mm)
        v_cache[...] = v.astype(mm)
        vsum_cache[...] = jnp.sum(v, axis=0, keepdims=True)            # (1, C)

    # ---- Per query tile: Q projection. -------------------------------------
    q_start = pl.multiple_of(qi * TQ, TQ)
    xq = x_ref[0, pl.ds(q_start, TQ), :].astype(mm)                    # (TQ, C)
    q = jnp.dot(xq, wq_ref[...], preferred_element_type=jnp.float32)   # (TQ, C)
    q_scratch[...] = q.astype(mm)

    # ---- Stage 1: per-head, D-deep logits on the MXU. ----------------------
    for h in range(H):
        q_h = q_scratch[:, h * D:(h + 1) * D]                          # (TQ, D)
        k_h = k_cache[:, h * D:(h + 1) * D]                            # (N, D)
        s_scratch[h] = lax.dot_general(q_h, k_h, (((1,), (1,)), ((), ())),
                                       preferred_element_type=jnp.float32)

    # ---- Stage 2: talking-heads mix #1 (proj_l, scale folded into wl;
    #      the proj_l bias is a per-head constant over keys -> cancels in
    #      softmax), then a numerically-stable softmax.  f32 stats. ---------
    for g in range(H):
        logit = wl_ref[g, 0] * s_scratch[0]
        for h in range(1, H):
            logit = logit + wl_ref[g, h] * s_scratch[h]
        m = jnp.max(logit, axis=-1, keepdims=True)
        e = jnp.exp(logit - m)
        denom = jnp.sum(e, axis=-1, keepdims=True)
        p_scratch[g] = (e * pl.reciprocal(denom, approx=approx_rcp)).astype(mm)

    # ---- Stage 3: talking-heads mix #2 (proj_w) + attn @ v per head.
    #      proj_w bias is folded analytically after the concat:
    #      (A + bw_g) @ v_g == A @ v_g + bw_g * sum_n v_g[n, :].  ------------
    outs = []
    for g in range(H):
        a_g = ww_ref[g, 0] * p_scratch[0]
        for h in range(1, H):
            a_g = a_g + ww_ref[g, h] * p_scratch[h]
        v_g = v_cache[:, g * D:(g + 1) * D]                            # (N, D)
        outs.append(jnp.dot(a_g.astype(mm), v_g,
                            preferred_element_type=jnp.float32))       # (TQ, D)

    pv = jnp.concatenate(outs, axis=-1)                                # (TQ, C)
    pv = pv + vsum_cache[...] * bwrep_ref[...]                         # bw fold

    # ---- Output projection: one full-C matmul + bias. ----------------------
    y = jnp.dot(pv.astype(mm), wproj_ref[...],
                preferred_element_type=jnp.float32) + bproj_ref[...]
    o_ref[0] = y.astype(o_ref.dtype)


def talking_head_attn(x, wqkv, wl, bl, ww, bw, wproj, bproj, *, num_heads,
                      q_tile=128, matmul_dtype=None):
    """Forward pass of TalkingHeadAttn. Weights in torch layout ([out, in])."""
    B, N, C = x.shape
    H = num_heads
    assert C % H == 0
    D = C // H
    scale = D ** (-0.5)
    del bl  # per-head constant added to every logit; cancels exactly in softmax

    # Query tile: largest divisor of N that does not exceed q_tile.
    TQ = min(N, q_tile)
    if N % TQ != 0:
        TQ = next(t for t in range(TQ, 0, -1) if N % t == 0)

    # bf16 MXU path by default at real CaiT widths; exact f32 at tiny widths.
    if matmul_dtype is None:
        matmul_dtype = jnp.bfloat16 if C >= 256 else x.dtype
    mm = jnp.dtype(matmul_dtype)
    mm_size = mm.itemsize
    out_size = jnp.dtype(x.dtype).itemsize

    # Host-side weight prep (torch layout [out, in] -> transposed operands).
    x_mm = x.astype(mm)
    wqkv_t = wqkv.T                                  # (C, 3C)
    wq_t = wqkv_t[:, :C].astype(mm)
    wk_t = wqkv_t[:, C:2 * C].astype(mm)
    wv_t = wqkv_t[:, 2 * C:].astype(mm)
    wproj_t = wproj.T.astype(mm)                     # (C, C)
    wl_scaled = (wl * scale).astype(jnp.float32)     # fold q-scale into proj_l
    ww32 = ww.astype(jnp.float32)
    bw_rep = jnp.repeat(bw, D).reshape(1, C).astype(jnp.float32)
    bproj2 = bproj.reshape(1, C).astype(jnp.float32)

    kernel = partial(talking_head_attn_kernel, num_heads=H, q_tile=TQ)

    # Explicit VMEM budget (double-buffered inputs + caches + logit scratch).
    # NOTE: the four (C, C) weight blocks have a constant block index; on
    # v7x (64 MiB VMEM) they could additionally be single-buffered via
    # pipeline_mode=pl.Buffered(1) if VMEM becomes the limiter.
    est_vmem = (2 * N * C * mm_size                  # x block (double-buffered)
                + 2 * 4 * C * C * mm_size            # weight blocks
                + 2 * TQ * C * out_size              # output block
                + (TQ + 2 * N) * C * mm_size         # q / k / v scratch
                + H * TQ * N * (4 + mm_size)         # logits + probs scratch
                + 6 * C * 4)                         # bias / vsum vectors
    vmem_limit = int(min(max(2 * est_vmem, 8 << 20), 96 << 20))

    flops = int(2 * B * (4 * N * C * C              # qkv + output projections
                         + 2 * N * N * C            # QK^T and PV
                         + 2 * H * H * N * N))      # two talking-head mixes
    transcendentals = int(B * H * N * N)
    bytes_accessed = int(B * N * C * (mm_size + out_size)
                         + 4 * C * C * mm_size
                         + (2 * H * H + 4 * C) * 4)

    return pl.pallas_call(
        kernel,
        out_shape=jax.ShapeDtypeStruct((B, N, C), x.dtype),
        grid=(B, N // TQ),
        in_specs=[
            pl.BlockSpec((1, N, C), lambda b, qi: (b, 0, 0)),   # x (q, k, v)
            pl.BlockSpec((C, C), lambda b, qi: (0, 0)),         # wq_t
            pl.BlockSpec((C, C), lambda b, qi: (0, 0)),         # wk_t
            pl.BlockSpec((C, C), lambda b, qi: (0, 0)),         # wv_t
            pl.BlockSpec(memory_space=pltpu.MemorySpace.SMEM),  # wl * scale
            pl.BlockSpec(memory_space=pltpu.MemorySpace.SMEM),  # ww
            pl.BlockSpec((1, C), lambda b, qi: (0, 0)),         # bw_rep
            pl.BlockSpec((C, C), lambda b, qi: (0, 0)),         # wproj_t
            pl.BlockSpec((1, C), lambda b, qi: (0, 0)),         # bproj
        ],
        out_specs=pl.BlockSpec((1, TQ, C), lambda b, qi: (b, qi, 0)),
        scratch_shapes=[
            pltpu.VMEM((TQ, C), mm),                 # q_scratch
            pltpu.VMEM((N, C), mm),                  # k_cache
            pltpu.VMEM((N, C), mm),                  # v_cache
            pltpu.VMEM((1, C), jnp.float32),         # vsum_cache
            pltpu.VMEM((H, TQ, N), jnp.float32),     # pre-softmax logits
            pltpu.VMEM((H, TQ, N), mm),              # softmax probabilities
        ],
        compiler_params=pltpu.CompilerParams(
            dimension_semantics=("parallel", "arbitrary"),
            vmem_limit_bytes=vmem_limit),
        cost_estimate=pl.CostEstimate(flops=flops,
                                      transcendentals=transcendentals,
                                      bytes_accessed=bytes_accessed),
    )(x_mm, wq_t, wk_t, wv_t, wl_scaled, ww32, bw_rep, wproj_t, bproj2)


def reference_forward(x, wqkv, wl, bl, ww, bw, wproj, bproj, *, num_heads):
    """Pure-JAX mirror of the PyTorch forward, for verification."""
    B, N, C = x.shape
    D = C // num_heads
    scale = D ** (-0.5)
    qkv = x @ wqkv.T                                              # (B, N, 3C)
    qkv = qkv.reshape(B, N, 3, num_heads, D).transpose(2, 0, 3, 1, 4)
    q, k, v = qkv[0] * scale, qkv[1], qkv[2]                      # (B, H, N, D)
    attn = q @ jnp.swapaxes(k, -2, -1)                            # (B, H, N, N)
    attn = jnp.einsum('bhnm,gh->bgnm', attn, wl) + bl[None, :, None, None]
    attn = jax.nn.softmax(attn, axis=-1)
    attn = jnp.einsum('bhnm,gh->bgnm', attn, ww) + bw[None, :, None, None]
    out = (attn @ v).transpose(0, 2, 1, 3).reshape(B, N, C)
    return out @ wproj.T + bproj


if __name__ == "__main__":
    B, N, C, H = 2, 8, 32, 8   # head_dim = 4

    key = jax.random.PRNGKey(0)
    keys = jax.random.split(key, 8)
    x     = jax.random.normal(keys[0], (B, N, C), jnp.float32)
    wqkv  = jax.random.normal(keys[1], (3 * C, C), jnp.float32) * 0.05   # torch: (out, in), bias=False
    wl    = jax.random.normal(keys[2], (H, H), jnp.float32) * 0.2        # proj_l weight
    bl    = jax.random.normal(keys[3], (H,), jnp.float32) * 0.05
    ww    = jax.random.normal(keys[4], (H, H), jnp.float32) * 0.2        # proj_w weight
    bw    = jax.random.normal(keys[5], (H,), jnp.float32) * 0.05
    wproj = jax.random.normal(keys[6], (C, C), jnp.float32) * 0.05       # proj weight
    bproj = jax.random.normal(keys[7], (C,), jnp.float32) * 0.05

    out = talking_head_attn(x, wqkv, wl, bl, ww, bw, wproj, bproj, num_heads=H)
    out = jax.block_until_ready(out)

    ref = reference_forward(x, wqkv, wl, bl, ww, bw, wproj, bproj, num_heads=H)
    assert out.shape == (B, N, C)
    assert jnp.allclose(out, ref, atol=1e-3, rtol=1e-3), "mismatch vs reference"

    print("KERNEL_OK")
</pallas_src>

<mosaic_0001>
module attributes {stable_mosaic.version = 11 : i64} {
  func.func @talking_head_attn_kernel(%arg0: i32, %arg1: i32, %arg2: memref<1x8x32xf32, #tpu.memory_space<vmem>>, %arg3: memref<32x32xf32, #tpu.memory_space<vmem>>, %arg4: memref<32x32xf32, #tpu.memory_space<vmem>>, %arg5: memref<32x32xf32, #tpu.memory_space<vmem>>, %arg6: memref<8x8xf32, #tpu.memory_space<smem>>, %arg7: memref<8x8xf32, #tpu.memory_space<smem>>, %arg8: memref<1x32xf32, #tpu.memory_space<vmem>>, %arg9: memref<32x32xf32, #tpu.memory_space<vmem>>, %arg10: memref<1x32xf32, #tpu.memory_space<vmem>>, %arg11: memref<1x8x32xf32, #tpu.memory_space<vmem>>, %arg12: memref<8x32xf32, #tpu.memory_space<vmem>>, %arg13: memref<8x32xf32, #tpu.memory_space<vmem>>, %arg14: memref<8x32xf32, #tpu.memory_space<vmem>>, %arg15: memref<1x32xf32, #tpu.memory_space<vmem>>, %arg16: memref<8x8x8xf32, #tpu.memory_space<vmem>>, %arg17: memref<8x8x8xf32, #tpu.memory_space<vmem>>) attributes {dimension_semantics = [#tpu.dimension_semantics<parallel>, #tpu.dimension_semantics<arbitrary>], iteration_bounds = array<i64: 2, 1>, scalar_prefetch = 0 : i64, scratch_operands = 6 : i64, tpu.core_type = #tpu.core_type<tc>, window_params = [{transform_indices = @transform_0, window_bounds = array<i64: 1, 8, 32>}, {pipeline_mode = #tpu.pipeline_mode<synchronous>, transform_indices = @transform_1, window_bounds = array<i64: 32, 32>}, {pipeline_mode = #tpu.pipeline_mode<synchronous>, transform_indices = @transform_2, window_bounds = array<i64: 32, 32>}, {pipeline_mode = #tpu.pipeline_mode<synchronous>, transform_indices = @transform_3, window_bounds = array<i64: 32, 32>}, {transform_indices = @transform_4, window_bounds = array<i64: 8, 8>}, {transform_indices = @transform_5, window_bounds = array<i64: 8, 8>}, {pipeline_mode = #tpu.pipeline_mode<synchronous>, transform_indices = @transform_6, window_bounds = array<i64: 1, 32>}, {pipeline_mode = #tpu.pipeline_mode<synchronous>, transform_indices = @transform_7, window_bounds = array<i64: 32, 32>}, {pipeline_mode = #tpu.pipeline_mode<synchronous>, transform_indices = @transform_8, window_bounds = array<i64: 1, 32>}, {transform_indices = @transform_9, window_bounds = array<i64: 1, 8, 32>}]} {
    %c0_i32 = arith.constant 0 : i32
    %0 = arith.cmpi eq, %arg1, %c0_i32 : i32
    %1 = arith.extui %0 : i1 to i32
    %c0_i32_0 = arith.constant 0 : i32
    %2 = arith.cmpi ne, %1, %c0_i32_0 : i32
    scf.if %2 {
      %c0_773 = arith.constant 0 : index
      %c0_774 = arith.constant 0 : index
      %c0_775 = arith.constant 0 : index
      %945 = vector.load %arg2[%c0_773, %c0_774, %c0_775] : memref<1x8x32xf32, #tpu.memory_space<vmem>>, vector<1x8x32xf32>
      %946 = vector.shape_cast %945 : vector<1x8x32xf32> to vector<8x32xf32>
      %c0_776 = arith.constant 0 : index
      %c0_777 = arith.constant 0 : index
      %947 = vector.load %arg4[%c0_776, %c0_777] : memref<32x32xf32, #tpu.memory_space<vmem>>, vector<32x32xf32>
      %cst_778 = arith.constant dense<0.000000e+00> : vector<8x32xf32>
      %948 = tpu.matmul %946, %947, %cst_778 {dimension_numbers = #tpu.dot_dimension_numbers<[1], [0], [0], [1], [0, 0, 1, 1], [], []>} : vector<8x32xf32>, vector<32x32xf32>, vector<8x32xf32> -> vector<8x32xf32>
      %c0_779 = arith.constant 0 : index
      %c0_780 = arith.constant 0 : index
      %949 = vector.load %arg5[%c0_779, %c0_780] : memref<32x32xf32, #tpu.memory_space<vmem>>, vector<32x32xf32>
      %cst_781 = arith.constant dense<0.000000e+00> : vector<8x32xf32>
      %950 = tpu.matmul %946, %949, %cst_781 {dimension_numbers = #tpu.dot_dimension_numbers<[1], [0], [0], [1], [0, 0, 1, 1], [], []>} : vector<8x32xf32>, vector<32x32xf32>, vector<8x32xf32> -> vector<8x32xf32>
      %c0_782 = arith.constant 0 : index
      %c0_783 = arith.constant 0 : index
      %951 = vector.load %arg13[%c0_782, %c0_783] : memref<8x32xf32, #tpu.memory_space<vmem>>, vector<8x32xf32>
      tpu.vector_store %arg13[%c0_782, %c0_783], %948 {strides = array<i32>} : memref<8x32xf32, #tpu.memory_space<vmem>>, vector<8x32xf32>,
      %c0_784 = arith.constant 0 : index
      %c0_785 = arith.constant 0 : index
      %952 = vector.load %arg14[%c0_784, %c0_785] : memref<8x32xf32, #tpu.memory_space<vmem>>, vector<8x32xf32>
      tpu.vector_store %arg14[%c0_784, %c0_785], %950 {strides = array<i32>} : memref<8x32xf32, #tpu.memory_space<vmem>>, vector<8x32xf32>,
      %cst_786 = arith.constant dense<0.000000e+00> : vector<32xf32>
      %953 = vector.multi_reduction <add>, %950, %cst_786 [0] : vector<8x32xf32> to vector<32xf32>
      %954 = vector.shape_cast %953 : vector<32xf32> to vector<1x32xf32>
      %c0_787 = arith.constant 0 : index
      %c0_788 = arith.constant 0 : index
      %955 = vector.load %arg15[%c0_787, %c0_788] : memref<1x32xf32, #tpu.memory_space<vmem>>, vector<1x32xf32>
      tpu.vector_store %arg15[%c0_787, %c0_788], %954 {strides = array<i32>} : memref<1x32xf32, #tpu.memory_space<vmem>>, vector<1x32xf32>,
    } else {
    }
    %c8_i32 = arith.constant 8 : i32
    %3 = arith.muli %arg1, %c8_i32 : i32
    %4 = tpu.assume_multiple %3, 8 : i32
    %c0 = arith.constant 0 : index
    %5 = arith.index_cast %4 : i32 to index
    %c0_1 = arith.constant 0 : index
    %6 = vector.load %arg2[%c0, %5, %c0_1] : memref<1x8x32xf32, #tpu.memory_space<vmem>>, vector<1x8x32xf32>
    %7 = vector.shape_cast %6 : vector<1x8x32xf32> to vector<8x32xf32>
    %c0_2 = arith.constant 0 : index
    %c0_3 = arith.constant 0 : index
    %8 = vector.load %arg3[%c0_2, %c0_3] : memref<32x32xf32, #tpu.memory_space<vmem>>, vector<32x32xf32>
    %cst = arith.constant dense<0.000000e+00> : vector<8x32xf32>
    %9 = tpu.matmul %7, %8, %cst {dimension_numbers = #tpu.dot_dimension_numbers<[1], [0], [0], [1], [0, 0, 1, 1], [], []>} : vector<8x32xf32>, vector<32x32xf32>, vector<8x32xf32> -> vector<8x32xf32>
    %c0_4 = arith.constant 0 : index
    %c0_5 = arith.constant 0 : index
    %10 = vector.load %arg12[%c0_4, %c0_5] : memref<8x32xf32, #tpu.memory_space<vmem>>, vector<8x32xf32>
    tpu.vector_store %arg12[%c0_4, %c0_5], %9 {strides = array<i32>} : memref<8x32xf32, #tpu.memory_space<vmem>>, vector<8x32xf32>,
    %c0_6 = arith.constant 0 : index
    %c0_7 = arith.constant 0 : index
    %11 = vector.load %arg12[%c0_6, %c0_7] : memref<8x32xf32, #tpu.memory_space<vmem>>, vector<8x4xf32>
    %c0_8 = arith.constant 0 : index
    %c0_9 = arith.constant 0 : index
    %12 = vector.load %arg13[%c0_8, %c0_9] : memref<8x32xf32, #tpu.memory_space<vmem>>, vector<8x4xf32>
    %cst_10 = arith.constant dense<0.000000e+00> : vector<8x8xf32>
    %13 = tpu.matmul %11, %12, %cst_10 {dimension_numbers = #tpu.dot_dimension_numbers<[1], [1], [0], [0], [0, 0, 1, 0], [], []>} : vector<8x4xf32>, vector<8x4xf32>, vector<8x8xf32> -> vector<8x8xf32>
    %c0_11 = arith.constant 0 : index
    %c0_12 = arith.constant 0 : index
    %c0_13 = arith.constant 0 : index
    %14 = vector.load %arg16[%c0_11, %c0_12, %c0_13] : memref<8x8x8xf32, #tpu.memory_space<vmem>>, vector<1x8x8xf32>
    %15 = vector.shape_cast %14 : vector<1x8x8xf32> to vector<8x8xf32>
    %16 = vector.shape_cast %13 : vector<8x8xf32> to vector<1x8x8xf32>
    tpu.vector_store %arg16[%c0_11, %c0_12, %c0_13], %16 {strides = array<i32>} : memref<8x8x8xf32, #tpu.memory_space<vmem>>, vector<1x8x8xf32>,
    %c0_14 = arith.constant 0 : index
    %c4 = arith.constant 4 : index
    %17 = vector.load %arg12[%c0_14, %c4] : memref<8x32xf32, #tpu.memory_space<vmem>>, vector<8x4xf32>
    %c0_15 = arith.constant 0 : index
    %c4_16 = arith.constant 4 : index
    %18 = vector.load %arg13[%c0_15, %c4_16] : memref<8x32xf32, #tpu.memory_space<vmem>>, vector<8x4xf32>
    %cst_17 = arith.constant dense<0.000000e+00> : vector<8x8xf32>
    %19 = tpu.matmul %17, %18, %cst_17 {dimension_numbers = #tpu.dot_dimension_numbers<[1], [1], [0], [0], [0, 0, 1, 0], [], []>} : vector<8x4xf32>, vector<8x4xf32>, vector<8x8xf32> -> vector<8x8xf32>
    %c1 = arith.constant 1 : index
    %c0_18 = arith.constant 0 : index
    %c0_19 = arith.constant 0 : index
    %20 = vector.load %arg16[%c1, %c0_18, %c0_19] : memref<8x8x8xf32, #tpu.memory_space<vmem>>, vector<1x8x8xf32>
    %21 = vector.shape_cast %20 : vector<1x8x8xf32> to vector<8x8xf32>
    %22 = vector.shape_cast %19 : vector<8x8xf32> to vector<1x8x8xf32>
    tpu.vector_store %arg16[%c1, %c0_18, %c0_19], %22 {strides = array<i32>} : memref<8x8x8xf32, #tpu.memory_space<vmem>>, vector<1x8x8xf32>,
    %c0_20 = arith.constant 0 : index
    %c8 = arith.constant 8 : index
    %23 = vector.load %arg12[%c0_20, %c8] : memref<8x32xf32, #tpu.memory_space<vmem>>, vector<8x4xf32>
    %c0_21 = arith.constant 0 : index
    %c8_22 = arith.constant 8 : index
    %24 = vector.load %arg13[%c0_21, %c8_22] : memref<8x32xf32, #tpu.memory_space<vmem>>, vector<8x4xf32>
    %cst_23 = arith.constant dense<0.000000e+00> : vector<8x8xf32>
    %25 = tpu.matmul %23, %24, %cst_23 {dimension_numbers = #tpu.dot_dimension_numbers<[1], [1], [0], [0], [0, 0, 1, 0], [], []>} : vector<8x4xf32>, vector<8x4xf32>, vector<8x8xf32> -> vector<8x8xf32>
    %c2 = arith.constant 2 : index
    %c0_24 = arith.constant 0 : index
    %c0_25 = arith.constant 0 : index
    %26 = vector.load %arg16[%c2, %c0_24, %c0_25] : memref<8x8x8xf32, #tpu.memory_space<vmem>>, vector<1x8x8xf32>
    %27 = vector.shape_cast %26 : vector<1x8x8xf32> to vector<8x8xf32>
    %28 = vector.shape_cast %25 : vector<8x8xf32> to vector<1x8x8xf32>
    tpu.vector_store %arg16[%c2, %c0_24, %c0_25], %28 {strides = array<i32>} : memref<8x8x8xf32, #tpu.memory_space<vmem>>, vector<1x8x8xf32>,
    %c0_26 = arith.constant 0 : index
    %c12 = arith.constant 12 : index
    %29 = vector.load %arg12[%c0_26, %c12] : memref<8x32xf32, #tpu.memory_space<vmem>>, vector<8x4xf32>
    %c0_27 = arith.constant 0 : index
    %c12_28 = arith.constant 12 : index
    %30 = vector.load %arg13[%c0_27, %c12_28] : memref<8x32xf32, #tpu.memory_space<vmem>>, vector<8x4xf32>
    %cst_29 = arith.constant dense<0.000000e+00> : vector<8x8xf32>
    %31 = tpu.matmul %29, %30, %cst_29 {dimension_numbers = #tpu.dot_dimension_numbers<[1], [1], [0], [0], [0, 0, 1, 0], [], []>} : vector<8x4xf32>, vector<8x4xf32>, vector<8x8xf32> -> vector<8x8xf32>
    %c3 = arith.constant 3 : index
    %c0_30 = arith.constant 0 : index
    %c0_31 = arith.constant 0 : index
    %32 = vector.load %arg16[%c3, %c0_30, %c0_31] : memref<8x8x8xf32, #tpu.memory_space<vmem>>, vector<1x8x8xf32>
    %33 = vector.shape_cast %32 : vector<1x8x8xf32> to vector<8x8xf32>
    %34 = vector.shape_cast %31 : vector<8x8xf32> to vector<1x8x8xf32>
    tpu.vector_store %arg16[%c3, %c0_30, %c0_31], %34 {strides = array<i32>} : memref<8x8x8xf32, #tpu.memory_space<vmem>>, vector<1x8x8xf32>,
    %c0_32 = arith.constant 0 : index
    %c16 = arith.constant 16 : index
    %35 = vector.load %arg12[%c0_32, %c16] : memref<8x32xf32, #tpu.memory_space<vmem>>, vector<8x4xf32>
    %c0_33 = arith.constant 0 : index
    %c16_34 = arith.constant 16 : index
    %36 = vector.load %arg13[%c0_33, %c16_34] : memref<8x32xf32, #tpu.memory_space<vmem>>, vector<8x4xf32>
    %cst_35 = arith.constant dense<0.000000e+00> : vector<8x8xf32>
    %37 = tpu.matmul %35, %36, %cst_35 {dimension_numbers = #tpu.dot_dimension_numbers<[1], [1], [0], [0], [0, 0, 1, 0], [], []>} : vector<8x4xf32>, vector<8x4xf32>, vector<8x8xf32> -> vector<8x8xf32>
    %c4_36 = arith.constant 4 : index
    %c0_37 = arith.constant 0 : index
    %c0_38 = arith.constant 0 : index
    %38 = vector.load %arg16[%c4_36, %c0_37, %c0_38] : memref<8x8x8xf32, #tpu.memory_space<vmem>>, vector<1x8x8xf32>
    %39 = vector.shape_cast %38 : vector<1x8x8xf32> to vector<8x8xf32>
    %40 = vector.shape_cast %37 : vector<8x8xf32> to vector<1x8x8xf32>
    tpu.vector_store %arg16[%c4_36, %c0_37, %c0_38], %40 {strides = array<i32>} : memref<8x8x8xf32, #tpu.memory_space<vmem>>, vector<1x8x8xf32>,
    %c0_39 = arith.constant 0 : index
    %c20 = arith.constant 20 : index
    %41 = vector.load %arg12[%c0_39, %c20] : memref<8x32xf32, #tpu.memory_space<vmem>>, vector<8x4xf32>
    %c0_40 = arith.constant 0 : index
    %c20_41 = arith.constant 20 : index
    %42 = vector.load %arg13[%c0_40, %c20_41] : memref<8x32xf32, #tpu.memory_space<vmem>>, vector<8x4xf32>
    %cst_42 = arith.constant dense<0.000000e+00> : vector<8x8xf32>
    %43 = tpu.matmul %41, %42, %cst_42 {dimension_numbers = #tpu.dot_dimension_numbers<[1], [1], [0], [0], [0, 0, 1, 0], [], []>} : vector<8x4xf32>, vector<8x4xf32>, vector<8x8xf32> -> vector<8x8xf32>
    %c5 = arith.constant 5 : index
    %c0_43 = arith.constant 0 : index
    %c0_44 = arith.constant 0 : index
    %44 = vector.load %arg16[%c5, %c0_43, %c0_44] : memref<8x8x8xf32, #tpu.memory_space<vmem>>, vector<1x8x8xf32>
    %45 = vector.shape_cast %44 : vector<1x8x8xf32> to vector<8x8xf32>
    %46 = vector.shape_cast %43 : vector<8x8xf32> to vector<1x8x8xf32>
    tpu.vector_store %arg16[%c5, %c0_43, %c0_44], %46 {strides = array<i32>} : memref<8x8x8xf32, #tpu.memory_space<vmem>>, vector<1x8x8xf32>,
    %c0_45 = arith.constant 0 : index
    %c24 = arith.constant 24 : index
    %47 = vector.load %arg12[%c0_45, %c24] : memref<8x32xf32, #tpu.memory_space<vmem>>, vector<8x4xf32>
    %c0_46 = arith.constant 0 : index
    %c24_47 = arith.constant 24 : index
    %48 = vector.load %arg13[%c0_46, %c24_47] : memref<8x32xf32, #tpu.memory_space<vmem>>, vector<8x4xf32>
    %cst_48 = arith.constant dense<0.000000e+00> : vector<8x8xf32>
    %49 = tpu.matmul %47, %48, %cst_48 {dimension_numbers = #tpu.dot_dimension_numbers<[1], [1], [0], [0], [0, 0, 1, 0], [], []>} : vector<8x4xf32>, vector<8x4xf32>, vector<8x8xf32> -> vector<8x8xf32>
    %c6 = arith.constant 6 : index
    %c0_49 = arith.constant 0 : index
    %c0_50 = arith.constant 0 : index
    %50 = vector.load %arg16[%c6, %c0_49, %c0_50] : memref<8x8x8xf32, #tpu.memory_space<vmem>>, vector<1x8x8xf32>
    %51 = vector.shape_cast %50 : vector<1x8x8xf32> to vector<8x8xf32>
    %52 = vector.shape_cast %49 : vector<8x8xf32> to vector<1x8x8xf32>
    tpu.vector_store %arg16[%c6, %c0_49, %c0_50], %52 {strides = array<i32>} : memref<8x8x8xf32, #tpu.memory_space<vmem>>, vector<1x8x8xf32>,
    %c0_51 = arith.constant 0 : index
    %c28 = arith.constant 28 : index
    %53 = vector.load %arg12[%c0_51, %c28] : memref<8x32xf32, #tpu.memory_space<vmem>>, vector<8x4xf32>
    %c0_52 = arith.constant 0 : index
    %c28_53 = arith.constant 28 : index
    %54 = vector.load %arg13[%c0_52, %c28_53] : memref<8x32xf32, #tpu.memory_space<vmem>>, vector<8x4xf32>
    %cst_54 = arith.constant dense<0.000000e+00> : vector<8x8xf32>
    %55 = tpu.matmul %53, %54, %cst_54 {dimension_numbers = #tpu.dot_dimension_numbers<[1], [1], [0], [0], [0, 0, 1, 0], [], []>} : vector<8x4xf32>, vector<8x4xf32>, vector<8x8xf32> -> vector<8x8xf32>
    %c7 = arith.constant 7 : index
    %c0_55 = arith.constant 0 : index
    %c0_56 = arith.constant 0 : index
    %56 = vector.load %arg16[%c7, %c0_55, %c0_56] : memref<8x8x8xf32, #tpu.memory_space<vmem>>, vector<1x8x8xf32>
    %57 = vector.shape_cast %56 : vector<1x8x8xf32> to vector<8x8xf32>
    %58 = vector.shape_cast %55 : vector<8x8xf32> to vector<1x8x8xf32>
    tpu.vector_store %arg16[%c7, %c0_55, %c0_56], %58 {strides = array<i32>} : memref<8x8x8xf32, #tpu.memory_space<vmem>>, vector<1x8x8xf32>,
    %c0_57 = arith.constant 0 : index
    %c0_58 = arith.constant 0 : index
    %59 = memref.load %arg6[%c0_57, %c0_58] : memref<8x8xf32, #tpu.memory_space<smem>>
    %c0_59 = arith.constant 0 : index
    %c0_60 = arith.constant 0 : index
    %c0_61 = arith.constant 0 : index
    %60 = vector.load %arg16[%c0_59, %c0_60, %c0_61] : memref<8x8x8xf32, #tpu.memory_space<vmem>>, vector<1x8x8xf32>
    %61 = vector.shape_cast %60 : vector<1x8x8xf32> to vector<8x8xf32>
    %62 = vector.broadcast %59 : f32 to vector<8x8xf32>
    %63 = arith.mulf %62, %61 : vector<8x8xf32>
    %c0_62 = arith.constant 0 : index
    %c1_63 = arith.constant 1 : index
    %64 = memref.load %arg6[%c0_62, %c1_63] : memref<8x8xf32, #tpu.memory_space<smem>>
    %c1_64 = arith.constant 1 : index
    %c0_65 = arith.constant 0 : index
    %c0_66 = arith.constant 0 : index
    %65 = vector.load %arg16[%c1_64, %c0_65, %c0_66] : memref<8x8x8xf32, #tpu.memory_space<vmem>>, vector<1x8x8xf32>
    %66 = vector.shape_cast %65 : vector<1x8x8xf32> to vector<8x8xf32>
    %67 = vector.broadcast %64 : f32 to vector<8x8xf32>
    %68 = arith.mulf %67, %66 : vector<8x8xf32>
    %69 = arith.addf %63, %68 : vector<8x8xf32>
    %c0_67 = arith.constant 0 : index
    %c2_68 = arith.constant 2 : index
    %70 = memref.load %arg6[%c0_67, %c2_68] : memref<8x8xf32, #tpu.memory_space<smem>>
    %c2_69 = arith.constant 2 : index
    %c0_70 = arith.constant 0 : index
    %c0_71 = arith.constant 0 : index
    %71 = vector.load %arg16[%c2_69, %c0_70, %c0_71] : memref<8x8x8xf32, #tpu.memory_space<vmem>>, vector<1x8x8xf32>
    %72 = vector.shape_cast %71 : vector<1x8x8xf32> to vector<8x8xf32>
    %73 = vector.broadcast %70 : f32 to vector<8x8xf32>
    %74 = arith.mulf %73, %72 : vector<8x8xf32>
    %75 = arith.addf %69, %74 : vector<8x8xf32>
    %c0_72 = arith.constant 0 : index
    %c3_73 = arith.constant 3 : index
    %76 = memref.load %arg6[%c0_72, %c3_73] : memref<8x8xf32, #tpu.memory_space<smem>>
    %c3_74 = arith.constant 3 : index
    %c0_75 = arith.constant 0 : index
    %c0_76 = arith.constant 0 : index
    %77 = vector.load %arg16[%c3_74, %c0_75, %c0_76] : memref<8x8x8xf32, #tpu.memory_space<vmem>>, vector<1x8x8xf32>
    %78 = vector.shape_cast %77 : vector<1x8x8xf32> to vector<8x8xf32>
    %79 = vector.broadcast %76 : f32 to vector<8x8xf32>
    %80 = arith.mulf %79, %78 : vector<8x8xf32>
    %81 = arith.addf %75, %80 : vector<8x8xf32>
    %c0_77 = arith.constant 0 : index
    %c4_78 = arith.constant 4 : index
    %82 = memref.load %arg6[%c0_77, %c4_78] : memref<8x8xf32, #tpu.memory_space<smem>>
    %c4_79 = arith.constant 4 : index
    %c0_80 = arith.constant 0 : index
    %c0_81 = arith.constant 0 : index
    %83 = vector.load %arg16[%c4_79, %c0_80, %c0_81] : memref<8x8x8xf32, #tpu.memory_space<vmem>>, vector<1x8x8xf32>
    %84 = vector.shape_cast %83 : vector<1x8x8xf32> to vector<8x8xf32>
    %85 = vector.broadcast %82 : f32 to vector<8x8xf32>
    %86 = arith.mulf %85, %84 : vector<8x8xf32>
    %87 = arith.addf %81, %86 : vector<8x8xf32>
    %c0_82 = arith.constant 0 : index
    %c5_83 = arith.constant 5 : index
    %88 = memref.load %arg6[%c0_82, %c5_83] : memref<8x8xf32, #tpu.memory_space<smem>>
    %c5_84 = arith.constant 5 : index
    %c0_85 = arith.constant 0 : index
    %c0_86 = arith.constant 0 : index
    %89 = vector.load %arg16[%c5_84, %c0_85, %c0_86] : memref<8x8x8xf32, #tpu.memory_space<vmem>>, vector<1x8x8xf32>
    %90 = vector.shape_cast %89 : vector<1x8x8xf32> to vector<8x8xf32>
    %91 = vector.broadcast %88 : f32 to vector<8x8xf32>
    %92 = arith.mulf %91, %90 : vector<8x8xf32>
    %93 = arith.addf %87, %92 : vector<8x8xf32>
    %c0_87 = arith.constant 0 : index
    %c6_88 = arith.constant 6 : index
    %94 = memref.load %arg6[%c0_87, %c6_88] : memref<8x8xf32, #tpu.memory_space<smem>>
    %c6_89 = arith.constant 6 : index
    %c0_90 = arith.constant 0 : index
    %c0_91 = arith.constant 0 : index
    %95 = vector.load %arg16[%c6_89, %c0_90, %c0_91] : memref<8x8x8xf32, #tpu.memory_space<vmem>>, vector<1x8x8xf32>
    %96 = vector.shape_cast %95 : vector<1x8x8xf32> to vector<8x8xf32>
    %97 = vector.broadcast %94 : f32 to vector<8x8xf32>
    %98 = arith.mulf %97, %96 : vector<8x8xf32>
    %99 = arith.addf %93, %98 : vector<8x8xf32>
    %c0_92 = arith.constant 0 : index
    %c7_93 = arith.constant 7 : index
    %100 = memref.load %arg6[%c0_92, %c7_93] : memref<8x8xf32, #tpu.memory_space<smem>>
    %c7_94 = arith.constant 7 : index
    %c0_95 = arith.constant 0 : index
    %c0_96 = arith.constant 0 : index
    %101 = vector.load %arg16[%c7_94, %c0_95, %c0_96] : memref<8x8x8xf32, #tpu.memory_space<vmem>>, vector<1x8x8xf32>
    %102 = vector.shape_cast %101 : vector<1x8x8xf32> to vector<8x8xf32>
    %103 = vector.broadcast %100 : f32 to vector<8x8xf32>
    %104 = arith.mulf %103, %102 : vector<8x8xf32>
    %105 = arith.addf %99, %104 : vector<8x8xf32>
    %cst_97 = arith.constant dense<0xFF800000> : vector<8xf32>
    %106 = vector.multi_reduction <maximumf>, %105, %cst_97 [1] : vector<8x8xf32> to vector<8xf32>
    %107 = vector.shape_cast %106 : vector<8xf32> to vector<8x1xf32>
    %108 = vector.broadcast %107 : vector<8x1xf32> to vector<8x8xf32>
    %109 = arith.subf %105, %108 : vector<8x8xf32>
    %110 = math.exp %109 : vector<8x8xf32>
    %cst_98 = arith.constant dense<0.000000e+00> : vector<8xf32>
    %111 = vector.multi_reduction <add>, %110, %cst_98 [1] : vector<8x8xf32> to vector<8xf32>
    %112 = vector.shape_cast %111 : vector<8xf32> to vector<8x1xf32>
    %113 = tpu.reciprocal %112 : vector<8x1xf32> -> vector<8x1xf32>
    %114 = vector.broadcast %113 : vector<8x1xf32> to vector<8x8xf32>
    %115 = arith.mulf %110, %114 : vector<8x8xf32>
    %c0_99 = arith.constant 0 : index
    %c0_100 = arith.constant 0 : index
    %c0_101 = arith.constant 0 : index
    %116 = vector.load %arg17[%c0_99, %c0_100, %c0_101] : memref<8x8x8xf32, #tpu.memory_space<vmem>>, vector<1x8x8xf32>
    %117 = vector.shape_cast %116 : vector<1x8x8xf32> to vector<8x8xf32>
    %118 = vector.shape_cast %115 : vector<8x8xf32> to vector<1x8x8xf32>
    tpu.vector_store %arg17[%c0_99, %c0_100, %c0_101], %118 {strides = array<i32>} : memref<8x8x8xf32, #tpu.memory_space<vmem>>, vector<1x8x8xf32>,
    %c1_102 = arith.constant 1 : index
    %c0_103 = arith.constant 0 : index
    %119 = memref.load %arg6[%c1_102, %c0_103] : memref<8x8xf32, #tpu.memory_space<smem>>
    %c0_104 = arith.constant 0 : index
    %c0_105 = arith.constant 0 : index
    %c0_106 = arith.constant 0 : index
    %120 = vector.load %arg16[%c0_104, %c0_105, %c0_106] : memref<8x8x8xf32, #tpu.memory_space<vmem>>, vector<1x8x8xf32>
    %121 = vector.shape_cast %120 : vector<1x8x8xf32> to vector<8x8xf32>
    %122 = vector.broadcast %119 : f32 to vector<8x8xf32>
    %123 = arith.mulf %122, %121 : vector<8x8xf32>
    %c1_107 = arith.constant 1 : index
    %c1_108 = arith.constant 1 : index
    %124 = memref.load %arg6[%c1_107, %c1_108] : memref<8x8xf32, #tpu.memory_space<smem>>
    %c1_109 = arith.constant 1 : index
    %c0_110 = arith.constant 0 : index
    %c0_111 = arith.constant 0 : index
    %125 = vector.load %arg16[%c1_109, %c0_110, %c0_111] : memref<8x8x8xf32, #tpu.memory_space<vmem>>, vector<1x8x8xf32>
    %126 = vector.shape_cast %125 : vector<1x8x8xf32> to vector<8x8xf32>
    %127 = vector.broadcast %124 : f32 to vector<8x8xf32>
    %128 = arith.mulf %127, %126 : vector<8x8xf32>
    %129 = arith.addf %123, %128 : vector<8x8xf32>
    %c1_112 = arith.constant 1 : index
    %c2_113 = arith.constant 2 : index
    %130 = memref.load %arg6[%c1_112, %c2_113] : memref<8x8xf32, #tpu.memory_space<smem>>
    %c2_114 = arith.constant 2 : index
    %c0_115 = arith.constant 0 : index
    %c0_116 = arith.constant 0 : index
    %131 = vector.load %arg16[%c2_114, %c0_115, %c0_116] : memref<8x8x8xf32, #tpu.memory_space<vmem>>, vector<1x8x8xf32>
    %132 = vector.shape_cast %131 : vector<1x8x8xf32> to vector<8x8xf32>
    %133 = vector.broadcast %130 : f32 to vector<8x8xf32>
    %134 = arith.mulf %133, %132 : vector<8x8xf32>
    %135 = arith.addf %129, %134 : vector<8x8xf32>
    %c1_117 = arith.constant 1 : index
    %c3_118 = arith.constant 3 : index
    %136 = memref.load %arg6[%c1_117, %c3_118] : memref<8x8xf32, #tpu.memory_space<smem>>
    %c3_119 = arith.constant 3 : index
    %c0_120 = arith.constant 0 : index
    %c0_121 = arith.constant 0 : index
    %137 = vector.load %arg16[%c3_119, %c0_120, %c0_121] : memref<8x8x8xf32, #tpu.memory_space<vmem>>, vector<1x8x8xf32>
    %138 = vector.shape_cast %137 : vector<1x8x8xf32> to vector<8x8xf32>
    %139 = vector.broadcast %136 : f32 to vector<8x8xf32>
    %140 = arith.mulf %139, %138 : vector<8x8xf32>
    %141 = arith.addf %135, %140 : vector<8x8xf32>
    %c1_122 = arith.constant 1 : index
    %c4_123 = arith.constant 4 : index
    %142 = memref.load %arg6[%c1_122, %c4_123] : memref<8x8xf32, #tpu.memory_space<smem>>
    %c4_124 = arith.constant 4 : index
    %c0_125 = arith.constant 0 : index
    %c0_126 = arith.constant 0 : index
    %143 = vector.load %arg16[%c4_124, %c0_125, %c0_126] : memref<8x8x8xf32, #tpu.memory_space<vmem>>, vector<1x8x8xf32>
    %144 = vector.shape_cast %143 : vector<1x8x8xf32> to vector<8x8xf32>
    %145 = vector.broadcast %142 : f32 to vector<8x8xf32>
    %146 = arith.mulf %145, %144 : vector<8x8xf32>
    %147 = arith.addf %141, %146 : vector<8x8xf32>
    %c1_127 = arith.constant 1 : index
    %c5_128 = arith.constant 5 : index
    %148 = memref.load %arg6[%c1_127, %c5_128] : memref<8x8xf32, #tpu.memory_space<smem>>
    %c5_129 = arith.constant 5 : index
    %c0_130 = arith.constant 0 : index
    %c0_131 = arith.constant 0 : index
    %149 = vector.load %arg16[%c5_129, %c0_130, %c0_131] : memref<8x8x8xf32, #tpu.memory_space<vmem>>, vector<1x8x8xf32>
    %150 = vector.shape_cast %149 : vector<1x8x8xf32> to vector<8x8xf32>
    %151 = vector.broadcast %148 : f32 to vector<8x8xf32>
    %152 = arith.mulf %151, %150 : vector<8x8xf32>
    %153 = arith.addf %147, %152 : vector<8x8xf32>
    %c1_132 = arith.constant 1 : index
    %c6_133 = arith.constant 6 : index
    %154 = memref.load %arg6[%c1_132, %c6_133] : memref<8x8xf32, #tpu.memory_space<smem>>
    %c6_134 = arith.constant 6 : index
    %c0_135 = arith.constant 0 : index
    %c0_136 = arith.constant 0 : index
    %155 = vector.load %arg16[%c6_134, %c0_135, %c0_136] : memref<8x8x8xf32, #tpu.memory_space<vmem>>, vector<1x8x8xf32>
    %156 = vector.shape_cast %155 : vector<1x8x8xf32> to vector<8x8xf32>
    %157 = vector.broadcast %154 : f32 to vector<8x8xf32>
    %158 = arith.mulf %157, %156 : vector<8x8xf32>
    %159 = arith.addf %153, %158 : vector<8x8xf32>
    %c1_137 = arith.constant 1 : index
    %c7_138 = arith.constant 7 : index
    %160 = memref.load %arg6[%c1_137, %c7_138] : memref<8x8xf32, #tpu.memory_space<smem>>
    %c7_139 = arith.constant 7 : index
    %c0_140 = arith.constant 0 : index
    %c0_141 = arith.constant 0 : index
    %161 = vector.load %arg16[%c7_139, %c0_140, %c0_141] : memref<8x8x8xf32, #tpu.memory_space<vmem>>, vector<1x8x8xf32>
    %162 = vector.shape_cast %161 : vector<1x8x8xf32> to vector<8x8xf32>
    %163 = vector.broadcast %160 : f32 to vector<8x8xf32>
    %164 = arith.mulf %163, %162 : vector<8x8xf32>
    %165 = arith.addf %159, %164 : vector<8x8xf32>
    %cst_142 = arith.constant dense<0xFF800000> : vector<8xf32>
    %166 = vector.multi_reduction <maximumf>, %165, %cst_142 [1] : vector<8x8xf32> to vector<8xf32>
    %167 = vector.shape_cast %166 : vector<8xf32> to vector<8x1xf32>
    %168 = vector.broadcast %167 : vector<8x1xf32> to vector<8x8xf32>
    %169 = arith.subf %165, %168 : vector<8x8xf32>
    %170 = math.exp %169 : vector<8x8xf32>
    %cst_143 = arith.constant dense<0.000000e+00> : vector<8xf32>
    %171 = vector.multi_reduction <add>, %170, %cst_143 [1] : vector<8x8xf32> to vector<8xf32>
    %172 = vector.shape_cast %171 : vector<8xf32> to vector<8x1xf32>
    %173 = tpu.reciprocal %172 : vector<8x1xf32> -> vector<8x1xf32>
    %174 = vector.broadcast %173 : vector<8x1xf32> to vector<8x8xf32>
    %175 = arith.mulf %170, %174 : vector<8x8xf32>
    %c1_144 = arith.constant 1 : index
    %c0_145 = arith.constant 0 : index
    %c0_146 = arith.constant 0 : index
    %176 = vector.load %arg17[%c1_144, %c0_145, %c0_146] : memref<8x8x8xf32, #tpu.memory_space<vmem>>, vector<1x8x8xf32>
    %177 = vector.shape_cast %176 : vector<1x8x8xf32> to vector<8x8xf32>
    %178 = vector.shape_cast %175 : vector<8x8xf32> to vector<1x8x8xf32>
    tpu.vector_store %arg17[%c1_144, %c0_145, %c0_146], %178 {strides = array<i32>} : memref<8x8x8xf32, #tpu.memory_space<vmem>>, vector<1x8x8xf32>,
    %c2_147 = arith.constant 2 : index
    %c0_148 = arith.constant 0 : index
    %179 = memref.load %arg6[%c2_147, %c0_148] : memref<8x8xf32, #tpu.memory_space<smem>>
    %c0_149 = arith.constant 0 : index
    %c0_150 = arith.constant 0 : index
    %c0_151 = arith.constant 0 : index
    %180 = vector.load %arg16[%c0_149, %c0_150, %c0_151] : memref<8x8x8xf32, #tpu.memory_space<vmem>>, vector<1x8x8xf32>
    %181 = vector.shape_cast %180 : vector<1x8x8xf32> to vector<8x8xf32>
    %182 = vector.broadcast %179 : f32 to vector<8x8xf32>
    %183 = arith.mulf %182, %181 : vector<8x8xf32>
    %c2_152 = arith.constant 2 : index
    %c1_153 = arith.constant 1 : index
    %184 = memref.load %arg6[%c2_152, %c1_153] : memref<8x8xf32, #tpu.memory_space<smem>>
    %c1_154 = arith.constant 1 : index
    %c0_155 = arith.constant 0 : index
    %c0_156 = arith.constant 0 : index
    %185 = vector.load %arg16[%c1_154, %c0_155, %c0_156] : memref<8x8x8xf32, #tpu.memory_space<vmem>>, vector<1x8x8xf32>
    %186 = vector.shape_cast %185 : vector<1x8x8xf32> to vector<8x8xf32>
    %187 = vector.broadcast %184 : f32 to vector<8x8xf32>
    %188 = arith.mulf %187, %186 : vector<8x8xf32>
    %189 = arith.addf %183, %188 : vector<8x8xf32>
    %c2_157 = arith.constant 2 : index
    %c2_158 = arith.constant 2 : index
    %190 = memref.load %arg6[%c2_157, %c2_158] : memref<8x8xf32, #tpu.memory_space<smem>>
    %c2_159 = arith.constant 2 : index
    %c0_160 = arith.constant 0 : index
    %c0_161 = arith.constant 0 : index
    %191 = vector.load %arg16[%c2_159, %c0_160, %c0_161] : memref<8x8x8xf32, #tpu.memory_space<vmem>>, vector<1x8x8xf32>
    %192 = vector.shape_cast %191 : vector<1x8x8xf32> to vector<8x8xf32>
    %193 = vector.broadcast %190 : f32 to vector<8x8xf32>
    %194 = arith.mulf %193, %192 : vector<8x8xf32>
    %195 = arith.addf %189, %194 : vector<8x8xf32>
    %c2_162 = arith.constant 2 : index
    %c3_163 = arith.constant 3 : index
    %196 = memref.load %arg6[%c2_162, %c3_163] : memref<8x8xf32, #tpu.memory_space<smem>>
    %c3_164 = arith.constant 3 : index
    %c0_165 = arith.constant 0 : index
    %c0_166 = arith.constant 0 : index
    %197 = vector.load %arg16[%c3_164, %c0_165, %c0_166] : memref<8x8x8xf32, #tpu.memory_space<vmem>>, vector<1x8x8xf32>
    %198 = vector.shape_cast %197 : vector<1x8x8xf32> to vector<8x8xf32>
    %199 = vector.broadcast %196 : f32 to vector<8x8xf32>
    %200 = arith.mulf %199, %198 : vector<8x8xf32>
    %201 = arith.addf %195, %200 : vector<8x8xf32>
    %c2_167 = arith.constant 2 : index
    %c4_168 = arith.constant 4 : index
    %202 = memref.load %arg6[%c2_167, %c4_168] : memref<8x8xf32, #tpu.memory_space<smem>>
    %c4_169 = arith.constant 4 : index
    %c0_170 = arith.constant 0 : index
    %c0_171 = arith.constant 0 : index
    %203 = vector.load %arg16[%c4_169, %c0_170, %c0_171] : memref<8x8x8xf32, #tpu.memory_space<vmem>>, vector<1x8x8xf32>
    %204 = vector.shape_cast %203 : vector<1x8x8xf32> to vector<8x8xf32>
    %205 = vector.broadcast %202 : f32 to vector<8x8xf32>
    %206 = arith.mulf %205, %204 : vector<8x8xf32>
    %207 = arith.addf %201, %206 : vector<8x8xf32>
    %c2_172 = arith.constant 2 : index
    %c5_173 = arith.constant 5 : index
    %208 = memref.load %arg6[%c2_172, %c5_173] : memref<8x8xf32, #tpu.memory_space<smem>>
    %c5_174 = arith.constant 5 : index
    %c0_175 = arith.constant 0 : index
    %c0_176 = arith.constant 0 : index
    %209 = vector.load %arg16[%c5_174, %c0_175, %c0_176] : memref<8x8x8xf32, #tpu.memory_space<vmem>>, vector<1x8x8xf32>
    %210 = vector.shape_cast %209 : vector<1x8x8xf32> to vector<8x8xf32>
    %211 = vector.broadcast %208 : f32 to vector<8x8xf32>
    %212 = arith.mulf %211, %210 : vector<8x8xf32>
    %213 = arith.addf %207, %212 : vector<8x8xf32>
    %c2_177 = arith.constant 2 : index
    %c6_178 = arith.constant 6 : index
    %214 = memref.load %arg6[%c2_177, %c6_178] : memref<8x8xf32, #tpu.memory_space<smem>>
    %c6_179 = arith.constant 6 : index
    %c0_180 = arith.constant 0 : index
    %c0_181 = arith.constant 0 : index
    %215 = vector.load %arg16[%c6_179, %c0_180, %c0_181] : memref<8x8x8xf32, #tpu.memory_space<vmem>>, vector<1x8x8xf32>
    %216 = vector.shape_cast %215 : vector<1x8x8xf32> to vector<8x8xf32>
    %217 = vector.broadcast %214 : f32 to vector<8x8xf32>
    %218 = arith.mulf %217, %216 : vector<8x8xf32>
    %219 = arith.addf %213, %218 : vector<8x8xf32>
    %c2_182 = arith.constant 2 : index
    %c7_183 = arith.constant 7 : index
    %220 = memref.load %arg6[%c2_182, %c7_183] : memref<8x8xf32, #tpu.memory_space<smem>>
    %c7_184 = arith.constant 7 : index
    %c0_185 = arith.constant 0 : index
    %c0_186 = arith.constant 0 : index
    %221 = vector.load %arg16[%c7_184, %c0_185, %c0_186] : memref<8x8x8xf32, #tpu.memory_space<vmem>>, vector<1x8x8xf32>
    %222 = vector.shape_cast %221 : vector<1x8x8xf32> to vector<8x8xf32>
    %223 = vector.broadcast %220 : f32 to vector<8x8xf32>
    %224 = arith.mulf %223, %222 : vector<8x8xf32>
    %225 = arith.addf %219, %224 : vector<8x8xf32>
    %cst_187 = arith.constant dense<0xFF800000> : vector<8xf32>
    %226 = vector.multi_reduction <maximumf>, %225, %cst_187 [1] : vector<8x8xf32> to vector<8xf32>
    %227 = vector.shape_cast %226 : vector<8xf32> to vector<8x1xf32>
    %228 = vector.broadcast %227 : vector<8x1xf32> to vector<8x8xf32>
    %229 = arith.subf %225, %228 : vector<8x8xf32>
    %230 = math.exp %229 : vector<8x8xf32>
    %cst_188 = arith.constant dense<0.000000e+00> : vector<8xf32>
    %231 = vector.multi_reduction <add>, %230, %cst_188 [1] : vector<8x8xf32> to vector<8xf32>
    %232 = vector.shape_cast %231 : vector<8xf32> to vector<8x1xf32>
    %233 = tpu.reciprocal %232 : vector<8x1xf32> -> vector<8x1xf32>
    %234 = vector.broadcast %233 : vector<8x1xf32> to vector<8x8xf32>
    %235 = arith.mulf %230, %234 : vector<8x8xf32>
    %c2_189 = arith.constant 2 : index
    %c0_190 = arith.constant 0 : index
    %c0_191 = arith.constant 0 : index
    %236 = vector.load %arg17[%c2_189, %c0_190, %c0_191] : memref<8x8x8xf32, #tpu.memory_space<vmem>>, vector<1x8x8xf32>
    %237 = vector.shape_cast %236 : vector<1x8x8xf32> to vector<8x8xf32>
    %238 = vector.shape_cast %235 : vector<8x8xf32> to vector<1x8x8xf32>
    tpu.vector_store %arg17[%c2_189, %c0_190, %c0_191], %238 {strides = array<i32>} : memref<8x8x8xf32, #tpu.memory_space<vmem>>, vector<1x8x8xf32>,
    %c3_192 = arith.constant 3 : index
    %c0_193 = arith.constant 0 : index
    %239 = memref.load %arg6[%c3_192, %c0_193] : memref<8x8xf32, #tpu.memory_space<smem>>
    %c0_194 = arith.constant 0 : index
    %c0_195 = arith.constant 0 : index
    %c0_196 = arith.constant 0 : index
    %240 = vector.load %arg16[%c0_194, %c0_195, %c0_196] : memref<8x8x8xf32, #tpu.memory_space<vmem>>, vector<1x8x8xf32>
    %241 = vector.shape_cast %240 : vector<1x8x8xf32> to vector<8x8xf32>
    %242 = vector.broadcast %239 : f32 to vector<8x8xf32>
    %243 = arith.mulf %242, %241 : vector<8x8xf32>
    %c3_197 = arith.constant 3 : index
    %c1_198 = arith.constant 1 : index
    %244 = memref.load %arg6[%c3_197, %c1_198] : memref<8x8xf32, #tpu.memory_space<smem>>
    %c1_199 = arith.constant 1 : index
    %c0_200 = arith.constant 0 : index
    %c0_201 = arith.constant 0 : index
    %245 = vector.load %arg16[%c1_199, %c0_200, %c0_201] : memref<8x8x8xf32, #tpu.memory_space<vmem>>, vector<1x8x8xf32>
    %246 = vector.shape_cast %245 : vector<1x8x8xf32> to vector<8x8xf32>
    %247 = vector.broadcast %244 : f32 to vector<8x8xf32>
    %248 = arith.mulf %247, %246 : vector<8x8xf32>
    %249 = arith.addf %243, %248 : vector<8x8xf32>
    %c3_202 = arith.constant 3 : index
    %c2_203 = arith.constant 2 : index
    %250 = memref.load %arg6[%c3_202, %c2_203] : memref<8x8xf32, #tpu.memory_space<smem>>
    %c2_204 = arith.constant 2 : index
    %c0_205 = arith.constant 0 : index
    %c0_206 = arith.constant 0 : index
    %251 = vector.load %arg16[%c2_204, %c0_205, %c0_206] : memref<8x8x8xf32, #tpu.memory_space<vmem>>, vector<1x8x8xf32>
    %252 = vector.shape_cast %251 : vector<1x8x8xf32> to vector<8x8xf32>
    %253 = vector.broadcast %250 : f32 to vector<8x8xf32>
    %254 = arith.mulf %253, %252 : vector<8x8xf32>
    %255 = arith.addf %249, %254 : vector<8x8xf32>
    %c3_207 = arith.constant 3 : index
    %c3_208 = arith.constant 3 : index
    %256 = memref.load %arg6[%c3_207, %c3_208] : memref<8x8xf32, #tpu.memory_space<smem>>
    %c3_209 = arith.constant 3 : index
    %c0_210 = arith.constant 0 : index
    %c0_211 = arith.constant 0 : index
    %257 = vector.load %arg16[%c3_209, %c0_210, %c0_211] : memref<8x8x8xf32, #tpu.memory_space<vmem>>, vector<1x8x8xf32>
    %258 = vector.shape_cast %257 : vector<1x8x8xf32> to vector<8x8xf32>
    %259 = vector.broadcast %256 : f32 to vector<8x8xf32>
    %260 = arith.mulf %259, %258 : vector<8x8xf32>
    %261 = arith.addf %255, %260 : vector<8x8xf32>
    %c3_212 = arith.constant 3 : index
    %c4_213 = arith.constant 4 : index
    %262 = memref.load %arg6[%c3_212, %c4_213] : memref<8x8xf32, #tpu.memory_space<smem>>
    %c4_214 = arith.constant 4 : index
    %c0_215 = arith.constant 0 : index
    %c0_216 = arith.constant 0 : index
    %263 = vector.load %arg16[%c4_214, %c0_215, %c0_216] : memref<8x8x8xf32, #tpu.memory_space<vmem>>, vector<1x8x8xf32>
    %264 = vector.shape_cast %263 : vector<1x8x8xf32> to vector<8x8xf32>
    %265 = vector.broadcast %262 : f32 to vector<8x8xf32>
    %266 = arith.mulf %265, %264 : vector<8x8xf32>
    %267 = arith.addf %261, %266 : vector<8x8xf32>
    %c3_217 = arith.constant 3 : index
    %c5_218 = arith.constant 5 : index
    %268 = memref.load %arg6[%c3_217, %c5_218] : memref<8x8xf32, #tpu.memory_space<smem>>
    %c5_219 = arith.constant 5 : index
    %c0_220 = arith.constant 0 : index
    %c0_221 = arith.constant 0 : index
    %269 = vector.load %arg16[%c5_219, %c0_220, %c0_221] : memref<8x8x8xf32, #tpu.memory_space<vmem>>, vector<1x8x8xf32>
    %270 = vector.shape_cast %269 : vector<1x8x8xf32> to vector<8x8xf32>
    %271 = vector.broadcast %268 : f32 to vector<8x8xf32>
    %272 = arith.mulf %271, %270 : vector<8x8xf32>
    %273 = arith.addf %267, %272 : vector<8x8xf32>
    %c3_222 = arith.constant 3 : index
    %c6_223 = arith.constant 6 : index
    %274 = memref.load %arg6[%c3_222, %c6_223] : memref<8x8xf32, #tpu.memory_space<smem>>
    %c6_224 = arith.constant 6 : index
    %c0_225 = arith.constant 0 : index
    %c0_226 = arith.constant 0 : index
    %275 = vector.load %arg16[%c6_224, %c0_225, %c0_226] : memref<8x8x8xf32, #tpu.memory_space<vmem>>, vector<1x8x8xf32>
    %276 = vector.shape_cast %275 : vector<1x8x8xf32> to vector<8x8xf32>
    %277 = vector.broadcast %274 : f32 to vector<8x8xf32>
    %278 = arith.mulf %277, %276 : vector<8x8xf32>
    %279 = arith.addf %273, %278 : vector<8x8xf32>
    %c3_227 = arith.constant 3 : index
    %c7_228 = arith.constant 7 : index
    %280 = memref.load %arg6[%c3_227, %c7_228] : memref<8x8xf32, #tpu.memory_space<smem>>
    %c7_229 = arith.constant 7 : index
    %c0_230 = arith.constant 0 : index
    %c0_231 = arith.constant 0 : index
    %281 = vector.load %arg16[%c7_229, %c0_230, %c0_231] : memref<8x8x8xf32, #tpu.memory_space<vmem>>, vector<1x8x8xf32>
    %282 = vector.shape_cast %281 : vector<1x8x8xf32> to vector<8x8xf32>
    %283 = vector.broadcast %280 : f32 to vector<8x8xf32>
    %284 = arith.mulf %283, %282 : vector<8x8xf32>
    %285 = arith.addf %279, %284 : vector<8x8xf32>
    %cst_232 = arith.constant dense<0xFF800000> : vector<8xf32>
    %286 = vector.multi_reduction <maximumf>, %285, %cst_232 [1] : vector<8x8xf32> to vector<8xf32>
    %287 = vector.shape_cast %286 : vector<8xf32> to vector<8x1xf32>
    %288 = vector.broadcast %287 : vector<8x1xf32> to vector<8x8xf32>
    %289 = arith.subf %285, %288 : vector<8x8xf32>
    %290 = math.exp %289 : vector<8x8xf32>
    %cst_233 = arith.constant dense<0.000000e+00> : vector<8xf32>
    %291 = vector.multi_reduction <add>, %290, %cst_233 [1] : vector<8x8xf32> to vector<8xf32>
    %292 = vector.shape_cast %291 : vector<8xf32> to vector<8x1xf32>
    %293 = tpu.reciprocal %292 : vector<8x1xf32> -> vector<8x1xf32>
    %294 = vector.broadcast %293 : vector<8x1xf32> to vector<8x8xf32>
    %295 = arith.mulf %290, %294 : vector<8x8xf32>
    %c3_234 = arith.constant 3 : index
    %c0_235 = arith.constant 0 : index
    %c0_236 = arith.constant 0 : index
    %296 = vector.load %arg17[%c3_234, %c0_235, %c0_236] : memref<8x8x8xf32, #tpu.memory_space<vmem>>, vector<1x8x8xf32>
    %297 = vector.shape_cast %296 : vector<1x8x8xf32> to vector<8x8xf32>
    %298 = vector.shape_cast %295 : vector<8x8xf32> to vector<1x8x8xf32>
    tpu.vector_store %arg17[%c3_234, %c0_235, %c0_236], %298 {strides = array<i32>} : memref<8x8x8xf32, #tpu.memory_space<vmem>>, vector<1x8x8xf32>,
    %c4_237 = arith.constant 4 : index
    %c0_238 = arith.constant 0 : index
    %299 = memref.load %arg6[%c4_237, %c0_238] : memref<8x8xf32, #tpu.memory_space<smem>>
    %c0_239 = arith.constant 0 : index
    %c0_240 = arith.constant 0 : index
    %c0_241 = arith.constant 0 : index
    %300 = vector.load %arg16[%c0_239, %c0_240, %c0_241] : memref<8x8x8xf32, #tpu.memory_space<vmem>>, vector<1x8x8xf32>
    %301 = vector.shape_cast %300 : vector<1x8x8xf32> to vector<8x8xf32>
    %302 = vector.broadcast %299 : f32 to vector<8x8xf32>
    %303 = arith.mulf %302, %301 : vector<8x8xf32>
    %c4_242 = arith.constant 4 : index
    %c1_243 = arith.constant 1 : index
    %304 = memref.load %arg6[%c4_242, %c1_243] : memref<8x8xf32, #tpu.memory_space<smem>>
    %c1_244 = arith.constant 1 : index
    %c0_245 = arith.constant 0 : index
    %c0_246 = arith.constant 0 : index
    %305 = vector.load %arg16[%c1_244, %c0_245, %c0_246] : memref<8x8x8xf32, #tpu.memory_space<vmem>>, vector<1x8x8xf32>
    %306 = vector.shape_cast %305 : vector<1x8x8xf32> to vector<8x8xf32>
    %307 = vector.broadcast %304 : f32 to vector<8x8xf32>
    %308 = arith.mulf %307, %306 : vector<8x8xf32>
    %309 = arith.addf %303, %308 : vector<8x8xf32>
    %c4_247 = arith.constant 4 : index
    %c2_248 = arith.constant 2 : index
    %310 = memref.load %arg6[%c4_247, %c2_248] : memref<8x8xf32, #tpu.memory_space<smem>>
    %c2_249 = arith.constant 2 : index
    %c0_250 = arith.constant 0 : index
    %c0_251 = arith.constant 0 : index
    %311 = vector.load %arg16[%c2_249, %c0_250, %c0_251] : memref<8x8x8xf32, #tpu.memory_space<vmem>>, vector<1x8x8xf32>
    %312 = vector.shape_cast %311 : vector<1x8x8xf32> to vector<8x8xf32>
    %313 = vector.broadcast %310 : f32 to vector<8x8xf32>
    %314 = arith.mulf %313, %312 : vector<8x8xf32>
    %315 = arith.addf %309, %314 : vector<8x8xf32>
    %c4_252 = arith.constant 4 : index
    %c3_253 = arith.constant 3 : index
    %316 = memref.load %arg6[%c4_252, %c3_253] : memref<8x8xf32, #tpu.memory_space<smem>>
    %c3_254 = arith.constant 3 : index
    %c0_255 = arith.constant 0 : index
    %c0_256 = arith.constant 0 : index
    %317 = vector.load %arg16[%c3_254, %c0_255, %c0_256] : memref<8x8x8xf32, #tpu.memory_space<vmem>>, vector<1x8x8xf32>
    %318 = vector.shape_cast %317 : vector<1x8x8xf32> to vector<8x8xf32>
    %319 = vector.broadcast %316 : f32 to vector<8x8xf32>
    %320 = arith.mulf %319, %318 : vector<8x8xf32>
    %321 = arith.addf %315, %320 : vector<8x8xf32>
    %c4_257 = arith.constant 4 : index
    %c4_258 = arith.constant 4 : index
    %322 = memref.load %arg6[%c4_257, %c4_258] : memref<8x8xf32, #tpu.memory_space<smem>>
    %c4_259 = arith.constant 4 : index
    %c0_260 = arith.constant 0 : index
    %c0_261 = arith.constant 0 : index
    %323 = vector.load %arg16[%c4_259, %c0_260, %c0_261] : memref<8x8x8xf32, #tpu.memory_space<vmem>>, vector<1x8x8xf32>
    %324 = vector.shape_cast %323 : vector<1x8x8xf32> to vector<8x8xf32>
    %325 = vector.broadcast %322 : f32 to vector<8x8xf32>
    %326 = arith.mulf %325, %324 : vector<8x8xf32>
    %327 = arith.addf %321, %326 : vector<8x8xf32>
    %c4_262 = arith.constant 4 : index
    %c5_263 = arith.constant 5 : index
    %328 = memref.load %arg6[%c4_262, %c5_263] : memref<8x8xf32, #tpu.memory_space<smem>>
    %c5_264 = arith.constant 5 : index
    %c0_265 = arith.constant 0 : index
    %c0_266 = arith.constant 0 : index
    %329 = vector.load %arg16[%c5_264, %c0_265, %c0_266] : memref<8x8x8xf32, #tpu.memory_space<vmem>>, vector<1x8x8xf32>
    %330 = vector.shape_cast %329 : vector<1x8x8xf32> to vector<8x8xf32>
    %331 = vector.broadcast %328 : f32 to vector<8x8xf32>
    %332 = arith.mulf %331, %330 : vector<8x8xf32>
    %333 = arith.addf %327, %332 : vector<8x8xf32>
    %c4_267 = arith.constant 4 : index
    %c6_268 = arith.constant 6 : index
    %334 = memref.load %arg6[%c4_267, %c6_268] : memref<8x8xf32, #tpu.memory_space<smem>>
    %c6_269 = arith.constant 6 : index
    %c0_270 = arith.constant 0 : index
    %c0_271 = arith.constant 0 : index
    %335 = vector.load %arg16[%c6_269, %c0_270, %c0_271] : memref<8x8x8xf32, #tpu.memory_space<vmem>>, vector<1x8x8xf32>
    %336 = vector.shape_cast %335 : vector<1x8x8xf32> to vector<8x8xf32>
    %337 = vector.broadcast %334 : f32 to vector<8x8xf32>
    %338 = arith.mulf %337, %336 : vector<8x8xf32>
    %339 = arith.addf %333, %338 : vector<8x8xf32>
    %c4_272 = arith.constant 4 : index
    %c7_273 = arith.constant 7 : index
    %340 = memref.load %arg6[%c4_272, %c7_273] : memref<8x8xf32, #tpu.memory_space<smem>>
    %c7_274 = arith.constant 7 : index
    %c0_275 = arith.constant 0 : index
    %c0_276 = arith.constant 0 : index
    %341 = vector.load %arg16[%c7_274, %c0_275, %c0_276] : memref<8x8x8xf32, #tpu.memory_space<vmem>>, vector<1x8x8xf32>
    %342 = vector.shape_cast %341 : vector<1x8x8xf32> to vector<8x8xf32>
    %343 = vector.broadcast %340 : f32 to vector<8x8xf32>
    %344 = arith.mulf %343, %342 : vector<8x8xf32>
    %345 = arith.addf %339, %344 : vector<8x8xf32>
    %cst_277 = arith.constant dense<0xFF800000> : vector<8xf32>
    %346 = vector.multi_reduction <maximumf>, %345, %cst_277 [1] : vector<8x8xf32> to vector<8xf32>
    %347 = vector.shape_cast %346 : vector<8xf32> to vector<8x1xf32>
    %348 = vector.broadcast %347 : vector<8x1xf32> to vector<8x8xf32>
    %349 = arith.subf %345, %348 : vector<8x8xf32>
    %350 = math.exp %349 : vector<8x8xf32>
    %cst_278 = arith.constant dense<0.000000e+00> : vector<8xf32>
    %351 = vector.multi_reduction <add>, %350, %cst_278 [1] : vector<8x8xf32> to vector<8xf32>
    %352 = vector.shape_cast %351 : vector<8xf32> to vector<8x1xf32>
    %353 = tpu.reciprocal %352 : vector<8x1xf32> -> vector<8x1xf32>
    %354 = vector.broadcast %353 : vector<8x1xf32> to vector<8x8xf32>
    %355 = arith.mulf %350, %354 : vector<8x8xf32>
    %c4_279 = arith.constant 4 : index
    %c0_280 = arith.constant 0 : index
    %c0_281 = arith.constant 0 : index
    %356 = vector.load %arg17[%c4_279, %c0_280, %c0_281] : memref<8x8x8xf32, #tpu.memory_space<vmem>>, vector<1x8x8xf32>
    %357 = vector.shape_cast %356 : vector<1x8x8xf32> to vector<8x8xf32>
    %358 = vector.shape_cast %355 : vector<8x8xf32> to vector<1x8x8xf32>
    tpu.vector_store %arg17[%c4_279, %c0_280, %c0_281], %358 {strides = array<i32>} : memref<8x8x8xf32, #tpu.memory_space<vmem>>, vector<1x8x8xf32>,
    %c5_282 = arith.constant 5 : index
    %c0_283 = arith.constant 0 : index
    %359 = memref.load %arg6[%c5_282, %c0_283] : memref<8x8xf32, #tpu.memory_space<smem>>
    %c0_284 = arith.constant 0 : index
    %c0_285 = arith.constant 0 : index
    %c0_286 = arith.constant 0 : index
    %360 = vector.load %arg16[%c0_284, %c0_285, %c0_286] : memref<8x8x8xf32, #tpu.memory_space<vmem>>, vector<1x8x8xf32>
    %361 = vector.shape_cast %360 : vector<1x8x8xf32> to vector<8x8xf32>
    %362 = vector.broadcast %359 : f32 to vector<8x8xf32>
    %363 = arith.mulf %362, %361 : vector<8x8xf32>
    %c5_287 = arith.constant 5 : index
    %c1_288 = arith.constant 1 : index
    %364 = memref.load %arg6[%c5_287, %c1_288] : memref<8x8xf32, #tpu.memory_space<smem>>
    %c1_289 = arith.constant 1 : index
    %c0_290 = arith.constant 0 : index
    %c0_291 = arith.constant 0 : index
    %365 = vector.load %arg16[%c1_289, %c0_290, %c0_291] : memref<8x8x8xf32, #tpu.memory_space<vmem>>, vector<1x8x8xf32>
    %366 = vector.shape_cast %365 : vector<1x8x8xf32> to vector<8x8xf32>
    %367 = vector.broadcast %364 : f32 to vector<8x8xf32>
    %368 = arith.mulf %367, %366 : vector<8x8xf32>
    %369 = arith.addf %363, %368 : vector<8x8xf32>
    %c5_292 = arith.constant 5 : index
    %c2_293 = arith.constant 2 : index
    %370 = memref.load %arg6[%c5_292, %c2_293] : memref<8x8xf32, #tpu.memory_space<smem>>
    %c2_294 = arith.constant 2 : index
    %c0_295 = arith.constant 0 : index
    %c0_296 = arith.constant 0 : index
    %371 = vector.load %arg16[%c2_294, %c0_295, %c0_296] : memref<8x8x8xf32, #tpu.memory_space<vmem>>, vector<1x8x8xf32>
    %372 = vector.shape_cast %371 : vector<1x8x8xf32> to vector<8x8xf32>
    %373 = vector.broadcast %370 : f32 to vector<8x8xf32>
    %374 = arith.mulf %373, %372 : vector<8x8xf32>
    %375 = arith.addf %369, %374 : vector<8x8xf32>
    %c5_297 = arith.constant 5 : index
    %c3_298 = arith.constant 3 : index
    %376 = memref.load %arg6[%c5_297, %c3_298] : memref<8x8xf32, #tpu.memory_space<smem>>
    %c3_299 = arith.constant 3 : index
    %c0_300 = arith.constant 0 : index
    %c0_301 = arith.constant 0 : index
    %377 = vector.load %arg16[%c3_299, %c0_300, %c0_301] : memref<8x8x8xf32, #tpu.memory_space<vmem>>, vector<1x8x8xf32>
    %378 = vector.shape_cast %377 : vector<1x8x8xf32> to vector<8x8xf32>
    %379 = vector.broadcast %376 : f32 to vector<8x8xf32>
    %380 = arith.mulf %379, %378 : vector<8x8xf32>
    %381 = arith.addf %375, %380 : vector<8x8xf32>
    %c5_302 = arith.constant 5 : index
    %c4_303 = arith.constant 4 : index
    %382 = memref.load %arg6[%c5_302, %c4_303] : memref<8x8xf32, #tpu.memory_space<smem>>
    %c4_304 = arith.constant 4 : index
    %c0_305 = arith.constant 0 : index
    %c0_306 = arith.constant 0 : index
    %383 = vector.load %arg16[%c4_304, %c0_305, %c0_306] : memref<8x8x8xf32, #tpu.memory_space<vmem>>, vector<1x8x8xf32>
    %384 = vector.shape_cast %383 : vector<1x8x8xf32> to vector<8x8xf32>
    %385 = vector.broadcast %382 : f32 to vector<8x8xf32>
    %386 = arith.mulf %385, %384 : vector<8x8xf32>
    %387 = arith.addf %381, %386 : vector<8x8xf32>
    %c5_307 = arith.constant 5 : index
    %c5_308 = arith.constant 5 : index
    %388 = memref.load %arg6[%c5_307, %c5_308] : memref<8x8xf32, #tpu.memory_space<smem>>
    %c5_309 = arith.constant 5 : index
    %c0_310 = arith.constant 0 : index
    %c0_311 = arith.constant 0 : index
    %389 = vector.load %arg16[%c5_309, %c0_310, %c0_311] : memref<8x8x8xf32, #tpu.memory_space<vmem>>, vector<1x8x8xf32>
    %390 = vector.shape_cast %389 : vector<1x8x8xf32> to vector<8x8xf32>
    %391 = vector.broadcast %388 : f32 to vector<8x8xf32>
    %392 = arith.mulf %391, %390 : vector<8x8xf32>
    %393 = arith.addf %387, %392 : vector<8x8xf32>
    %c5_312 = arith.constant 5 : index
    %c6_313 = arith.constant 6 : index
    %394 = memref.load %arg6[%c5_312, %c6_313] : memref<8x8xf32, #tpu.memory_space<smem>>
    %c6_314 = arith.constant 6 : index
    %c0_315 = arith.constant 0 : index
    %c0_316 = arith.constant 0 : index
    %395 = vector.load %arg16[%c6_314, %c0_315, %c0_316] : memref<8x8x8xf32, #tpu.memory_space<vmem>>, vector<1x8x8xf32>
    %396 = vector.shape_cast %395 : vector<1x8x8xf32> to vector<8x8xf32>
    %397 = vector.broadcast %394 : f32 to vector<8x8xf32>
    %398 = arith.mulf %397, %396 : vector<8x8xf32>
    %399 = arith.addf %393, %398 : vector<8x8xf32>
    %c5_317 = arith.constant 5 : index
    %c7_318 = arith.constant 7 : index
    %400 = memref.load %arg6[%c5_317, %c7_318] : memref<8x8xf32, #tpu.memory_space<smem>>
    %c7_319 = arith.constant 7 : index
    %c0_320 = arith.constant 0 : index
    %c0_321 = arith.constant 0 : index
    %401 = vector.load %arg16[%c7_319, %c0_320, %c0_321] : memref<8x8x8xf32, #tpu.memory_space<vmem>>, vector<1x8x8xf32>
    %402 = vector.shape_cast %401 : vector<1x8x8xf32> to vector<8x8xf32>
    %403 = vector.broadcast %400 : f32 to vector<8x8xf32>
    %404 = arith.mulf %403, %402 : vector<8x8xf32>
    %405 = arith.addf %399, %404 : vector<8x8xf32>
    %cst_322 = arith.constant dense<0xFF800000> : vector<8xf32>
    %406 = vector.multi_reduction <maximumf>, %405, %cst_322 [1] : vector<8x8xf32> to vector<8xf32>
    %407 = vector.shape_cast %406 : vector<8xf32> to vector<8x1xf32>
    %408 = vector.broadcast %407 : vector<8x1xf32> to vector<8x8xf32>
    %409 = arith.subf %405, %408 : vector<8x8xf32>
    %410 = math.exp %409 : vector<8x8xf32>
    %cst_323 = arith.constant dense<0.000000e+00> : vector<8xf32>
    %411 = vector.multi_reduction <add>, %410, %cst_323 [1] : vector<8x8xf32> to vector<8xf32>
    %412 = vector.shape_cast %411 : vector<8xf32> to vector<8x1xf32>
    %413 = tpu.reciprocal %412 : vector<8x1xf32> -> vector<8x1xf32>
    %414 = vector.broadcast %413 : vector<8x1xf32> to vector<8x8xf32>
    %415 = arith.mulf %410, %414 : vector<8x8xf32>
    %c5_324 = arith.constant 5 : index
    %c0_325 = arith.constant 0 : index
    %c0_326 = arith.constant 0 : index
    %416 = vector.load %arg17[%c5_324, %c0_325, %c0_326] : memref<8x8x8xf32, #tpu.memory_space<vmem>>, vector<1x8x8xf32>
    %417 = vector.shape_cast %416 : vector<1x8x8xf32> to vector<8x8xf32>
    %418 = vector.shape_cast %415 : vector<8x8xf32> to vector<1x8x8xf32>
    tpu.vector_store %arg17[%c5_324, %c0_325, %c0_326], %418 {strides = array<i32>} : memref<8x8x8xf32, #tpu.memory_space<vmem>>, vector<1x8x8xf32>,
    %c6_327 = arith.constant 6 : index
    %c0_328 = arith.constant 0 : index
    %419 = memref.load %arg6[%c6_327, %c0_328] : memref<8x8xf32, #tpu.memory_space<smem>>
    %c0_329 = arith.constant 0 : index
    %c0_330 = arith.constant 0 : index
    %c0_331 = arith.constant 0 : index
    %420 = vector.load %arg16[%c0_329, %c0_330, %c0_331] : memref<8x8x8xf32, #tpu.memory_space<vmem>>, vector<1x8x8xf32>
    %421 = vector.shape_cast %420 : vector<1x8x8xf32> to vector<8x8xf32>
    %422 = vector.broadcast %419 : f32 to vector<8x8xf32>
    %423 = arith.mulf %422, %421 : vector<8x8xf32>
    %c6_332 = arith.constant 6 : index
    %c1_333 = arith.constant 1 : index
    %424 = memref.load %arg6[%c6_332, %c1_333] : memref<8x8xf32, #tpu.memory_space<smem>>
    %c1_334 = arith.constant 1 : index
    %c0_335 = arith.constant 0 : index
    %c0_336 = arith.constant 0 : index
    %425 = vector.load %arg16[%c1_334, %c0_335, %c0_336] : memref<8x8x8xf32, #tpu.memory_space<vmem>>, vector<1x8x8xf32>
    %426 = vector.shape_cast %425 : vector<1x8x8xf32> to vector<8x8xf32>
    %427 = vector.broadcast %424 : f32 to vector<8x8xf32>
    %428 = arith.mulf %427, %426 : vector<8x8xf32>
    %429 = arith.addf %423, %428 : vector<8x8xf32>
    %c6_337 = arith.constant 6 : index
    %c2_338 = arith.constant 2 : index
    %430 = memref.load %arg6[%c6_337, %c2_338] : memref<8x8xf32, #tpu.memory_space<smem>>
    %c2_339 = arith.constant 2 : index
    %c0_340 = arith.constant 0 : index
    %c0_341 = arith.constant 0 : index
    %431 = vector.load %arg16[%c2_339, %c0_340, %c0_341] : memref<8x8x8xf32, #tpu.memory_space<vmem>>, vector<1x8x8xf32>
    %432 = vector.shape_cast %431 : vector<1x8x8xf32> to vector<8x8xf32>
    %433 = vector.broadcast %430 : f32 to vector<8x8xf32>
    %434 = arith.mulf %433, %432 : vector<8x8xf32>
    %435 = arith.addf %429, %434 : vector<8x8xf32>
    %c6_342 = arith.constant 6 : index
    %c3_343 = arith.constant 3 : index
    %436 = memref.load %arg6[%c6_342, %c3_343] : memref<8x8xf32, #tpu.memory_space<smem>>
    %c3_344 = arith.constant 3 : index
    %c0_345 = arith.constant 0 : index
    %c0_346 = arith.constant 0 : index
    %437 = vector.load %arg16[%c3_344, %c0_345, %c0_346] : memref<8x8x8xf32, #tpu.memory_space<vmem>>, vector<1x8x8xf32>
    %438 = vector.shape_cast %437 : vector<1x8x8xf32> to vector<8x8xf32>
    %439 = vector.broadcast %436 : f32 to vector<8x8xf32>
    %440 = arith.mulf %439, %438 : vector<8x8xf32>
    %441 = arith.addf %435, %440 : vector<8x8xf32>
    %c6_347 = arith.constant 6 : index
    %c4_348 = arith.constant 4 : index
    %442 = memref.load %arg6[%c6_347, %c4_348] : memref<8x8xf32, #tpu.memory_space<smem>>
    %c4_349 = arith.constant 4 : index
    %c0_350 = arith.constant 0 : index
    %c0_351 = arith.constant 0 : index
    %443 = vector.load %arg16[%c4_349, %c0_350, %c0_351] : memref<8x8x8xf32, #tpu.memory_space<vmem>>, vector<1x8x8xf32>
    %444 = vector.shape_cast %443 : vector<1x8x8xf32> to vector<8x8xf32>
    %445 = vector.broadcast %442 : f32 to vector<8x8xf32>
    %446 = arith.mulf %445, %444 : vector<8x8xf32>
    %447 = arith.addf %441, %446 : vector<8x8xf32>
    %c6_352 = arith.constant 6 : index
    %c5_353 = arith.constant 5 : index
    %448 = memref.load %arg6[%c6_352, %c5_353] : memref<8x8xf32, #tpu.memory_space<smem>>
    %c5_354 = arith.constant 5 : index
    %c0_355 = arith.constant 0 : index
    %c0_356 = arith.constant 0 : index
    %449 = vector.load %arg16[%c5_354, %c0_355, %c0_356] : memref<8x8x8xf32, #tpu.memory_space<vmem>>, vector<1x8x8xf32>
    %450 = vector.shape_cast %449 : vector<1x8x8xf32> to vector<8x8xf32>
    %451 = vector.broadcast %448 : f32 to vector<8x8xf32>
    %452 = arith.mulf %451, %450 : vector<8x8xf32>
    %453 = arith.addf %447, %452 : vector<8x8xf32>
    %c6_357 = arith.constant 6 : index
    %c6_358 = arith.constant 6 : index
    %454 = memref.load %arg6[%c6_357, %c6_358] : memref<8x8xf32, #tpu.memory_space<smem>>
    %c6_359 = arith.constant 6 : index
    %c0_360 = arith.constant 0 : index
    %c0_361 = arith.constant 0 : index
    %455 = vector.load %arg16[%c6_359, %c0_360, %c0_361] : memref<8x8x8xf32, #tpu.memory_space<vmem>>, vector<1x8x8xf32>
    %456 = vector.shape_cast %455 : vector<1x8x8xf32> to vector<8x8xf32>
    %457 = vector.broadcast %454 : f32 to vector<8x8xf32>
    %458 = arith.mulf %457, %456 : vector<8x8xf32>
    %459 = arith.addf %453, %458 : vector<8x8xf32>
    %c6_362 = arith.constant 6 : index
    %c7_363 = arith.constant 7 : index
    %460 = memref.load %arg6[%c6_362, %c7_363] : memref<8x8xf32, #tpu.memory_space<smem>>
    %c7_364 = arith.constant 7 : index
    %c0_365 = arith.constant 0 : index
    %c0_366 = arith.constant 0 : index
    %461 = vector.load %arg16[%c7_364, %c0_365, %c0_366] : memref<8x8x8xf32, #tpu.memory_space<vmem>>, vector<1x8x8xf32>
    %462 = vector.shape_cast %461 : vector<1x8x8xf32> to vector<8x8xf32>
    %463 = vector.broadcast %460 : f32 to vector<8x8xf32>
    %464 = arith.mulf %463, %462 : vector<8x8xf32>
    %465 = arith.addf %459, %464 : vector<8x8xf32>
    %cst_367 = arith.constant dense<0xFF800000> : vector<8xf32>
    %466 = vector.multi_reduction <maximumf>, %465, %cst_367 [1] : vector<8x8xf32> to vector<8xf32>
    %467 = vector.shape_cast %466 : vector<8xf32> to vector<8x1xf32>
    %468 = vector.broadcast %467 : vector<8x1xf32> to vector<8x8xf32>
    %469 = arith.subf %465, %468 : vector<8x8xf32>
    %470 = math.exp %469 : vector<8x8xf32>
    %cst_368 = arith.constant dense<0.000000e+00> : vector<8xf32>
    %471 = vector.multi_reduction <add>, %470, %cst_368 [1] : vector<8x8xf32> to vector<8xf32>
    %472 = vector.shape_cast %471 : vector<8xf32> to vector<8x1xf32>
    %473 = tpu.reciprocal %472 : vector<8x1xf32> -> vector<8x1xf32>
    %474 = vector.broadcast %473 : vector<8x1xf32> to vector<8x8xf32>
    %475 = arith.mulf %470, %474 : vector<8x8xf32>
    %c6_369 = arith.constant 6 : index
    %c0_370 = arith.constant 0 : index
    %c0_371 = arith.constant 0 : index
    %476 = vector.load %arg17[%c6_369, %c0_370, %c0_371] : memref<8x8x8xf32, #tpu.memory_space<vmem>>, vector<1x8x8xf32>
    %477 = vector.shape_cast %476 : vector<1x8x8xf32> to vector<8x8xf32>
    %478 = vector.shape_cast %475 : vector<8x8xf32> to vector<1x8x8xf32>
    tpu.vector_store %arg17[%c6_369, %c0_370, %c0_371], %478 {strides = array<i32>} : memref<8x8x8xf32, #tpu.memory_space<vmem>>, vector<1x8x8xf32>,
    %c7_372 = arith.constant 7 : index
    %c0_373 = arith.constant 0 : index
    %479 = memref.load %arg6[%c7_372, %c0_373] : memref<8x8xf32, #tpu.memory_space<smem>>
    %c0_374 = arith.constant 0 : index
    %c0_375 = arith.constant 0 : index
    %c0_376 = arith.constant 0 : index
    %480 = vector.load %arg16[%c0_374, %c0_375, %c0_376] : memref<8x8x8xf32, #tpu.memory_space<vmem>>, vector<1x8x8xf32>
    %481 = vector.shape_cast %480 : vector<1x8x8xf32> to vector<8x8xf32>
    %482 = vector.broadcast %479 : f32 to vector<8x8xf32>
    %483 = arith.mulf %482, %481 : vector<8x8xf32>
    %c7_377 = arith.constant 7 : index
    %c1_378 = arith.constant 1 : index
    %484 = memref.load %arg6[%c7_377, %c1_378] : memref<8x8xf32, #tpu.memory_space<smem>>
    %c1_379 = arith.constant 1 : index
    %c0_380 = arith.constant 0 : index
    %c0_381 = arith.constant 0 : index
    %485 = vector.load %arg16[%c1_379, %c0_380, %c0_381] : memref<8x8x8xf32, #tpu.memory_space<vmem>>, vector<1x8x8xf32>
    %486 = vector.shape_cast %485 : vector<1x8x8xf32> to vector<8x8xf32>
    %487 = vector.broadcast %484 : f32 to vector<8x8xf32>
    %488 = arith.mulf %487, %486 : vector<8x8xf32>
    %489 = arith.addf %483, %488 : vector<8x8xf32>
    %c7_382 = arith.constant 7 : index
    %c2_383 = arith.constant 2 : index
    %490 = memref.load %arg6[%c7_382, %c2_383] : memref<8x8xf32, #tpu.memory_space<smem>>
    %c2_384 = arith.constant 2 : index
    %c0_385 = arith.constant 0 : index
    %c0_386 = arith.constant 0 : index
    %491 = vector.load %arg16[%c2_384, %c0_385, %c0_386] : memref<8x8x8xf32, #tpu.memory_space<vmem>>, vector<1x8x8xf32>
    %492 = vector.shape_cast %491 : vector<1x8x8xf32> to vector<8x8xf32>
    %493 = vector.broadcast %490 : f32 to vector<8x8xf32>
    %494 = arith.mulf %493, %492 : vector<8x8xf32>
    %495 = arith.addf %489, %494 : vector<8x8xf32>
    %c7_387 = arith.constant 7 : index
    %c3_388 = arith.constant 3 : index
    %496 = memref.load %arg6[%c7_387, %c3_388] : memref<8x8xf32, #tpu.memory_space<smem>>
    %c3_389 = arith.constant 3 : index
    %c0_390 = arith.constant 0 : index
    %c0_391 = arith.constant 0 : index
    %497 = vector.load %arg16[%c3_389, %c0_390, %c0_391] : memref<8x8x8xf32, #tpu.memory_space<vmem>>, vector<1x8x8xf32>
    %498 = vector.shape_cast %497 : vector<1x8x8xf32> to vector<8x8xf32>
    %499 = vector.broadcast %496 : f32 to vector<8x8xf32>
    %500 = arith.mulf %499, %498 : vector<8x8xf32>
    %501 = arith.addf %495, %500 : vector<8x8xf32>
    %c7_392 = arith.constant 7 : index
    %c4_393 = arith.constant 4 : index
    %502 = memref.load %arg6[%c7_392, %c4_393] : memref<8x8xf32, #tpu.memory_space<smem>>
    %c4_394 = arith.constant 4 : index
    %c0_395 = arith.constant 0 : index
    %c0_396 = arith.constant 0 : index
    %503 = vector.load %arg16[%c4_394, %c0_395, %c0_396] : memref<8x8x8xf32, #tpu.memory_space<vmem>>, vector<1x8x8xf32>
    %504 = vector.shape_cast %503 : vector<1x8x8xf32> to vector<8x8xf32>
    %505 = vector.broadcast %502 : f32 to vector<8x8xf32>
    %506 = arith.mulf %505, %504 : vector<8x8xf32>
    %507 = arith.addf %501, %506 : vector<8x8xf32>
    %c7_397 = arith.constant 7 : index
    %c5_398 = arith.constant 5 : index
    %508 = memref.load %arg6[%c7_397, %c5_398] : memref<8x8xf32, #tpu.memory_space<smem>>
    %c5_399 = arith.constant 5 : index
    %c0_400 = arith.constant 0 : index
    %c0_401 = arith.constant 0 : index
    %509 = vector.load %arg16[%c5_399, %c0_400, %c0_401] : memref<8x8x8xf32, #tpu.memory_space<vmem>>, vector<1x8x8xf32>
    %510 = vector.shape_cast %509 : vector<1x8x8xf32> to vector<8x8xf32>
    %511 = vector.broadcast %508 : f32 to vector<8x8xf32>
    %512 = arith.mulf %511, %510 : vector<8x8xf32>
    %513 = arith.addf %507, %512 : vector<8x8xf32>
    %c7_402 = arith.constant 7 : index
    %c6_403 = arith.constant 6 : index
    %514 = memref.load %arg6[%c7_402, %c6_403] : memref<8x8xf32, #tpu.memory_space<smem>>
    %c6_404 = arith.constant 6 : index
    %c0_405 = arith.constant 0 : index
    %c0_406 = arith.constant 0 : index
    %515 = vector.load %arg16[%c6_404, %c0_405, %c0_406] : memref<8x8x8xf32, #tpu.memory_space<vmem>>, vector<1x8x8xf32>
    %516 = vector.shape_cast %515 : vector<1x8x8xf32> to vector<8x8xf32>
    %517 = vector.broadcast %514 : f32 to vector<8x8xf32>
    %518 = arith.mulf %517, %516 : vector<8x8xf32>
    %519 = arith.addf %513, %518 : vector<8x8xf32>
    %c7_407 = arith.constant 7 : index
    %c7_408 = arith.constant 7 : index
    %520 = memref.load %arg6[%c7_407, %c7_408] : memref<8x8xf32, #tpu.memory_space<smem>>
    %c7_409 = arith.constant 7 : index
    %c0_410 = arith.constant 0 : index
    %c0_411 = arith.constant 0 : index
    %521 = vector.load %arg16[%c7_409, %c0_410, %c0_411] : memref<8x8x8xf32, #tpu.memory_space<vmem>>, vector<1x8x8xf32>
    %522 = vector.shape_cast %521 : vector<1x8x8xf32> to vector<8x8xf32>
    %523 = vector.broadcast %520 : f32 to vector<8x8xf32>
    %524 = arith.mulf %523, %522 : vector<8x8xf32>
    %525 = arith.addf %519, %524 : vector<8x8xf32>
    %cst_412 = arith.constant dense<0xFF800000> : vector<8xf32>
    %526 = vector.multi_reduction <maximumf>, %525, %cst_412 [1] : vector<8x8xf32> to vector<8xf32>
    %527 = vector.shape_cast %526 : vector<8xf32> to vector<8x1xf32>
    %528 = vector.broadcast %527 : vector<8x1xf32> to vector<8x8xf32>
    %529 = arith.subf %525, %528 : vector<8x8xf32>
    %530 = math.exp %529 : vector<8x8xf32>
    %cst_413 = arith.constant dense<0.000000e+00> : vector<8xf32>
    %531 = vector.multi_reduction <add>, %530, %cst_413 [1] : vector<8x8xf32> to vector<8xf32>
    %532 = vector.shape_cast %531 : vector<8xf32> to vector<8x1xf32>
    %533 = tpu.reciprocal %532 : vector<8x1xf32> -> vector<8x1xf32>
    %534 = vector.broadcast %533 : vector<8x1xf32> to vector<8x8xf32>
    %535 = arith.mulf %530, %534 : vector<8x8xf32>
    %c7_414 = arith.constant 7 : index
    %c0_415 = arith.constant 0 : index
    %c0_416 = arith.constant 0 : index
    %536 = vector.load %arg17[%c7_414, %c0_415, %c0_416] : memref<8x8x8xf32, #tpu.memory_space<vmem>>, vector<1x8x8xf32>
    %537 = vector.shape_cast %536 : vector<1x8x8xf32> to vector<8x8xf32>
    %538 = vector.shape_cast %535 : vector<8x8xf32> to vector<1x8x8xf32>
    tpu.vector_store %arg17[%c7_414, %c0_415, %c0_416], %538 {strides = array<i32>} : memref<8x8x8xf32, #tpu.memory_space<vmem>>, vector<1x8x8xf32>,
    %c0_417 = arith.constant 0 : index
    %c0_418 = arith.constant 0 : index
    %539 = memref.load %arg7[%c0_417, %c0_418] : memref<8x8xf32, #tpu.memory_space<smem>>
    %c0_419 = arith.constant 0 : index
    %c0_420 = arith.constant 0 : index
    %c0_421 = arith.constant 0 : index
    %540 = vector.load %arg17[%c0_419, %c0_420, %c0_421] : memref<8x8x8xf32, #tpu.memory_space<vmem>>, vector<1x8x8xf32>
    %541 = vector.shape_cast %540 : vector<1x8x8xf32> to vector<8x8xf32>
    %542 = vector.broadcast %539 : f32 to vector<8x8xf32>
    %543 = arith.mulf %542, %541 : vector<8x8xf32>
    %c0_422 = arith.constant 0 : index
    %c1_423 = arith.constant 1 : index
    %544 = memref.load %arg7[%c0_422, %c1_423] : memref<8x8xf32, #tpu.memory_space<smem>>
    %c1_424 = arith.constant 1 : index
    %c0_425 = arith.constant 0 : index
    %c0_426 = arith.constant 0 : index
    %545 = vector.load %arg17[%c1_424, %c0_425, %c0_426] : memref<8x8x8xf32, #tpu.memory_space<vmem>>, vector<1x8x8xf32>
    %546 = vector.shape_cast %545 : vector<1x8x8xf32> to vector<8x8xf32>
    %547 = vector.broadcast %544 : f32 to vector<8x8xf32>
    %548 = arith.mulf %547, %546 : vector<8x8xf32>
    %549 = arith.addf %543, %548 : vector<8x8xf32>
    %c0_427 = arith.constant 0 : index
    %c2_428 = arith.constant 2 : index
    %550 = memref.load %arg7[%c0_427, %c2_428] : memref<8x8xf32, #tpu.memory_space<smem>>
    %c2_429 = arith.constant 2 : index
    %c0_430 = arith.constant 0 : index
    %c0_431 = arith.constant 0 : index
    %551 = vector.load %arg17[%c2_429, %c0_430, %c0_431] : memref<8x8x8xf32, #tpu.memory_space<vmem>>, vector<1x8x8xf32>
    %552 = vector.shape_cast %551 : vector<1x8x8xf32> to vector<8x8xf32>
    %553 = vector.broadcast %550 : f32 to vector<8x8xf32>
    %554 = arith.mulf %553, %552 : vector<8x8xf32>
    %555 = arith.addf %549, %554 : vector<8x8xf32>
    %c0_432 = arith.constant 0 : index
    %c3_433 = arith.constant 3 : index
    %556 = memref.load %arg7[%c0_432, %c3_433] : memref<8x8xf32, #tpu.memory_space<smem>>
    %c3_434 = arith.constant 3 : index
    %c0_435 = arith.constant 0 : index
    %c0_436 = arith.constant 0 : index
    %557 = vector.load %arg17[%c3_434, %c0_435, %c0_436] : memref<8x8x8xf32, #tpu.memory_space<vmem>>, vector<1x8x8xf32>
    %558 = vector.shape_cast %557 : vector<1x8x8xf32> to vector<8x8xf32>
    %559 = vector.broadcast %556 : f32 to vector<8x8xf32>
    %560 = arith.mulf %559, %558 : vector<8x8xf32>
    %561 = arith.addf %555, %560 : vector<8x8xf32>
    %c0_437 = arith.constant 0 : index
    %c4_438 = arith.constant 4 : index
    %562 = memref.load %arg7[%c0_437, %c4_438] : memref<8x8xf32, #tpu.memory_space<smem>>
    %c4_439 = arith.constant 4 : index
    %c0_440 = arith.constant 0 : index
    %c0_441 = arith.constant 0 : index
    %563 = vector.load %arg17[%c4_439, %c0_440, %c0_441] : memref<8x8x8xf32, #tpu.memory_space<vmem>>, vector<1x8x8xf32>
    %564 = vector.shape_cast %563 : vector<1x8x8xf32> to vector<8x8xf32>
    %565 = vector.broadcast %562 : f32 to vector<8x8xf32>
    %566 = arith.mulf %565, %564 : vector<8x8xf32>
    %567 = arith.addf %561, %566 : vector<8x8xf32>
    %c0_442 = arith.constant 0 : index
    %c5_443 = arith.constant 5 : index
    %568 = memref.load %arg7[%c0_442, %c5_443] : memref<8x8xf32, #tpu.memory_space<smem>>
    %c5_444 = arith.constant 5 : index
    %c0_445 = arith.constant 0 : index
    %c0_446 = arith.constant 0 : index
    %569 = vector.load %arg17[%c5_444, %c0_445, %c0_446] : memref<8x8x8xf32, #tpu.memory_space<vmem>>, vector<1x8x8xf32>
    %570 = vector.shape_cast %569 : vector<1x8x8xf32> to vector<8x8xf32>
    %571 = vector.broadcast %568 : f32 to vector<8x8xf32>
    %572 = arith.mulf %571, %570 : vector<8x8xf32>
    %573 = arith.addf %567, %572 : vector<8x8xf32>
    %c0_447 = arith.constant 0 : index
    %c6_448 = arith.constant 6 : index
    %574 = memref.load %arg7[%c0_447, %c6_448] : memref<8x8xf32, #tpu.memory_space<smem>>
    %c6_449 = arith.constant 6 : index
    %c0_450 = arith.constant 0 : index
    %c0_451 = arith.constant 0 : index
    %575 = vector.load %arg17[%c6_449, %c0_450, %c0_451] : memref<8x8x8xf32, #tpu.memory_space<vmem>>, vector<1x8x8xf32>
    %576 = vector.shape_cast %575 : vector<1x8x8xf32> to vector<8x8xf32>
    %577 = vector.broadcast %574 : f32 to vector<8x8xf32>
    %578 = arith.mulf %577, %576 : vector<8x8xf32>
    %579 = arith.addf %573, %578 : vector<8x8xf32>
    %c0_452 = arith.constant 0 : index
    %c7_453 = arith.constant 7 : index
    %580 = memref.load %arg7[%c0_452, %c7_453] : memref<8x8xf32, #tpu.memory_space<smem>>
    %c7_454 = arith.constant 7 : index
    %c0_455 = arith.constant 0 : index
    %c0_456 = arith.constant 0 : index
    %581 = vector.load %arg17[%c7_454, %c0_455, %c0_456] : memref<8x8x8xf32, #tpu.memory_space<vmem>>, vector<1x8x8xf32>
    %582 = vector.shape_cast %581 : vector<1x8x8xf32> to vector<8x8xf32>
    %583 = vector.broadcast %580 : f32 to vector<8x8xf32>
    %584 = arith.mulf %583, %582 : vector<8x8xf32>
    %585 = arith.addf %579, %584 : vector<8x8xf32>
    %c0_457 = arith.constant 0 : index
    %c0_458 = arith.constant 0 : index
    %586 = vector.load %arg14[%c0_457, %c0_458] : memref<8x32xf32, #tpu.memory_space<vmem>>, vector<8x4xf32>
    %cst_459 = arith.constant dense<0.000000e+00> : vector<8x4xf32>
    %587 = tpu.matmul %585, %586, %cst_459 {dimension_numbers = #tpu.dot_dimension_numbers<[1], [0], [0], [1], [0, 0, 1, 1], [], []>} : vector<8x8xf32>, vector<8x4xf32>, vector<8x4xf32> -> vector<8x4xf32>
    %c1_460 = arith.constant 1 : index
    %c0_461 = arith.constant 0 : index
    %588 = memref.load %arg7[%c1_460, %c0_461] : memref<8x8xf32, #tpu.memory_space<smem>>
    %c0_462 = arith.constant 0 : index
    %c0_463 = arith.constant 0 : index
    %c0_464 = arith.constant 0 : index
    %589 = vector.load %arg17[%c0_462, %c0_463, %c0_464] : memref<8x8x8xf32, #tpu.memory_space<vmem>>, vector<1x8x8xf32>
    %590 = vector.shape_cast %589 : vector<1x8x8xf32> to vector<8x8xf32>
    %591 = vector.broadcast %588 : f32 to vector<8x8xf32>
    %592 = arith.mulf %591, %590 : vector<8x8xf32>
    %c1_465 = arith.constant 1 : index
    %c1_466 = arith.constant 1 : index
    %593 = memref.load %arg7[%c1_465, %c1_466] : memref<8x8xf32, #tpu.memory_space<smem>>
    %c1_467 = arith.constant 1 : index
    %c0_468 = arith.constant 0 : index
    %c0_469 = arith.constant 0 : index
    %594 = vector.load %arg17[%c1_467, %c0_468, %c0_469] : memref<8x8x8xf32, #tpu.memory_space<vmem>>, vector<1x8x8xf32>
    %595 = vector.shape_cast %594 : vector<1x8x8xf32> to vector<8x8xf32>
    %596 = vector.broadcast %593 : f32 to vector<8x8xf32>
    %597 = arith.mulf %596, %595 : vector<8x8xf32>
    %598 = arith.addf %592, %597 : vector<8x8xf32>
    %c1_470 = arith.constant 1 : index
    %c2_471 = arith.constant 2 : index
    %599 = memref.load %arg7[%c1_470, %c2_471] : memref<8x8xf32, #tpu.memory_space<smem>>
    %c2_472 = arith.constant 2 : index
    %c0_473 = arith.constant 0 : index
    %c0_474 = arith.constant 0 : index
    %600 = vector.load %arg17[%c2_472, %c0_473, %c0_474] : memref<8x8x8xf32, #tpu.memory_space<vmem>>, vector<1x8x8xf32>
    %601 = vector.shape_cast %600 : vector<1x8x8xf32> to vector<8x8xf32>
    %602 = vector.broadcast %599 : f32 to vector<8x8xf32>
    %603 = arith.mulf %602, %601 : vector<8x8xf32>
    %604 = arith.addf %598, %603 : vector<8x8xf32>
    %c1_475 = arith.constant 1 : index
    %c3_476 = arith.constant 3 : index
    %605 = memref.load %arg7[%c1_475, %c3_476] : memref<8x8xf32, #tpu.memory_space<smem>>
    %c3_477 = arith.constant 3 : index
    %c0_478 = arith.constant 0 : index
    %c0_479 = arith.constant 0 : index
    %606 = vector.load %arg17[%c3_477, %c0_478, %c0_479] : memref<8x8x8xf32, #tpu.memory_space<vmem>>, vector<1x8x8xf32>
    %607 = vector.shape_cast %606 : vector<1x8x8xf32> to vector<8x8xf32>
    %608 = vector.broadcast %605 : f32 to vector<8x8xf32>
    %609 = arith.mulf %608, %607 : vector<8x8xf32>
    %610 = arith.addf %604, %609 : vector<8x8xf32>
    %c1_480 = arith.constant 1 : index
    %c4_481 = arith.constant 4 : index
    %611 = memref.load %arg7[%c1_480, %c4_481] : memref<8x8xf32, #tpu.memory_space<smem>>
    %c4_482 = arith.constant 4 : index
    %c0_483 = arith.constant 0 : index
    %c0_484 = arith.constant 0 : index
    %612 = vector.load %arg17[%c4_482, %c0_483, %c0_484] : memref<8x8x8xf32, #tpu.memory_space<vmem>>, vector<1x8x8xf32>
    %613 = vector.shape_cast %612 : vector<1x8x8xf32> to vector<8x8xf32>
    %614 = vector.broadcast %611 : f32 to vector<8x8xf32>
    %615 = arith.mulf %614, %613 : vector<8x8xf32>
    %616 = arith.addf %610, %615 : vector<8x8xf32>
    %c1_485 = arith.constant 1 : index
    %c5_486 = arith.constant 5 : index
    %617 = memref.load %arg7[%c1_485, %c5_486] : memref<8x8xf32, #tpu.memory_space<smem>>
    %c5_487 = arith.constant 5 : index
    %c0_488 = arith.constant 0 : index
    %c0_489 = arith.constant 0 : index
    %618 = vector.load %arg17[%c5_487, %c0_488, %c0_489] : memref<8x8x8xf32, #tpu.memory_space<vmem>>, vector<1x8x8xf32>
    %619 = vector.shape_cast %618 : vector<1x8x8xf32> to vector<8x8xf32>
    %620 = vector.broadcast %617 : f32 to vector<8x8xf32>
    %621 = arith.mulf %620, %619 : vector<8x8xf32>
    %622 = arith.addf %616, %621 : vector<8x8xf32>
    %c1_490 = arith.constant 1 : index
    %c6_491 = arith.constant 6 : index
    %623 = memref.load %arg7[%c1_490, %c6_491] : memref<8x8xf32, #tpu.memory_space<smem>>
    %c6_492 = arith.constant 6 : index
    %c0_493 = arith.constant 0 : index
    %c0_494 = arith.constant 0 : index
    %624 = vector.load %arg17[%c6_492, %c0_493, %c0_494] : memref<8x8x8xf32, #tpu.memory_space<vmem>>, vector<1x8x8xf32>
    %625 = vector.shape_cast %624 : vector<1x8x8xf32> to vector<8x8xf32>
    %626 = vector.broadcast %623 : f32 to vector<8x8xf32>
    %627 = arith.mulf %626, %625 : vector<8x8xf32>
    %628 = arith.addf %622, %627 : vector<8x8xf32>
    %c1_495 = arith.constant 1 : index
    %c7_496 = arith.constant 7 : index
    %629 = memref.load %arg7[%c1_495, %c7_496] : memref<8x8xf32, #tpu.memory_space<smem>>
    %c7_497 = arith.constant 7 : index
    %c0_498 = arith.constant 0 : index
    %c0_499 = arith.constant 0 : index
    %630 = vector.load %arg17[%c7_497, %c0_498, %c0_499] : memref<8x8x8xf32, #tpu.memory_space<vmem>>, vector<1x8x8xf32>
    %631 = vector.shape_cast %630 : vector<1x8x8xf32> to vector<8x8xf32>
    %632 = vector.broadcast %629 : f32 to vector<8x8xf32>
    %633 = arith.mulf %632, %631 : vector<8x8xf32>
    %634 = arith.addf %628, %633 : vector<8x8xf32>
    %c0_500 = arith.constant 0 : index
    %c4_501 = arith.constant 4 : index
    %635 = vector.load %arg14[%c0_500, %c4_501] : memref<8x32xf32, #tpu.memory_space<vmem>>, vector<8x4xf32>
    %cst_502 = arith.constant dense<0.000000e+00> : vector<8x4xf32>
    %636 = tpu.matmul %634, %635, %cst_502 {dimension_numbers = #tpu.dot_dimension_numbers<[1], [0], [0], [1], [0, 0, 1, 1], [], []>} : vector<8x8xf32>, vector<8x4xf32>, vector<8x4xf32> -> vector<8x4xf32>
    %c2_503 = arith.constant 2 : index
    %c0_504 = arith.constant 0 : index
    %637 = memref.load %arg7[%c2_503, %c0_504] : memref<8x8xf32, #tpu.memory_space<smem>>
    %c0_505 = arith.constant 0 : index
    %c0_506 = arith.constant 0 : index
    %c0_507 = arith.constant 0 : index
    %638 = vector.load %arg17[%c0_505, %c0_506, %c0_507] : memref<8x8x8xf32, #tpu.memory_space<vmem>>, vector<1x8x8xf32>
    %639 = vector.shape_cast %638 : vector<1x8x8xf32> to vector<8x8xf32>
    %640 = vector.broadcast %637 : f32 to vector<8x8xf32>
    %641 = arith.mulf %640, %639 : vector<8x8xf32>
    %c2_508 = arith.constant 2 : index
    %c1_509 = arith.constant 1 : index
    %642 = memref.load %arg7[%c2_508, %c1_509] : memref<8x8xf32, #tpu.memory_space<smem>>
    %c1_510 = arith.constant 1 : index
    %c0_511 = arith.constant 0 : index
    %c0_512 = arith.constant 0 : index
    %643 = vector.load %arg17[%c1_510, %c0_511, %c0_512] : memref<8x8x8xf32, #tpu.memory_space<vmem>>, vector<1x8x8xf32>
    %644 = vector.shape_cast %643 : vector<1x8x8xf32> to vector<8x8xf32>
    %645 = vector.broadcast %642 : f32 to vector<8x8xf32>
    %646 = arith.mulf %645, %644 : vector<8x8xf32>
    %647 = arith.addf %641, %646 : vector<8x8xf32>
    %c2_513 = arith.constant 2 : index
    %c2_514 = arith.constant 2 : index
    %648 = memref.load %arg7[%c2_513, %c2_514] : memref<8x8xf32, #tpu.memory_space<smem>>
    %c2_515 = arith.constant 2 : index
    %c0_516 = arith.constant 0 : index
    %c0_517 = arith.constant 0 : index
    %649 = vector.load %arg17[%c2_515, %c0_516, %c0_517] : memref<8x8x8xf32, #tpu.memory_space<vmem>>, vector<1x8x8xf32>
    %650 = vector.shape_cast %649 : vector<1x8x8xf32> to vector<8x8xf32>
    %651 = vector.broadcast %648 : f32 to vector<8x8xf32>
    %652 = arith.mulf %651, %650 : vector<8x8xf32>
    %653 = arith.addf %647, %652 : vector<8x8xf32>
    %c2_518 = arith.constant 2 : index
    %c3_519 = arith.constant 3 : index
    %654 = memref.load %arg7[%c2_518, %c3_519] : memref<8x8xf32, #tpu.memory_space<smem>>
    %c3_520 = arith.constant 3 : index
    %c0_521 = arith.constant 0 : index
    %c0_522 = arith.constant 0 : index
    %655 = vector.load %arg17[%c3_520, %c0_521, %c0_522] : memref<8x8x8xf32, #tpu.memory_space<vmem>>, vector<1x8x8xf32>
    %656 = vector.shape_cast %655 : vector<1x8x8xf32> to vector<8x8xf32>
    %657 = vector.broadcast %654 : f32 to vector<8x8xf32>
    %658 = arith.mulf %657, %656 : vector<8x8xf32>
    %659 = arith.addf %653, %658 : vector<8x8xf32>
    %c2_523 = arith.constant 2 : index
    %c4_524 = arith.constant 4 : index
    %660 = memref.load %arg7[%c2_523, %c4_524] : memref<8x8xf32, #tpu.memory_space<smem>>
    %c4_525 = arith.constant 4 : index
    %c0_526 = arith.constant 0 : index
    %c0_527 = arith.constant 0 : index
    %661 = vector.load %arg17[%c4_525, %c0_526, %c0_527] : memref<8x8x8xf32, #tpu.memory_space<vmem>>, vector<1x8x8xf32>
    %662 = vector.shape_cast %661 : vector<1x8x8xf32> to vector<8x8xf32>
    %663 = vector.broadcast %660 : f32 to vector<8x8xf32>
    %664 = arith.mulf %663, %662 : vector<8x8xf32>
    %665 = arith.addf %659, %664 : vector<8x8xf32>
    %c2_528 = arith.constant 2 : index
    %c5_529 = arith.constant 5 : index
    %666 = memref.load %arg7[%c2_528, %c5_529] : memref<8x8xf32, #tpu.memory_space<smem>>
    %c5_530 = arith.constant 5 : index
    %c0_531 = arith.constant 0 : index
    %c0_532 = arith.constant 0 : index
    %667 = vector.load %arg17[%c5_530, %c0_531, %c0_532] : memref<8x8x8xf32, #tpu.memory_space<vmem>>, vector<1x8x8xf32>
    %668 = vector.shape_cast %667 : vector<1x8x8xf32> to vector<8x8xf32>
    %669 = vector.broadcast %666 : f32 to vector<8x8xf32>
    %670 = arith.mulf %669, %668 : vector<8x8xf32>
    %671 = arith.addf %665, %670 : vector<8x8xf32>
    %c2_533 = arith.constant 2 : index
    %c6_534 = arith.constant 6 : index
    %672 = memref.load %arg7[%c2_533, %c6_534] : memref<8x8xf32, #tpu.memory_space<smem>>
    %c6_535 = arith.constant 6 : index
    %c0_536 = arith.constant 0 : index
    %c0_537 = arith.constant 0 : index
    %673 = vector.load %arg17[%c6_535, %c0_536, %c0_537] : memref<8x8x8xf32, #tpu.memory_space<vmem>>, vector<1x8x8xf32>
    %674 = vector.shape_cast %673 : vector<1x8x8xf32> to vector<8x8xf32>
    %675 = vector.broadcast %672 : f32 to vector<8x8xf32>
    %676 = arith.mulf %675, %674 : vector<8x8xf32>
    %677 = arith.addf %671, %676 : vector<8x8xf32>
    %c2_538 = arith.constant 2 : index
    %c7_539 = arith.constant 7 : index
    %678 = memref.load %arg7[%c2_538, %c7_539] : memref<8x8xf32, #tpu.memory_space<smem>>
    %c7_540 = arith.constant 7 : index
    %c0_541 = arith.constant 0 : index
    %c0_542 = arith.constant 0 : index
    %679 = vector.load %arg17[%c7_540, %c0_541, %c0_542] : memref<8x8x8xf32, #tpu.memory_space<vmem>>, vector<1x8x8xf32>
    %680 = vector.shape_cast %679 : vector<1x8x8xf32> to vector<8x8xf32>
    %681 = vector.broadcast %678 : f32 to vector<8x8xf32>
    %682 = arith.mulf %681, %680 : vector<8x8xf32>
    %683 = arith.addf %677, %682 : vector<8x8xf32>
    %c0_543 = arith.constant 0 : index
    %c8_544 = arith.constant 8 : index
    %684 = vector.load %arg14[%c0_543, %c8_544] : memref<8x32xf32, #tpu.memory_space<vmem>>, vector<8x4xf32>
    %cst_545 = arith.constant dense<0.000000e+00> : vector<8x4xf32>
    %685 = tpu.matmul %683, %684, %cst_545 {dimension_numbers = #tpu.dot_dimension_numbers<[1], [0], [0], [1], [0, 0, 1, 1], [], []>} : vector<8x8xf32>, vector<8x4xf32>, vector<8x4xf32> -> vector<8x4xf32>
    %c3_546 = arith.constant 3 : index
    %c0_547 = arith.constant 0 : index
    %686 = memref.load %arg7[%c3_546, %c0_547] : memref<8x8xf32, #tpu.memory_space<smem>>
    %c0_548 = arith.constant 0 : index
    %c0_549 = arith.constant 0 : index
    %c0_550 = arith.constant 0 : index
    %687 = vector.load %arg17[%c0_548, %c0_549, %c0_550] : memref<8x8x8xf32, #tpu.memory_space<vmem>>, vector<1x8x8xf32>
    %688 = vector.shape_cast %687 : vector<1x8x8xf32> to vector<8x8xf32>
    %689 = vector.broadcast %686 : f32 to vector<8x8xf32>
    %690 = arith.mulf %689, %688 : vector<8x8xf32>
    %c3_551 = arith.constant 3 : index
    %c1_552 = arith.constant 1 : index
    %691 = memref.load %arg7[%c3_551, %c1_552] : memref<8x8xf32, #tpu.memory_space<smem>>
    %c1_553 = arith.constant 1 : index
    %c0_554 = arith.constant 0 : index
    %c0_555 = arith.constant 0 : index
    %692 = vector.load %arg17[%c1_553, %c0_554, %c0_555] : memref<8x8x8xf32, #tpu.memory_space<vmem>>, vector<1x8x8xf32>
    %693 = vector.shape_cast %692 : vector<1x8x8xf32> to vector<8x8xf32>
    %694 = vector.broadcast %691 : f32 to vector<8x8xf32>
    %695 = arith.mulf %694, %693 : vector<8x8xf32>
    %696 = arith.addf %690, %695 : vector<8x8xf32>
    %c3_556 = arith.constant 3 : index
    %c2_557 = arith.constant 2 : index
    %697 = memref.load %arg7[%c3_556, %c2_557] : memref<8x8xf32, #tpu.memory_space<smem>>
    %c2_558 = arith.constant 2 : index
    %c0_559 = arith.constant 0 : index
    %c0_560 = arith.constant 0 : index
    %698 = vector.load %arg17[%c2_558, %c0_559, %c0_560] : memref<8x8x8xf32, #tpu.memory_space<vmem>>, vector<1x8x8xf32>
    %699 = vector.shape_cast %698 : vector<1x8x8xf32> to vector<8x8xf32>
    %700 = vector.broadcast %697 : f32 to vector<8x8xf32>
    %701 = arith.mulf %700, %699 : vector<8x8xf32>
    %702 = arith.addf %696, %701 : vector<8x8xf32>
    %c3_561 = arith.constant 3 : index
    %c3_562 = arith.constant 3 : index
    %703 = memref.load %arg7[%c3_561, %c3_562] : memref<8x8xf32, #tpu.memory_space<smem>>
    %c3_563 = arith.constant 3 : index
    %c0_564 = arith.constant 0 : index
    %c0_565 = arith.constant 0 : index
    %704 = vector.load %arg17[%c3_563, %c0_564, %c0_565] : memref<8x8x8xf32, #tpu.memory_space<vmem>>, vector<1x8x8xf32>
    %705 = vector.shape_cast %704 : vector<1x8x8xf32> to vector<8x8xf32>
    %706 = vector.broadcast %703 : f32 to vector<8x8xf32>
    %707 = arith.mulf %706, %705 : vector<8x8xf32>
    %708 = arith.addf %702, %707 : vector<8x8xf32>
    %c3_566 = arith.constant 3 : index
    %c4_567 = arith.constant 4 : index
    %709 = memref.load %arg7[%c3_566, %c4_567] : memref<8x8xf32, #tpu.memory_space<smem>>
    %c4_568 = arith.constant 4 : index
    %c0_569 = arith.constant 0 : index
    %c0_570 = arith.constant 0 : index
    %710 = vector.load %arg17[%c4_568, %c0_569, %c0_570] : memref<8x8x8xf32, #tpu.memory_space<vmem>>, vector<1x8x8xf32>
    %711 = vector.shape_cast %710 : vector<1x8x8xf32> to vector<8x8xf32>
    %712 = vector.broadcast %709 : f32 to vector<8x8xf32>
    %713 = arith.mulf %712, %711 : vector<8x8xf32>
    %714 = arith.addf %708, %713 : vector<8x8xf32>
    %c3_571 = arith.constant 3 : index
    %c5_572 = arith.constant 5 : index
    %715 = memref.load %arg7[%c3_571, %c5_572] : memref<8x8xf32, #tpu.memory_space<smem>>
    %c5_573 = arith.constant 5 : index
    %c0_574 = arith.constant 0 : index
    %c0_575 = arith.constant 0 : index
    %716 = vector.load %arg17[%c5_573, %c0_574, %c0_575] : memref<8x8x8xf32, #tpu.memory_space<vmem>>, vector<1x8x8xf32>
    %717 = vector.shape_cast %716 : vector<1x8x8xf32> to vector<8x8xf32>
    %718 = vector.broadcast %715 : f32 to vector<8x8xf32>
    %719 = arith.mulf %718, %717 : vector<8x8xf32>
    %720 = arith.addf %714, %719 : vector<8x8xf32>
    %c3_576 = arith.constant 3 : index
    %c6_577 = arith.constant 6 : index
    %721 = memref.load %arg7[%c3_576, %c6_577] : memref<8x8xf32, #tpu.memory_space<smem>>
    %c6_578 = arith.constant 6 : index
    %c0_579 = arith.constant 0 : index
    %c0_580 = arith.constant 0 : index
    %722 = vector.load %arg17[%c6_578, %c0_579, %c0_580] : memref<8x8x8xf32, #tpu.memory_space<vmem>>, vector<1x8x8xf32>
    %723 = vector.shape_cast %722 : vector<1x8x8xf32> to vector<8x8xf32>
    %724 = vector.broadcast %721 : f32 to vector<8x8xf32>
    %725 = arith.mulf %724, %723 : vector<8x8xf32>
    %726 = arith.addf %720, %725 : vector<8x8xf32>
    %c3_581 = arith.constant 3 : index
    %c7_582 = arith.constant 7 : index
    %727 = memref.load %arg7[%c3_581, %c7_582] : memref<8x8xf32, #tpu.memory_space<smem>>
    %c7_583 = arith.constant 7 : index
    %c0_584 = arith.constant 0 : index
    %c0_585 = arith.constant 0 : index
    %728 = vector.load %arg17[%c7_583, %c0_584, %c0_585] : memref<8x8x8xf32, #tpu.memory_space<vmem>>, vector<1x8x8xf32>
    %729 = vector.shape_cast %728 : vector<1x8x8xf32> to vector<8x8xf32>
    %730 = vector.broadcast %727 : f32 to vector<8x8xf32>
    %731 = arith.mulf %730, %729 : vector<8x8xf32>
    %732 = arith.addf %726, %731 : vector<8x8xf32>
    %c0_586 = arith.constant 0 : index
    %c12_587 = arith.constant 12 : index
    %733 = vector.load %arg14[%c0_586, %c12_587] : memref<8x32xf32, #tpu.memory_space<vmem>>, vector<8x4xf32>
    %cst_588 = arith.constant dense<0.000000e+00> : vector<8x4xf32>
    %734 = tpu.matmul %732, %733, %cst_588 {dimension_numbers = #tpu.dot_dimension_numbers<[1], [0], [0], [1], [0, 0, 1, 1], [], []>} : vector<8x8xf32>, vector<8x4xf32>, vector<8x4xf32> -> vector<8x4xf32>
    %c4_589 = arith.constant 4 : index
    %c0_590 = arith.constant 0 : index
    %735 = memref.load %arg7[%c4_589, %c0_590] : memref<8x8xf32, #tpu.memory_space<smem>>
    %c0_591 = arith.constant 0 : index
    %c0_592 = arith.constant 0 : index
    %c0_593 = arith.constant 0 : index
    %736 = vector.load %arg17[%c0_591, %c0_592, %c0_593] : memref<8x8x8xf32, #tpu.memory_space<vmem>>, vector<1x8x8xf32>
    %737 = vector.shape_cast %736 : vector<1x8x8xf32> to vector<8x8xf32>
    %738 = vector.broadcast %735 : f32 to vector<8x8xf32>
    %739 = arith.mulf %738, %737 : vector<8x8xf32>
    %c4_594 = arith.constant 4 : index
    %c1_595 = arith.constant 1 : index
    %740 = memref.load %arg7[%c4_594, %c1_595] : memref<8x8xf32, #tpu.memory_space<smem>>
    %c1_596 = arith.constant 1 : index
    %c0_597 = arith.constant 0 : index
    %c0_598 = arith.constant 0 : index
    %741 = vector.load %arg17[%c1_596, %c0_597, %c0_598] : memref<8x8x8xf32, #tpu.memory_space<vmem>>, vector<1x8x8xf32>
    %742 = vector.shape_cast %741 : vector<1x8x8xf32> to vector<8x8xf32>
    %743 = vector.broadcast %740 : f32 to vector<8x8xf32>
    %744 = arith.mulf %743, %742 : vector<8x8xf32>
    %745 = arith.addf %739, %744 : vector<8x8xf32>
    %c4_599 = arith.constant 4 : index
    %c2_600 = arith.constant 2 : index
    %746 = memref.load %arg7[%c4_599, %c2_600] : memref<8x8xf32, #tpu.memory_space<smem>>
    %c2_601 = arith.constant 2 : index
    %c0_602 = arith.constant 0 : index
    %c0_603 = arith.constant 0 : index
    %747 = vector.load %arg17[%c2_601, %c0_602, %c0_603] : memref<8x8x8xf32, #tpu.memory_space<vmem>>, vector<1x8x8xf32>
    %748 = vector.shape_cast %747 : vector<1x8x8xf32> to vector<8x8xf32>
    %749 = vector.broadcast %746 : f32 to vector<8x8xf32>
    %750 = arith.mulf %749, %748 : vector<8x8xf32>
    %751 = arith.addf %745, %750 : vector<8x8xf32>
    %c4_604 = arith.constant 4 : index
    %c3_605 = arith.constant 3 : index
    %752 = memref.load %arg7[%c4_604, %c3_605] : memref<8x8xf32, #tpu.memory_space<smem>>
    %c3_606 = arith.constant 3 : index
    %c0_607 = arith.constant 0 : index
    %c0_608 = arith.constant 0 : index
    %753 = vector.load %arg17[%c3_606, %c0_607, %c0_608] : memref<8x8x8xf32, #tpu.memory_space<vmem>>, vector<1x8x8xf32>
    %754 = vector.shape_cast %753 : vector<1x8x8xf32> to vector<8x8xf32>
    %755 = vector.broadcast %752 : f32 to vector<8x8xf32>
    %756 = arith.mulf %755, %754 : vector<8x8xf32>
    %757 = arith.addf %751, %756 : vector<8x8xf32>
    %c4_609 = arith.constant 4 : index
    %c4_610 = arith.constant 4 : index
    %758 = memref.load %arg7[%c4_609, %c4_610] : memref<8x8xf32, #tpu.memory_space<smem>>
    %c4_611 = arith.constant 4 : index
    %c0_612 = arith.constant 0 : index
    %c0_613 = arith.constant 0 : index
    %759 = vector.load %arg17[%c4_611, %c0_612, %c0_613] : memref<8x8x8xf32, #tpu.memory_space<vmem>>, vector<1x8x8xf32>
    %760 = vector.shape_cast %759 : vector<1x8x8xf32> to vector<8x8xf32>
    %761 = vector.broadcast %758 : f32 to vector<8x8xf32>
    %762 = arith.mulf %761, %760 : vector<8x8xf32>
    %763 = arith.addf %757, %762 : vector<8x8xf32>
    %c4_614 = arith.constant 4 : index
    %c5_615 = arith.constant 5 : index
    %764 = memref.load %arg7[%c4_614, %c5_615] : memref<8x8xf32, #tpu.memory_space<smem>>
    %c5_616 = arith.constant 5 : index
    %c0_617 = arith.constant 0 : index
    %c0_618 = arith.constant 0 : index
    %765 = vector.load %arg17[%c5_616, %c0_617, %c0_618] : memref<8x8x8xf32, #tpu.memory_space<vmem>>, vector<1x8x8xf32>
    %766 = vector.shape_cast %765 : vector<1x8x8xf32> to vector<8x8xf32>
    %767 = vector.broadcast %764 : f32 to vector<8x8xf32>
    %768 = arith.mulf %767, %766 : vector<8x8xf32>
    %769 = arith.addf %763, %768 : vector<8x8xf32>
    %c4_619 = arith.constant 4 : index
    %c6_620 = arith.constant 6 : index
    %770 = memref.load %arg7[%c4_619, %c6_620] : memref<8x8xf32, #tpu.memory_space<smem>>
    %c6_621 = arith.constant 6 : index
    %c0_622 = arith.constant 0 : index
    %c0_623 = arith.constant 0 : index
    %771 = vector.load %arg17[%c6_621, %c0_622, %c0_623] : memref<8x8x8xf32, #tpu.memory_space<vmem>>, vector<1x8x8xf32>
    %772 = vector.shape_cast %771 : vector<1x8x8xf32> to vector<8x8xf32>
    %773 = vector.broadcast %770 : f32 to vector<8x8xf32>
    %774 = arith.mulf %773, %772 : vector<8x8xf32>
    %775 = arith.addf %769, %774 : vector<8x8xf32>
    %c4_624 = arith.constant 4 : index
    %c7_625 = arith.constant 7 : index
    %776 = memref.load %arg7[%c4_624, %c7_625] : memref<8x8xf32, #tpu.memory_space<smem>>
    %c7_626 = arith.constant 7 : index
    %c0_627 = arith.constant 0 : index
    %c0_628 = arith.constant 0 : index
    %777 = vector.load %arg17[%c7_626, %c0_627, %c0_628] : memref<8x8x8xf32, #tpu.memory_space<vmem>>, vector<1x8x8xf32>
    %778 = vector.shape_cast %777 : vector<1x8x8xf32> to vector<8x8xf32>
    %779 = vector.broadcast %776 : f32 to vector<8x8xf32>
    %780 = arith.mulf %779, %778 : vector<8x8xf32>
    %781 = arith.addf %775, %780 : vector<8x8xf32>
    %c0_629 = arith.constant 0 : index
    %c16_630 = arith.constant 16 : index
    %782 = vector.load %arg14[%c0_629, %c16_630] : memref<8x32xf32, #tpu.memory_space<vmem>>, vector<8x4xf32>
    %cst_631 = arith.constant dense<0.000000e+00> : vector<8x4xf32>
    %783 = tpu.matmul %781, %782, %cst_631 {dimension_numbers = #tpu.dot_dimension_numbers<[1], [0], [0], [1], [0, 0, 1, 1], [], []>} : vector<8x8xf32>, vector<8x4xf32>, vector<8x4xf32> -> vector<8x4xf32>
    %c5_632 = arith.constant 5 : index
    %c0_633 = arith.constant 0 : index
    %784 = memref.load %arg7[%c5_632, %c0_633] : memref<8x8xf32, #tpu.memory_space<smem>>
    %c0_634 = arith.constant 0 : index
    %c0_635 = arith.constant 0 : index
    %c0_636 = arith.constant 0 : index
    %785 = vector.load %arg17[%c0_634, %c0_635, %c0_636] : memref<8x8x8xf32, #tpu.memory_space<vmem>>, vector<1x8x8xf32>
    %786 = vector.shape_cast %785 : vector<1x8x8xf32> to vector<8x8xf32>
    %787 = vector.broadcast %784 : f32 to vector<8x8xf32>
    %788 = arith.mulf %787, %786 : vector<8x8xf32>
    %c5_637 = arith.constant 5 : index
    %c1_638 = arith.constant 1 : index
    %789 = memref.load %arg7[%c5_637, %c1_638] : memref<8x8xf32, #tpu.memory_space<smem>>
    %c1_639 = arith.constant 1 : index
    %c0_640 = arith.constant 0 : index
    %c0_641 = arith.constant 0 : index
    %790 = vector.load %arg17[%c1_639, %c0_640, %c0_641] : memref<8x8x8xf32, #tpu.memory_space<vmem>>, vector<1x8x8xf32>
    %791 = vector.shape_cast %790 : vector<1x8x8xf32> to vector<8x8xf32>
    %792 = vector.broadcast %789 : f32 to vector<8x8xf32>
    %793 = arith.mulf %792, %791 : vector<8x8xf32>
    %794 = arith.addf %788, %793 : vector<8x8xf32>
    %c5_642 = arith.constant 5 : index
    %c2_643 = arith.constant 2 : index
    %795 = memref.load %arg7[%c5_642, %c2_643] : memref<8x8xf32, #tpu.memory_space<smem>>
    %c2_644 = arith.constant 2 : index
    %c0_645 = arith.constant 0 : index
    %c0_646 = arith.constant 0 : index
    %796 = vector.load %arg17[%c2_644, %c0_645, %c0_646] : memref<8x8x8xf32, #tpu.memory_space<vmem>>, vector<1x8x8xf32>
    %797 = vector.shape_cast %796 : vector<1x8x8xf32> to vector<8x8xf32>
    %798 = vector.broadcast %795 : f32 to vector<8x8xf32>
    %799 = arith.mulf %798, %797 : vector<8x8xf32>
    %800 = arith.addf %794, %799 : vector<8x8xf32>
    %c5_647 = arith.constant 5 : index
    %c3_648 = arith.constant 3 : index
    %801 = memref.load %arg7[%c5_647, %c3_648] : memref<8x8xf32, #tpu.memory_space<smem>>
    %c3_649 = arith.constant 3 : index
    %c0_650 = arith.constant 0 : index
    %c0_651 = arith.constant 0 : index
    %802 = vector.load %arg17[%c3_649, %c0_650, %c0_651] : memref<8x8x8xf32, #tpu.memory_space<vmem>>, vector<1x8x8xf32>
    %803 = vector.shape_cast %802 : vector<1x8x8xf32> to vector<8x8xf32>
    %804 = vector.broadcast %801 : f32 to vector<8x8xf32>
    %805 = arith.mulf %804, %803 : vector<8x8xf32>
    %806 = arith.addf %800, %805 : vector<8x8xf32>
    %c5_652 = arith.constant 5 : index
    %c4_653 = arith.constant 4 : index
    %807 = memref.load %arg7[%c5_652, %c4_653] : memref<8x8xf32, #tpu.memory_space<smem>>
    %c4_654 = arith.constant 4 : index
    %c0_655 = arith.constant 0 : index
    %c0_656 = arith.constant 0 : index
    %808 = vector.load %arg17[%c4_654, %c0_655, %c0_656] : memref<8x8x8xf32, #tpu.memory_space<vmem>>, vector<1x8x8xf32>
    %809 = vector.shape_cast %808 : vector<1x8x8xf32> to vector<8x8xf32>
    %810 = vector.broadcast %807 : f32 to vector<8x8xf32>
    %811 = arith.mulf %810, %809 : vector<8x8xf32>
    %812 = arith.addf %806, %811 : vector<8x8xf32>
    %c5_657 = arith.constant 5 : index
    %c5_658 = arith.constant 5 : index
    %813 = memref.load %arg7[%c5_657, %c5_658] : memref<8x8xf32, #tpu.memory_space<smem>>
    %c5_659 = arith.constant 5 : index
    %c0_660 = arith.constant 0 : index
    %c0_661 = arith.constant 0 : index
    %814 = vector.load %arg17[%c5_659, %c0_660, %c0_661] : memref<8x8x8xf32, #tpu.memory_space<vmem>>, vector<1x8x8xf32>
    %815 = vector.shape_cast %814 : vector<1x8x8xf32> to vector<8x8xf32>
    %816 = vector.broadcast %813 : f32 to vector<8x8xf32>
    %817 = arith.mulf %816, %815 : vector<8x8xf32>
    %818 = arith.addf %812, %817 : vector<8x8xf32>
    %c5_662 = arith.constant 5 : index
    %c6_663 = arith.constant 6 : index
    %819 = memref.load %arg7[%c5_662, %c6_663] : memref<8x8xf32, #tpu.memory_space<smem>>
    %c6_664 = arith.constant 6 : index
    %c0_665 = arith.constant 0 : index
    %c0_666 = arith.constant 0 : index
    %820 = vector.load %arg17[%c6_664, %c0_665, %c0_666] : memref<8x8x8xf32, #tpu.memory_space<vmem>>, vector<1x8x8xf32>
    %821 = vector.shape_cast %820 : vector<1x8x8xf32> to vector<8x8xf32>
    %822 = vector.broadcast %819 : f32 to vector<8x8xf32>
    %823 = arith.mulf %822, %821 : vector<8x8xf32>
    %824 = arith.addf %818, %823 : vector<8x8xf32>
    %c5_667 = arith.constant 5 : index
    %c7_668 = arith.constant 7 : index
    %825 = memref.load %arg7[%c5_667, %c7_668] : memref<8x8xf32, #tpu.memory_space<smem>>
    %c7_669 = arith.constant 7 : index
    %c0_670 = arith.constant 0 : index
    %c0_671 = arith.constant 0 : index
    %826 = vector.load %arg17[%c7_669, %c0_670, %c0_671] : memref<8x8x8xf32, #tpu.memory_space<vmem>>, vector<1x8x8xf32>
    %827 = vector.shape_cast %826 : vector<1x8x8xf32> to vector<8x8xf32>
    %828 = vector.broadcast %825 : f32 to vector<8x8xf32>
    %829 = arith.mulf %828, %827 : vector<8x8xf32>
    %830 = arith.addf %824, %829 : vector<8x8xf32>
    %c0_672 = arith.constant 0 : index
    %c20_673 = arith.constant 20 : index
    %831 = vector.load %arg14[%c0_672, %c20_673] : memref<8x32xf32, #tpu.memory_space<vmem>>, vector<8x4xf32>
    %cst_674 = arith.constant dense<0.000000e+00> : vector<8x4xf32>
    %832 = tpu.matmul %830, %831, %cst_674 {dimension_numbers = #tpu.dot_dimension_numbers<[1], [0], [0], [1], [0, 0, 1, 1], [], []>} : vector<8x8xf32>, vector<8x4xf32>, vector<8x4xf32> -> vector<8x4xf32>
    %c6_675 = arith.constant 6 : index
    %c0_676 = arith.constant 0 : index
    %833 = memref.load %arg7[%c6_675, %c0_676] : memref<8x8xf32, #tpu.memory_space<smem>>
    %c0_677 = arith.constant 0 : index
    %c0_678 = arith.constant 0 : index
    %c0_679 = arith.constant 0 : index
    %834 = vector.load %arg17[%c0_677, %c0_678, %c0_679] : memref<8x8x8xf32, #tpu.memory_space<vmem>>, vector<1x8x8xf32>
    %835 = vector.shape_cast %834 : vector<1x8x8xf32> to vector<8x8xf32>
    %836 = vector.broadcast %833 : f32 to vector<8x8xf32>
    %837 = arith.mulf %836, %835 : vector<8x8xf32>
    %c6_680 = arith.constant 6 : index
    %c1_681 = arith.constant 1 : index
    %838 = memref.load %arg7[%c6_680, %c1_681] : memref<8x8xf32, #tpu.memory_space<smem>>
    %c1_682 = arith.constant 1 : index
    %c0_683 = arith.constant 0 : index
    %c0_684 = arith.constant 0 : index
    %839 = vector.load %arg17[%c1_682, %c0_683, %c0_684] : memref<8x8x8xf32, #tpu.memory_space<vmem>>, vector<1x8x8xf32>
    %840 = vector.shape_cast %839 : vector<1x8x8xf32> to vector<8x8xf32>
    %841 = vector.broadcast %838 : f32 to vector<8x8xf32>
    %842 = arith.mulf %841, %840 : vector<8x8xf32>
    %843 = arith.addf %837, %842 : vector<8x8xf32>
    %c6_685 = arith.constant 6 : index
    %c2_686 = arith.constant 2 : index
    %844 = memref.load %arg7[%c6_685, %c2_686] : memref<8x8xf32, #tpu.memory_space<smem>>
    %c2_687 = arith.constant 2 : index
    %c0_688 = arith.constant 0 : index
    %c0_689 = arith.constant 0 : index
    %845 = vector.load %arg17[%c2_687, %c0_688, %c0_689] : memref<8x8x8xf32, #tpu.memory_space<vmem>>, vector<1x8x8xf32>
    %846 = vector.shape_cast %845 : vector<1x8x8xf32> to vector<8x8xf32>
    %847 = vector.broadcast %844 : f32 to vector<8x8xf32>
    %848 = arith.mulf %847, %846 : vector<8x8xf32>
    %849 = arith.addf %843, %848 : vector<8x8xf32>
    %c6_690 = arith.constant 6 : index
    %c3_691 = arith.constant 3 : index
    %850 = memref.load %arg7[%c6_690, %c3_691] : memref<8x8xf32, #tpu.memory_space<smem>>
    %c3_692 = arith.constant 3 : index
    %c0_693 = arith.constant 0 : index
    %c0_694 = arith.constant 0 : index
    %851 = vector.load %arg17[%c3_692, %c0_693, %c0_694] : memref<8x8x8xf32, #tpu.memory_space<vmem>>, vector<1x8x8xf32>
    %852 = vector.shape_cast %851 : vector<1x8x8xf32> to vector<8x8xf32>
    %853 = vector.broadcast %850 : f32 to vector<8x8xf32>
    %854 = arith.mulf %853, %852 : vector<8x8xf32>
    %855 = arith.addf %849, %854 : vector<8x8xf32>
    %c6_695 = arith.constant 6 : index
    %c4_696 = arith.constant 4 : index
    %856 = memref.load %arg7[%c6_695, %c4_696] : memref<8x8xf32, #tpu.memory_space<smem>>
    %c4_697 = arith.constant 4 : index
    %c0_698 = arith.constant 0 : index
    %c0_699 = arith.constant 0 : index
    %857 = vector.load %arg17[%c4_697, %c0_698, %c0_699] : memref<8x8x8xf32, #tpu.memory_space<vmem>>, vector<1x8x8xf32>
    %858 = vector.shape_cast %857 : vector<1x8x8xf32> to vector<8x8xf32>
    %859 = vector.broadcast %856 : f32 to vector<8x8xf32>
    %860 = arith.mulf %859, %858 : vector<8x8xf32>
    %861 = arith.addf %855, %860 : vector<8x8xf32>
    %c6_700 = arith.constant 6 : index
    %c5_701 = arith.constant 5 : index
    %862 = memref.load %arg7[%c6_700, %c5_701] : memref<8x8xf32, #tpu.memory_space<smem>>
    %c5_702 = arith.constant 5 : index
    %c0_703 = arith.constant 0 : index
    %c0_704 = arith.constant 0 : index
    %863 = vector.load %arg17[%c5_702, %c0_703, %c0_704] : memref<8x8x8xf32, #tpu.memory_space<vmem>>, vector<1x8x8xf32>
    %864 = vector.shape_cast %863 : vector<1x8x8xf32> to vector<8x8xf32>
    %865 = vector.broadcast %862 : f32 to vector<8x8xf32>
    %866 = arith.mulf %865, %864 : vector<8x8xf32>
    %867 = arith.addf %861, %866 : vector<8x8xf32>
    %c6_705 = arith.constant 6 : index
    %c6_706 = arith.constant 6 : index
    %868 = memref.load %arg7[%c6_705, %c6_706] : memref<8x8xf32, #tpu.memory_space<smem>>
    %c6_707 = arith.constant 6 : index
    %c0_708 = arith.constant 0 : index
    %c0_709 = arith.constant 0 : index
    %869 = vector.load %arg17[%c6_707, %c0_708, %c0_709] : memref<8x8x8xf32, #tpu.memory_space<vmem>>, vector<1x8x8xf32>
    %870 = vector.shape_cast %869 : vector<1x8x8xf32> to vector<8x8xf32>
    %871 = vector.broadcast %868 : f32 to vector<8x8xf32>
    %872 = arith.mulf %871, %870 : vector<8x8xf32>
    %873 = arith.addf %867, %872 : vector<8x8xf32>
    %c6_710 = arith.constant 6 : index
    %c7_711 = arith.constant 7 : index
    %874 = memref.load %arg7[%c6_710, %c7_711] : memref<8x8xf32, #tpu.memory_space<smem>>
    %c7_712 = arith.constant 7 : index
    %c0_713 = arith.constant 0 : index
    %c0_714 = arith.constant 0 : index
    %875 = vector.load %arg17[%c7_712, %c0_713, %c0_714] : memref<8x8x8xf32, #tpu.memory_space<vmem>>, vector<1x8x8xf32>
    %876 = vector.shape_cast %875 : vector<1x8x8xf32> to vector<8x8xf32>
    %877 = vector.broadcast %874 : f32 to vector<8x8xf32>
    %878 = arith.mulf %877, %876 : vector<8x8xf32>
    %879 = arith.addf %873, %878 : vector<8x8xf32>
    %c0_715 = arith.constant 0 : index
    %c24_716 = arith.constant 24 : index
    %880 = vector.load %arg14[%c0_715, %c24_716] : memref<8x32xf32, #tpu.memory_space<vmem>>, vector<8x4xf32>
    %cst_717 = arith.constant dense<0.000000e+00> : vector<8x4xf32>
    %881 = tpu.matmul %879, %880, %cst_717 {dimension_numbers = #tpu.dot_dimension_numbers<[1], [0], [0], [1], [0, 0, 1, 1], [], []>} : vector<8x8xf32>, vector<8x4xf32>, vector<8x4xf32> -> vector<8x4xf32>
    %c7_718 = arith.constant 7 : index
    %c0_719 = arith.constant 0 : index
    %882 = memref.load %arg7[%c7_718, %c0_719] : memref<8x8xf32, #tpu.memory_space<smem>>
    %c0_720 = arith.constant 0 : index
    %c0_721 = arith.constant 0 : index
    %c0_722 = arith.constant 0 : index
    %883 = vector.load %arg17[%c0_720, %c0_721, %c0_722] : memref<8x8x8xf32, #tpu.memory_space<vmem>>, vector<1x8x8xf32>
    %884 = vector.shape_cast %883 : vector<1x8x8xf32> to vector<8x8xf32>
    %885 = vector.broadcast %882 : f32 to vector<8x8xf32>
    %886 = arith.mulf %885, %884 : vector<8x8xf32>
    %c7_723 = arith.constant 7 : index
    %c1_724 = arith.constant 1 : index
    %887 = memref.load %arg7[%c7_723, %c1_724] : memref<8x8xf32, #tpu.memory_space<smem>>
    %c1_725 = arith.constant 1 : index
    %c0_726 = arith.constant 0 : index
    %c0_727 = arith.constant 0 : index
    %888 = vector.load %arg17[%c1_725, %c0_726, %c0_727] : memref<8x8x8xf32, #tpu.memory_space<vmem>>, vector<1x8x8xf32>
    %889 = vector.shape_cast %888 : vector<1x8x8xf32> to vector<8x8xf32>
    %890 = vector.broadcast %887 : f32 to vector<8x8xf32>
    %891 = arith.mulf %890, %889 : vector<8x8xf32>
    %892 = arith.addf %886, %891 : vector<8x8xf32>
    %c7_728 = arith.constant 7 : index
    %c2_729 = arith.constant 2 : index
    %893 = memref.load %arg7[%c7_728, %c2_729] : memref<8x8xf32, #tpu.memory_space<smem>>
    %c2_730 = arith.constant 2 : index
    %c0_731 = arith.constant 0 : index
    %c0_732 = arith.constant 0 : index
    %894 = vector.load %arg17[%c2_730, %c0_731, %c0_732] : memref<8x8x8xf32, #tpu.memory_space<vmem>>, vector<1x8x8xf32>
    %895 = vector.shape_cast %894 : vector<1x8x8xf32> to vector<8x8xf32>
    %896 = vector.broadcast %893 : f32 to vector<8x8xf32>
    %897 = arith.mulf %896, %895 : vector<8x8xf32>
    %898 = arith.addf %892, %897 : vector<8x8xf32>
    %c7_733 = arith.constant 7 : index
    %c3_734 = arith.constant 3 : index
    %899 = memref.load %arg7[%c7_733, %c3_734] : memref<8x8xf32, #tpu.memory_space<smem>>
    %c3_735 = arith.constant 3 : index
    %c0_736 = arith.constant 0 : index
    %c0_737 = arith.constant 0 : index
    %900 = vector.load %arg17[%c3_735, %c0_736, %c0_737] : memref<8x8x8xf32, #tpu.memory_space<vmem>>, vector<1x8x8xf32>
    %901 = vector.shape_cast %900 : vector<1x8x8xf32> to vector<8x8xf32>
    %902 = vector.broadcast %899 : f32 to vector<8x8xf32>
    %903 = arith.mulf %902, %901 : vector<8x8xf32>
    %904 = arith.addf %898, %903 : vector<8x8xf32>
    %c7_738 = arith.constant 7 : index
    %c4_739 = arith.constant 4 : index
    %905 = memref.load %arg7[%c7_738, %c4_739] : memref<8x8xf32, #tpu.memory_space<smem>>
    %c4_740 = arith.constant 4 : index
    %c0_741 = arith.constant 0 : index
    %c0_742 = arith.constant 0 : index
    %906 = vector.load %arg17[%c4_740, %c0_741, %c0_742] : memref<8x8x8xf32, #tpu.memory_space<vmem>>, vector<1x8x8xf32>
    %907 = vector.shape_cast %906 : vector<1x8x8xf32> to vector<8x8xf32>
    %908 = vector.broadcast %905 : f32 to vector<8x8xf32>
    %909 = arith.mulf %908, %907 : vector<8x8xf32>
    %910 = arith.addf %904, %909 : vector<8x8xf32>
    %c7_743 = arith.constant 7 : index
    %c5_744 = arith.constant 5 : index
    %911 = memref.load %arg7[%c7_743, %c5_744] : memref<8x8xf32, #tpu.memory_space<smem>>
    %c5_745 = arith.constant 5 : index
    %c0_746 = arith.constant 0 : index
    %c0_747 = arith.constant 0 : index
    %912 = vector.load %arg17[%c5_745, %c0_746, %c0_747] : memref<8x8x8xf32, #tpu.memory_space<vmem>>, vector<1x8x8xf32>
    %913 = vector.shape_cast %912 : vector<1x8x8xf32> to vector<8x8xf32>
    %914 = vector.broadcast %911 : f32 to vector<8x8xf32>
    %915 = arith.mulf %914, %913 : vector<8x8xf32>
    %916 = arith.addf %910, %915 : vector<8x8xf32>
    %c7_748 = arith.constant 7 : index
    %c6_749 = arith.constant 6 : index
    %917 = memref.load %arg7[%c7_748, %c6_749] : memref<8x8xf32, #tpu.memory_space<smem>>
    %c6_750 = arith.constant 6 : index
    %c0_751 = arith.constant 0 : index
    %c0_752 = arith.constant 0 : index
    %918 = vector.load %arg17[%c6_750, %c0_751, %c0_752] : memref<8x8x8xf32, #tpu.memory_space<vmem>>, vector<1x8x8xf32>
    %919 = vector.shape_cast %918 : vector<1x8x8xf32> to vector<8x8xf32>
    %920 = vector.broadcast %917 : f32 to vector<8x8xf32>
    %921 = arith.mulf %920, %919 : vector<8x8xf32>
    %922 = arith.addf %916, %921 : vector<8x8xf32>
    %c7_753 = arith.constant 7 : index
    %c7_754 = arith.constant 7 : index
    %923 = memref.load %arg7[%c7_753, %c7_754] : memref<8x8xf32, #tpu.memory_space<smem>>
    %c7_755 = arith.constant 7 : index
    %c0_756 = arith.constant 0 : index
    %c0_757 = arith.constant 0 : index
    %924 = vector.load %arg17[%c7_755, %c0_756, %c0_757] : memref<8x8x8xf32, #tpu.memory_space<vmem>>, vector<1x8x8xf32>
    %925 = vector.shape_cast %924 : vector<1x8x8xf32> to vector<8x8xf32>
    %926 = vector.broadcast %923 : f32 to vector<8x8xf32>
    %927 = arith.mulf %926, %925 : vector<8x8xf32>
    %928 = arith.addf %922, %927 : vector<8x8xf32>
    %c0_758 = arith.constant 0 : index
    %c28_759 = arith.constant 28 : index
    %929 = vector.load %arg14[%c0_758, %c28_759] : memref<8x32xf32, #tpu.memory_space<vmem>>, vector<8x4xf32>
    %cst_760 = arith.constant dense<0.000000e+00> : vector<8x4xf32>
    %930 = tpu.matmul %928, %929, %cst_760 {dimension_numbers = #tpu.dot_dimension_numbers<[1], [0], [0], [1], [0, 0, 1, 1], [], []>} : vector<8x8xf32>, vector<8x4xf32>, vector<8x4xf32> -> vector<8x4xf32>
    %931 = tpu.concatenate %587, %636, %685, %734, %783, %832, %881, %930 in 1 : vector<8x4xf32>, vector<8x4xf32>, vector<8x4xf32>, vector<8x4xf32>, vector<8x4xf32>, vector<8x4xf32>, vector<8x4xf32>, vector<8x4xf32> -> vector<8x32xf32>
    %c0_761 = arith.constant 0 : index
    %c0_762 = arith.constant 0 : index
    %932 = vector.load %arg15[%c0_761, %c0_762] : memref<1x32xf32, #tpu.memory_space<vmem>>, vector<1x32xf32>
    %c0_763 = arith.constant 0 : index
    %c0_764 = arith.constant 0 : index
    %933 = vector.load %arg8[%c0_763, %c0_764] : memref<1x32xf32, #tpu.memory_space<vmem>>, vector<1x32xf32>
    %934 = arith.mulf %932, %933 : vector<1x32xf32>
    %935 = vector.broadcast %934 : vector<1x32xf32> to vector<8x32xf32>
    %936 = arith.addf %931, %935 : vector<8x32xf32>
    %c0_765 = arith.constant 0 : index
    %c0_766 = arith.constant 0 : index
    %937 = vector.load %arg9[%c0_765, %c0_766] : memref<32x32xf32, #tpu.memory_space<vmem>>, vector<32x32xf32>
    %cst_767 = arith.constant dense<0.000000e+00> : vector<8x32xf32>
    %938 = tpu.matmul %936, %937, %cst_767 {dimension_numbers = #tpu.dot_dimension_numbers<[1], [0], [0], [1], [0, 0, 1, 1], [], []>} : vector<8x32xf32>, vector<32x32xf32>, vector<8x32xf32> -> vector<8x32xf32>
    %c0_768 = arith.constant 0 : index
    %c0_769 = arith.constant 0 : index
    %939 = vector.load %arg10[%c0_768, %c0_769] : memref<1x32xf32, #tpu.memory_space<vmem>>, vector<1x32xf32>
    %940 = vector.broadcast %939 : vector<1x32xf32> to vector<8x32xf32>
    %941 = arith.addf %938, %940 : vector<8x32xf32>
    %c0_770 = arith.constant 0 : index
    %c0_771 = arith.constant 0 : index
    %c0_772 = arith.constant 0 : index
    %942 = vector.load %arg11[%c0_770, %c0_771, %c0_772] : memref<1x8x32xf32, #tpu.memory_space<vmem>>, vector<1x8x32xf32>
    %943 = vector.shape_cast %942 : vector<1x8x32xf32> to vector<8x32xf32>
    %944 = vector.shape_cast %941 : vector<8x32xf32> to vector<1x8x32xf32>
    tpu.vector_store %arg11[%c0_770, %c0_771, %c0_772], %944 {strides = array<i32>} : memref<1x8x32xf32, #tpu.memory_space<vmem>>, vector<1x8x32xf32>,
    return
  }
  func.func @transform_0(%arg0: i32, %arg1: i32) -> (i32, i32, i32) {
    %c0_i32 = arith.constant 0 : i32
    %c0_i32_0 = arith.constant 0 : i32
    %c0_i32_1 = arith.constant 0 : i32
    return %arg0, %c0_i32, %c0_i32_0 : i32, i32, i32
  }
  func.func @transform_1(%arg0: i32, %arg1: i32) -> (i32, i32) {
    %c0_i32 = arith.constant 0 : i32
    %c0_i32_0 = arith.constant 0 : i32
    %c0_i32_1 = arith.constant 0 : i32
    return %c0_i32, %c0_i32_0 : i32, i32
  }
  func.func @transform_2(%arg0: i32, %arg1: i32) -> (i32, i32) {
    %c0_i32 = arith.constant 0 : i32
    %c0_i32_0 = arith.constant 0 : i32
    %c0_i32_1 = arith.constant 0 : i32
    return %c0_i32, %c0_i32_0 : i32, i32
  }
  func.func @transform_3(%arg0: i32, %arg1: i32) -> (i32, i32) {
    %c0_i32 = arith.constant 0 : i32
    %c0_i32_0 = arith.constant 0 : i32
    %c0_i32_1 = arith.constant 0 : i32
    return %c0_i32, %c0_i32_0 : i32, i32
  }
  func.func @transform_4(%arg0: i32, %arg1: i32) -> (i32, i32) {
    %c0_i32 = arith.constant 0 : i32
    %c0_i32_0 = arith.constant 0 : i32
    %c0_i32_1 = arith.constant 0 : i32
    return %c0_i32, %c0_i32_0 : i32, i32
  }
  func.func @transform_5(%arg0: i32, %arg1: i32) -> (i32, i32) {
    %c0_i32 = arith.constant 0 : i32
    %c0_i32_0 = arith.constant 0 : i32
    %c0_i32_1 = arith.constant 0 : i32
    return %c0_i32, %c0_i32_0 : i32, i32
  }
  func.func @transform_6(%arg0: i32, %arg1: i32) -> (i32, i32) {
    %c0_i32 = arith.constant 0 : i32
    %c0_i32_0 = arith.constant 0 : i32
    %c0_i32_1 = arith.constant 0 : i32
    return %c0_i32, %c0_i32_0 : i32, i32
  }
  func.func @transform_7(%arg0: i32, %arg1: i32) -> (i32, i32) {
    %c0_i32 = arith.constant 0 : i32
    %c0_i32_0 = arith.constant 0 : i32
    %c0_i32_1 = arith.constant 0 : i32
    return %c0_i32, %c0_i32_0 : i32, i32
  }
  func.func @transform_8(%arg0: i32, %arg1: i32) -> (i32, i32) {
    %c0_i32 = arith.constant 0 : i32
    %c0_i32_0 = arith.constant 0 : i32
    %c0_i32_1 = arith.constant 0 : i32
    return %c0_i32, %c0_i32_0 : i32, i32
  }
  func.func @transform_9(%arg0: i32, %arg1: i32) -> (i32, i32, i32) {
    %c0_i32 = arith.constant 0 : i32
    %c0_i32_0 = arith.constant 0 : i32
    return %arg0, %arg1, %c0_i32 : i32, i32, i32
  }
}

</mosaic_0001>

<llo_original>
// kernel: tpu_custom_call.1
$region0: #{tpu_custom_call.1}
  #allocation0 [shape = 'u32[]', space=smem, size = 0x4, offset = 0x4, fixed_abs, tag = 'smem constant byte address 0x4 - core index']
  #allocation1 [shape = 'u32[72,128]{1,0:T(1,128)}', space=vmem, size = 0x9000, scoped, tag = 'internal scratch']
  #allocation2 [shape = 'f32[8,32]{1,0:T(8,128)}', space=vmem, size = 0x1000, scoped, tag = 'scratch operand']
  #allocation3 [shape = 'f32[8,32]{1,0:T(8,128)}', space=vmem, size = 0x1000, scoped, tag = 'scratch operand']
  #allocation4 [shape = 'f32[8,32]{1,0:T(8,128)}', space=vmem, size = 0x1000, scoped, tag = 'scratch operand']
  #allocation5 [shape = 'f32[1,32]{1,0:T(1,128)}', space=vmem, size = 0x200, scoped, tag = 'scratch operand']
  #allocation6 [shape = 'f32[8,8,8]{2,1,0:T(8,128)}', space=vmem, size = 0x8000, scoped, tag = 'scratch operand']
  #allocation7 [shape = 'f32[8,8,8]{2,1,0:T(8,128)}', space=vmem, size = 0x8000, scoped, tag = 'scratch operand']
  %s0 = inlined_call_operand.hbm [shape: f32[2,8,32], index: 0, kind: input, shape index: {}]
  %s1 = inlined_call_operand.hbm [shape: f32[32,32], index: 1, kind: input, shape index: {}]
  %s2 = inlined_call_operand.hbm [shape: f32[32,32], index: 2, kind: input, shape index: {}]
  %s3 = inlined_call_operand.hbm [shape: f32[32,32], index: 3, kind: input, shape index: {}]
  %s4 = inlined_call_operand.hbm [shape: f32[8,8], index: 4, kind: input, shape index: {}]
  %s5 = inlined_call_operand.hbm [shape: f32[8,8], index: 5, kind: input, shape index: {}]
  %s6 = inlined_call_operand.vmem [shape: f32[1,32], index: 6, kind: input, shape index: {}]
  %s7 = inlined_call_operand.hbm [shape: f32[32,32], index: 7, kind: input, shape index: {}]
  %s8 = inlined_call_operand.vmem [shape: f32[1,32], index: 8, kind: input, shape index: {}]
  %s9 = inlined_call_operand.hbm [shape: f32[2,8,32], index: 9, kind: output, shape index: {}]
  %s10 = sld [smem:[#allocation0]]
  $region101: #{tpu_custom_call.1} parent=0
    _
  %s12 = ssub.s32 1, %s10
  %s13 = scalar_select 0, %s12, %s10
  $region1: #{tpu_custom_call.1} parent=0
    #allocation8 [shape = 'u8[8192]{0}', space=vmem, size = 0x2000, scoped, tag = 'input window, operand 0']
    #allocation9 [shape = 's32[2]{0}', space=sflag, size = 0x8, scoped, tag = 'scoped memory for tpu_custom_call.1']
    #allocation10 [shape = 's32[2]{0}', space=sflag, size = 0x8, scoped, tag = 'scoped memory for tpu_custom_call.1']
    #allocation11 [shape = 's32[2]{0}', space=sflag, size = 0x8, scoped, tag = 'scoped memory for tpu_custom_call.1']
    #allocation12 [shape = 'u8[16384]{0}', space=vmem, size = 0x4000, scoped, tag = 'input window, operand 1, single buffered']
    #allocation13 [shape = 's32[1]{0}', space=sflag, size = 0x4, scoped, tag = 'scoped memory for tpu_custom_call.1']
    #allocation14 [shape = 'u8[16384]{0}', space=vmem, size = 0x4000, scoped, tag = 'input window, operand 2, single buffered']
    #allocation15 [shape = 'u8[16384]{0}', space=vmem, size = 0x4000, scoped, tag = 'input window, operand 3, single buffered']
    #allocation16 [shape = 's32[1]{0}', space=sflag, size = 0x4, scoped, tag = 'scoped memory for tpu_custom_call.1']
    #allocation17 [shape = 'u8[4096]{0}', space=smem, size = 0x1000, scoped, tag = 'input window, operand 4, single buffered']
    #allocation18 [shape = 'u8[4096]{0}', space=smem, size = 0x1000, scoped, tag = 'input window, operand 5, single buffered']
    #allocation19 [shape = 's32[1]{0}', space=sflag, size = 0x4, scoped, tag = 'scoped memory for tpu_custom_call.1']
    #allocation20 [shape = 'u8[16384]{0}', space=vmem, size = 0x4000, scoped, tag = 'input window, operand 7, single buffered']
    #allocation21 [shape = 'u8[8192]{0}', space=vmem, size = 0x2000, scoped, tag = 'output window, operand 0']
    %14 = vsyncpa [#allocation9], 0
    %s15 = scalar_lea.sflag [#allocation9], 1
    %16 = vsyncpa %s15, 0
    %17 = vsyncpa [#allocation13], 0
    %18 = vsyncpa [#allocation16], 0
    %19 = vsyncpa [#allocation11], 0
    %20 = vsyncpa [#allocation19], 0
    %21 = vsyncpa [#allocation10], 0
    %s22 = scalar_lea.sflag [#allocation10], 1
    %23 = vsyncpa %s22, 0
    loop: start=0, step=1, limit=4
    $region2: #{tpu_custom_call.1} parent=1 // loop_pre_header
      _
    $region3: #{tpu_custom_call.1} parent=1 // loop_header
      %s25 = sphi 0, %s29
      %p26 = scmp.ge.s32.totalorder %s25, 4
      %s32 = sphi 0, %s44
      %s33 = sphi 0, %s40
      %s34 = sphi 0, %s32
      %s35 = sphi 0, %s33
      %s36 = sphi 0, %s34
      %s37 = sphi 0, %s35
      %s47 = sphi 0, %s49
      %s50 = sphi 0, %s47
      %s51 = sphi 0, %s50
      %s67 = sphi 0, %s51
      %s71 = sphi 0, %s71
      %s73 = sphi 0, %s71
      %s74 = sphi 0, %s73
      %s88 = sphi 0, %s74
      %s92 = sphi 0, %s92
      %s94 = sphi 0, %s92
      %s95 = sphi 0, %s94
      %s109 = sphi 0, %s95
      %s113 = sphi 0, %s113
      %s115 = sphi 0, %s113
      %s116 = sphi 0, %s115
      %s130 = sphi 0, %s116
      %s134 = sphi 0, %s134
      %s136 = sphi 0, %s134
      %s137 = sphi 0, %s136
      %s151 = sphi 0, %s137
      %s155 = sphi 0, %s155
      %s157 = sphi 0, %s155
      %s158 = sphi 0, %s157
      %s172 = sphi 0, %s158
      %s176 = sphi 0, %s176
      %s178 = sphi 0, %s176
      %s179 = sphi 0, %s178
      %s193 = sphi 0, %s179
      %s197 = sphi 0, %s197
      %s199 = sphi 0, %s197
      %s200 = sphi 0, %s199
      %s214 = sphi 0, %s200
      %s218 = sphi 0, %s218
      %s220 = sphi 0, %s218
      %s221 = sphi 0, %s220
      %s235 = sphi 0, %s221
      %s243 = sphi 0, %s245
      %s246 = sphi 0, %s243
      %s247 = sphi 0, %s246
      %s263 = sphi 0, %s247
    $region4: #{tpu_custom_call.1} parent=1 // loop_header_branch
      %28 = sbr.rel (%p26) target = $region8
    $region5: #{tpu_custom_call.1} parent=1 // loop_body
      %s30 = ssub.s32 %s25, 1
      %s31 = ssub.s32 %s25, 2
      %s38 = sadd.s32 1, %s33
      %p39 = scmp.ge.s32.totalorder %s38, 1
      %s40 = scalar_select %p39, 0, %s38
      %s41 = sadd.s32 1, %s32
      %s42 = scalar_select %p39, %s41, %s32
      %p43 = scmp.ge.s32.totalorder %s42, 2
      %s44 = scalar_select %p43, 0, %s42
      %s45 = ssub.s32 %s32, %s44
      %p46 = scmp.eq.s32.totalorder %s45, 0
      %s48 = sadd.s32 %s47, 1
      %s49 = scalar_select %p46, %s47, %s48
      %p52 = pneg %p46
      %p53 = scmp.eq.s32.totalorder %s25, 1
      %p54 = por %p52, %p53
      %p55 = scmp.ne.s32.totalorder %s47, %s50
      %p56 = scmp.eq.s32.totalorder %s25, 0
      %p57 = por %p55, %p56
      %p58 = scmp.ne.s32.totalorder %s47, %s50
      %p59 = scmp.eq.s32.totalorder %s30, 1
      %p60 = por %p58, %p59
      %p61 = scmp.ne.s32.totalorder %s50, %s51
      %p62 = scmp.eq.s32.totalorder %s30, 0
      %p63 = por %p61, %p62
      %p64 = scmp.ne.s32.totalorder %s50, %s51
      %p65 = scmp.eq.s32.totalorder %s31, 1
      %p66 = por %p64, %p65
      %p68 = scmp.ne.s32.totalorder %s51, %s67
      %p69 = scmp.eq.s32.totalorder %s31, 0
      %p70 = por %p68, %p69
      %s72 = sadd.s32 %s71, 1
      %p75 = scmp.eq.s32.totalorder %s25, 1
      %p76 = scmp.ne.s32.totalorder %s71, %s73
      %p77 = scmp.eq.s32.totalorder %s25, 0
      %p78 = por %p76, %p77
      %p79 = scmp.ne.s32.totalorder %s71, %s73
      %p80 = scmp.eq.s32.totalorder %s30, 1
      %p81 = por %p79, %p80
      %p82 = scmp.ne.s32.totalorder %s73, %s74
      %p83 = scmp.eq.s32.totalorder %s30, 0
      %p84 = por %p82, %p83
      %p85 = scmp.ne.s32.totalorder %s73, %s74
      %p86 = scmp.eq.s32.totalorder %s31, 1
      %p87 = por %p85, %p86
      %p89 = scmp.ne.s32.totalorder %s74, %s88
      %p90 = scmp.eq.s32.totalorder %s31, 0
      %p91 = por %p89, %p90
      %s93 = sadd.s32 %s92, 1
      %p96 = scmp.eq.s32.totalorder %s25, 1
      %p97 = scmp.ne.s32.totalorder %s92, %s94
      %p98 = scmp.eq.s32.totalorder %s25, 0
      %p99 = por %p97, %p98
      %p100 = scmp.ne.s32.totalorder %s92, %s94
      %p101 = scmp.eq.s32.totalorder %s30, 1
      %p102 = por %p100, %p101
      %p103 = scmp.ne.s32.totalorder %s94, %s95
      %p104 = scmp.eq.s32.totalorder %s30, 0
      %p105 = por %p103, %p104
      %p106 = scmp.ne.s32.totalorder %s94, %s95
      %p107 = scmp.eq.s32.totalorder %s31, 1
      %p108 = por %p106, %p107
      %p110 = scmp.ne.s32.totalorder %s95, %s109
      %p111 = scmp.eq.s32.totalorder %s31, 0
      %p112 = por %p110, %p111
      %s114 = sadd.s32 %s113, 1
      %p117 = scmp.eq.s32.totalorder %s25, 1
      %p118 = scmp.ne.s32.totalorder %s113, %s115
      %p119 = scmp.eq.s32.totalorder %s25, 0
      %p120 = por %p118, %p119
      %p121 = scmp.ne.s32.totalorder %s113, %s115
      %p122 = scmp.eq.s32.totalorder %s30, 1
      %p123 = por %p121, %p122
      %p124 = scmp.ne.s32.totalorder %s115, %s116
      %p125 = scmp.eq.s32.totalorder %s30, 0
      %p126 = por %p124, %p125
      %p127 = scmp.ne.s32.totalorder %s115, %s116
      %p128 = scmp.eq.s32.totalorder %s31, 1
      %p129 = por %p127, %p128
      %p131 = scmp.ne.s32.totalorder %s116, %s130
      %p132 = scmp.eq.s32.totalorder %s31, 0
      %p133 = por %p131, %p132
      %s135 = sadd.s32 %s134, 1
      %p138 = scmp.eq.s32.totalorder %s25, 1
      %p139 = scmp.ne.s32.totalorder %s134, %s136
      %p140 = scmp.eq.s32.totalorder %s25, 0
      %p141 = por %p139, %p140
      %p142 = scmp.ne.s32.totalorder %s134, %s136
      %p143 = scmp.eq.s32.totalorder %s30, 1
      %p144 = por %p142, %p143
      %p145 = scmp.ne.s32.totalorder %s136, %s137
      %p146 = scmp.eq.s32.totalorder %s30, 0
      %p147 = por %p145, %p146
      %p148 = scmp.ne.s32.totalorder %s136, %s137
      %p149 = scmp.eq.s32.totalorder %s31, 1
      %p150 = por %p148, %p149
      %p152 = scmp.ne.s32.totalorder %s137, %s151
      %p153 = scmp.eq.s32.totalorder %s31, 0
      %p154 = por %p152, %p153
      %s156 = sadd.s32 %s155, 1
      %p159 = scmp.eq.s32.totalorder %s25, 1
      %p160 = scmp.ne.s32.totalorder %s155, %s157
      %p161 = scmp.eq.s32.totalorder %s25, 0
      %p162 = por %p160, %p161
      %p163 = scmp.ne.s32.totalorder %s155, %s157
      %p164 = scmp.eq.s32.totalorder %s30, 1
      %p165 = por %p163, %p164
      %p166 = scmp.ne.s32.totalorder %s157, %s158
      %p167 = scmp.eq.s32.totalorder %s30, 0
      %p168 = por %p166, %p167
      %p169 = scmp.ne.s32.totalorder %s157, %s158
      %p170 = scmp.eq.s32.totalorder %s31, 1
      %p171 = por %p169, %p170
      %p173 = scmp.ne.s32.totalorder %s158, %s172
      %p174 = scmp.eq.s32.totalorder %s31, 0
      %p175 = por %p173, %p174
      %s177 = sadd.s32 %s176, 1
      %p180 = scmp.eq.s32.totalorder %s25, 1
      %p181 = scmp.ne.s32.totalorder %s176, %s178
      %p182 = scmp.eq.s32.totalorder %s25, 0
      %p183 = por %p181, %p182
      %p184 = scmp.ne.s32.totalorder %s176, %s178
      %p185 = scmp.eq.s32.totalorder %s30, 1
      %p186 = por %p184, %p185
      %p187 = scmp.ne.s32.totalorder %s178, %s179
      %p188 = scmp.eq.s32.totalorder %s30, 0
      %p189 = por %p187, %p188
      %p190 = scmp.ne.s32.totalorder %s178, %s179
      %p191 = scmp.eq.s32.totalorder %s31, 1
      %p192 = por %p190, %p191
      %p194 = scmp.ne.s32.totalorder %s179, %s193
      %p195 = scmp.eq.s32.totalorder %s31, 0
      %p196 = por %p194, %p195
      %s198 = sadd.s32 %s197, 1
      %p201 = scmp.eq.s32.totalorder %s25, 1
      %p202 = scmp.ne.s32.totalorder %s197, %s199
      %p203 = scmp.eq.s32.totalorder %s25, 0
      %p204 = por %p202, %p203
      %p205 = scmp.ne.s32.totalorder %s197, %s199
      %p206 = scmp.eq.s32.totalorder %s30, 1
      %p207 = por %p205, %p206
      %p208 = scmp.ne.s32.totalorder %s199, %s200
      %p209 = scmp.eq.s32.totalorder %s30, 0
      %p210 = por %p208, %p209
      %p211 = scmp.ne.s32.totalorder %s199, %s200
      %p212 = scmp.eq.s32.totalorder %s31, 1
      %p213 = por %p211, %p212
      %p215 = scmp.ne.s32.totalorder %s200, %s214
      %p216 = scmp.eq.s32.totalorder %s31, 0
      %p217 = por %p215, %p216
      %s219 = sadd.s32 %s218, 1
      %p222 = scmp.eq.s32.totalorder %s25, 1
      %p223 = scmp.ne.s32.totalorder %s218, %s220
      %p224 = scmp.eq.s32.totalorder %s25, 0
      %p225 = por %p223, %p224
      %p226 = scmp.ne.s32.totalorder %s218, %s220
      %p227 = scmp.eq.s32.totalorder %s30, 1
      %p228 = por %p226, %p227
      %p229 = scmp.ne.s32.totalorder %s220, %s221
      %p230 = scmp.eq.s32.totalorder %s30, 0
      %p231 = por %p229, %p230
      %p232 = scmp.ne.s32.totalorder %s220, %s221
      %p233 = scmp.eq.s32.totalorder %s31, 1
      %p234 = por %p232, %p233
      %p236 = scmp.ne.s32.totalorder %s221, %s235
      %p237 = scmp.eq.s32.totalorder %s31, 0
      %p238 = por %p236, %p237
      %s239 = ssub.s32 %s32, %s44
      %s240 = ssub.s32 %s33, %s40
      %s241 = sor.u32 %s239, %s240
      %p242 = scmp.eq.s32.totalorder %s241, 0
      %s244 = sadd.s32 %s243, 1
      %s245 = scalar_select %p242, %s243, %s244
      %p248 = pneg %p242
      %p249 = scmp.eq.s32.totalorder %s25, 1
      %p250 = por %p248, %p249
      %p251 = scmp.ne.s32.totalorder %s243, %s246
      %p252 = scmp.eq.s32.totalorder %s25, 0
      %p253 = por %p251, %p252
      %p254 = scmp.ne.s32.totalorder %s243, %s246
      %p255 = scmp.eq.s32.totalorder %s30, 1
      %p256 = por %p254, %p255
      %p257 = scmp.ne.s32.totalorder %s246, %s247
      %p258 = scmp.eq.s32.totalorder %s30, 0
      %p259 = por %p257, %p258
      %p260 = scmp.ne.s32.totalorder %s246, %s247
      %p261 = scmp.eq.s32.totalorder %s31, 1
      %p262 = por %p260, %p261
      %p264 = scmp.ne.s32.totalorder %s247, %s263
      %p265 = scmp.eq.s32.totalorder %s31, 0
      %p266 = por %p264, %p265
      %p267 = scmp.le.s32.totalorder 1, %s25
      %p268 = scmp.lt.s32.totalorder %s25, 3
      %p269 = pnand %p267, %p268
      %p270 = pneg %p269
      // Predicated region
      $region9: #{tpu_custom_call.1} parent=5 // pred_check
        _
      $region10: #{tpu_custom_call.1} parent=5 // pred_check_branch
        %272 = sbr.rel (%p269) target = $region12
      $region11: #{tpu_custom_call.1} parent=5 // pred_region
        %s273 = ssub.s32 %s25, 1
        // Predicated region
        $region13: #{tpu_custom_call.1} parent=11 // pred_check
          %p274 = pneg %p84
        $region14: #{tpu_custom_call.1} parent=11 // pred_check_branch
          %276 = sbr.rel (%p274) target = $region16
        $region15: #{tpu_custom_call.1} parent=11 // pred_region
          %278 = vsyncadd [#allocation13], 0
          %s279 = sshll.u32 %s1, 4
          %s280 = int_to_ptr.hbm [resolvable:$true] %s279
          %s281 = sshll.u32 [#allocation12], 4
          %s282 = int_to_ptr.vmem [resolvable:$true] %s281
          %287 = dma.hbm_to_vmem [thread:$0]  %s280, 512, %s282, [#allocation13], 128, 128, 8
        $region16: #{tpu_custom_call.1} parent=11 // pred_fallthru
          _
        // Predicated region
        $region17: #{tpu_custom_call.1} parent=11 // pred_check
          %p288 = pneg %p105
        $region18: #{tpu_custom_call.1} parent=11 // pred_check_branch
          %290 = sbr.rel (%p288) target = $region20
        $region19: #{tpu_custom_call.1} parent=11 // pred_region
          %292 = vsyncadd [#allocation13], 0
          %s293 = sshll.u32 %s2, 4
          %s294 = int_to_ptr.hbm [resolvable:$true] %s293
          %s295 = sshll.u32 [#allocation14], 4
          %s296 = int_to_ptr.vmem [resolvable:$true] %s295
          %301 = dma.hbm_to_vmem [thread:$0]  %s294, 512, %s296, [#allocation13], 128, 128, 8
        $region20: #{tpu_custom_call.1} parent=11 // pred_fallthru
          _
        // Predicated region
        $region21: #{tpu_custom_call.1} parent=11 // pred_check
          %p302 = pneg %p126
        $region22: #{tpu_custom_call.1} parent=11 // pred_check_branch
          %304 = sbr.rel (%p302) target = $region24
        $region23: #{tpu_custom_call.1} parent=11 // pred_region
          %306 = vsyncadd [#allocation16], 0
          %s307 = sshll.u32 %s3, 4
          %s308 = int_to_ptr.hbm [resolvable:$true] %s307
          %s309 = sshll.u32 [#allocation15], 4
          %s310 = int_to_ptr.vmem [resolvable:$true] %s309
          %315 = dma.hbm_to_vmem [thread:$0]  %s308, 512, %s310, [#allocation16], 128, 128, 8
        $region24: #{tpu_custom_call.1} parent=11 // pred_fallthru
          _
        // Predicated region
        $region25: #{tpu_custom_call.1} parent=11 // pred_check
          %p316 = pneg %p147
        $region26: #{tpu_custom_call.1} parent=11 // pred_check_branch
          %318 = sbr.rel (%p316) target = $region28
        $region27: #{tpu_custom_call.1} parent=11 // pred_region
          %320 = vsyncadd [#allocation11], 0
          %s322 = sshll.u32 %s4, 4
          %s323 = int_to_ptr.hbm [resolvable:$true] %s322
          %325 = dma.hbm_to_smem %s323, 128, [#allocation17], [#allocation11]
        $region28: #{tpu_custom_call.1} parent=11 // pred_fallthru
          _
        // Predicated region
        $region29: #{tpu_custom_call.1} parent=11 // pred_check
          %p326 = pneg %p168
        $region30: #{tpu_custom_call.1} parent=11 // pred_check_branch
          %328 = sbr.rel (%p326) target = $region32
        $region31: #{tpu_custom_call.1} parent=11 // pred_region
          %330 = vsyncadd [#allocation19], 0
          %s332 = sshll.u32 %s5, 4
          %s333 = int_to_ptr.hbm [resolvable:$true] %s332
          %335 = dma.hbm_to_smem %s333, 128, [#allocation18], [#allocation19]
        $region32: #{tpu_custom_call.1} parent=11 // pred_fallthru
          _
        // Predicated region
        $region33: #{tpu_custom_call.1} parent=11 // pred_check
          %p336 = pneg %p189
        $region34: #{tpu_custom_call.1} parent=11 // pred_check_branch
          %338 = sbr.rel (%p336) target = $region36
        $region35: #{tpu_custom_call.1} parent=11 // pred_region
          _
        $region36: #{tpu_custom_call.1} parent=11 // pred_fallthru
          _
        // Predicated region
        $region37: #{tpu_custom_call.1} parent=11 // pred_check
          %p339 = pneg %p210
        $region38: #{tpu_custom_call.1} parent=11 // pred_check_branch
          %341 = sbr.rel (%p339) target = $region40
        $region39: #{tpu_custom_call.1} parent=11 // pred_region
          %343 = vsyncadd [#allocation16], 0
          %s344 = sshll.u32 %s7, 4
          %s345 = int_to_ptr.hbm [resolvable:$true] %s344
          %s346 = sshll.u32 [#allocation20], 4
          %s347 = int_to_ptr.vmem [resolvable:$true] %s346
          %352 = dma.hbm_to_vmem [thread:$0]  %s345, 512, %s347, [#allocation16], 128, 128, 8
        $region40: #{tpu_custom_call.1} parent=11 // pred_fallthru
          _
        // Predicated region
        $region41: #{tpu_custom_call.1} parent=11 // pred_check
          %p353 = pneg %p231
        $region42: #{tpu_custom_call.1} parent=11 // pred_check_branch
          %355 = sbr.rel (%p353) target = $region44
        $region43: #{tpu_custom_call.1} parent=11 // pred_region
          _
        $region44: #{tpu_custom_call.1} parent=11 // pred_fallthru
          _
      $region12: #{tpu_custom_call.1} parent=5 // pred_fallthru
        _
      %p356 = scmp.lt.s32.totalorder %s25, 2
      // Predicated region
      $region45: #{tpu_custom_call.1} parent=5 // pred_check
        %p357 = pneg %p356
      $region46: #{tpu_custom_call.1} parent=5 // pred_check_branch
        %359 = sbr.rel (%p357) target = $region48
      $region47: #{tpu_custom_call.1} parent=5 // pred_region
        // Predicated region
        $region49: #{tpu_custom_call.1} parent=47 // pred_check
          %p360 = pneg %p57
        $region50: #{tpu_custom_call.1} parent=47 // pred_check_branch
          %362 = sbr.rel (%p360) target = $region52
        $region51: #{tpu_custom_call.1} parent=47 // pred_region
          %s363 = sand.u32 %s47, 1
          %s364 = scalar_lea.sflag [#allocation9], %s363
          %s365 = sand.u32 %s47, 1
          %s366 = smul.addr %s365, 8
          %s367 = scalar_lea.vmem [#allocation8], %s366
          %369 = vsyncadd %s364, 0
          %s370 = smul.addr %s32, 8
          %s371 = scalar_lea.hbm %s0, %s370
          %s373 = sshll.u32 %s371, 4
          %s374 = int_to_ptr.hbm [resolvable:$true] %s373
          %s375 = sshll.u32 %s367, 4
          %s376 = int_to_ptr.vmem [resolvable:$true] %s375
          %378 = dma.hbm_to_vmem [thread:$0]  %s374, 128, %s376, %s364
        $region52: #{tpu_custom_call.1} parent=47 // pred_fallthru
          _
      $region48: #{tpu_custom_call.1} parent=5 // pred_fallthru
        _
      %p379 = scmp.le.s32.totalorder 1, %s25
      %p380 = scmp.lt.s32.totalorder %s25, 3
      %p381 = pnand %p379, %p380
      %p382 = pneg %p381
      // Predicated region
      $region53: #{tpu_custom_call.1} parent=5 // pred_check
        _
      $region54: #{tpu_custom_call.1} parent=5 // pred_check_branch
        %384 = sbr.rel (%p381) target = $region56
      $region55: #{tpu_custom_call.1} parent=5 // pred_region
        %s385 = ssub.s32 %s25, 1
        %s386 = sand.u32 %s50, 1
        %s387 = scalar_lea.sflag [#allocation9], %s386
        %s388 = sand.u32 %s50, 1
        %s389 = smul.addr %s388, 8
        %s390 = scalar_lea.vmem [#allocation8], %s389
        // Predicated region
        $region57: #{tpu_custom_call.1} parent=55 // pred_check
          %p391 = pneg %p63
        $region58: #{tpu_custom_call.1} parent=55 // pred_check_branch
          %393 = sbr.rel (%p391) target = $region60
        $region59: #{tpu_custom_call.1} parent=55 // pred_region
          %395 = dma.done %s387, 128
        $region60: #{tpu_custom_call.1} parent=55 // pred_fallthru
          _
        // Predicated region
        $region61: #{tpu_custom_call.1} parent=55 // pred_check
          %p396 = pneg %p84
        $region62: #{tpu_custom_call.1} parent=55 // pred_check_branch
          %398 = sbr.rel (%p396) target = $region64
        $region63: #{tpu_custom_call.1} parent=55 // pred_region
          %400 = dma.done [#allocation13], 512
        $region64: #{tpu_custom_call.1} parent=55 // pred_fallthru
          _
        // Predicated region
        $region65: #{tpu_custom_call.1} parent=55 // pred_check
          %p401 = pneg %p105
        $region66: #{tpu_custom_call.1} parent=55 // pred_check_branch
          %403 = sbr.rel (%p401) target = $region68
        $region67: #{tpu_custom_call.1} parent=55 // pred_region
          %405 = dma.done [#allocation13], 512
        $region68: #{tpu_custom_call.1} parent=55 // pred_fallthru
          _
        // Predicated region
        $region69: #{tpu_custom_call.1} parent=55 // pred_check
          %p406 = pneg %p126
        $region70: #{tpu_custom_call.1} parent=55 // pred_check_branch
          %408 = sbr.rel (%p406) target = $region72
        $region71: #{tpu_custom_call.1} parent=55 // pred_region
          %410 = dma.done [#allocation16], 512
        $region72: #{tpu_custom_call.1} parent=55 // pred_fallthru
          _
        // Predicated region
        $region73: #{tpu_custom_call.1} parent=55 // pred_check
          %p411 = pneg %p147
        $region74: #{tpu_custom_call.1} parent=55 // pred_check_branch
          %413 = sbr.rel (%p411) target = $region76
        $region75: #{tpu_custom_call.1} parent=55 // pred_region
          %415 = dma.done [#allocation11], 128
        $region76: #{tpu_custom_call.1} parent=55 // pred_fallthru
          _
        // Predicated region
        $region77: #{tpu_custom_call.1} parent=55 // pred_check
          %p416 = pneg %p168
        $region78: #{tpu_custom_call.1} parent=55 // pred_check_branch
          %418 = sbr.rel (%p416) target = $region80
        $region79: #{tpu_custom_call.1} parent=55 // pred_region
          %420 = dma.done [#allocation19], 128
        $region80: #{tpu_custom_call.1} parent=55 // pred_fallthru
          _
        // Predicated region
        $region81: #{tpu_custom_call.1} parent=55 // pred_check
          %p421 = pneg %p210
        $region82: #{tpu_custom_call.1} parent=55 // pred_check_branch
          %423 = sbr.rel (%p421) target = $region84
        $region83: #{tpu_custom_call.1} parent=55 // pred_region
          %425 = dma.done [#allocation16], 512
        $region84: #{tpu_custom_call.1} parent=55 // pred_fallthru
          _
        %426 = sfence
        %s427 = sand.u32 %s50, 1
        %s428 = scalar_lea.sflag [#allocation9], %s427
        %s429 = sand.u32 %s50, 1
        %s430 = smul.addr %s429, 8
        %s431 = scalar_lea.vmem [#allocation8], %s430
        %p432 = pneg %p63
        %p433 = pneg %p60
        %p434 = pneg %p84
        %p435 = pneg %p81
        %p436 = pneg %p105
        %p437 = pneg %p102
        %p438 = pneg %p126
        %p439 = pneg %p123
        %p440 = pneg %p147
        %p441 = pneg %p144
        %p442 = pneg %p168
        %p443 = pneg %p165
        %p444 = pneg %p189
        %p445 = pneg %p186
        %p446 = pneg %p210
        %p447 = pneg %p207
        %p448 = pneg %p231
        %p449 = pneg %p228
        %p450 = pneg %p259
        %p451 = pneg %p256
        %s452 = sand.u32 %s246, 1
        %s453 = scalar_lea.sflag [#allocation10], %s452
        %s454 = sand.u32 %s246, 1
        %s455 = smul.addr %s454, 8
        %s456 = scalar_lea.vmem [#allocation21], %s455
        %p457 = scmp.eq.s32.totalorder %s35, 0
        // Predicated region
        $region85: #{tpu_custom_call.1} parent=55 // pred_check
          %p458 = pneg %p457
        $region86: #{tpu_custom_call.1} parent=55 // pred_check_branch
          %460 = sbr.rel (%p458) target = $region88
        $region87: #{tpu_custom_call.1} parent=55 // pred_region
          %v461 = vld [vmem:[%s390] sm:$0xff]
          %v462 = vld [vmem:[#allocation14] sm:$0xff]
          %v463 = vld [vmem:[#allocation14 + $0x8] sm:$0xff]
          %v464 = vld [vmem:[#allocation14 + $0x10] sm:$0xff]
          %v465 = vld [vmem:[#allocation14 + $0x18] sm:$0xff]
          %vm466 = vcmask 261120
          %v468 = vsel %vm466, %v461, 0
          %470 = vmatpush.msra.mxu0 0.0
          %471 = vmatpush.msra.mxu0 0.0
          %472 = vmatpush.msra.mxu0 0.0
          %473 = vmatpush.msra.mxu0 0.0
          %474 = vmatpush.msra.mxu0 0.0
          %475 = vmatpush.msra.mxu0 0.0
          %476 = vmatpush.msra.mxu0 0.0
          %477 = vmatpush.msra.mxu0 0.0
          %478 = vmatpush.msra.mxu0 0.0
          %479 = vmatpush.msra.mxu0 0.0
          %480 = vmatpush.msra.mxu0 0.0
          %481 = vmatpush.msra.mxu0 0.0
          %482 = vmatpush.msra.mxu0 %v465
          %483 = vmatpush.msra.mxu0 %v464
          %484 = vmatpush.msra.mxu0 %v463
          %485 = vmatpush.msra.mxu0 %v462
          %486 = vmatmul.f32.gmra.mxu0 %v468
          %v487 = vpop.f32.mrf.mxu0
          %v488 = vadd.f32 0.0, %v487
          %489 = vdwg.mxu0
          %v490 = vld [vmem:[#allocation15] sm:$0xff]
          %v491 = vld [vmem:[#allocation15 + $0x8] sm:$0xff]
          %v492 = vld [vmem:[#allocation15 + $0x10] sm:$0xff]
          %v493 = vld [vmem:[#allocation15 + $0x18] sm:$0xff]
          %494 = vmatpush.msra.mxu0 0.0
          %495 = vmatpush.msra.mxu0 0.0
          %496 = vmatpush.msra.mxu0 0.0
          %497 = vmatpush.msra.mxu0 0.0
          %498 = vmatpush.msra.mxu0 0.0
          %499 = vmatpush.msra.mxu0 0.0
          %500 = vmatpush.msra.mxu0 0.0
          %501 = vmatpush.msra.mxu0 0.0
          %502 = vmatpush.msra.mxu0 0.0
          %503 = vmatpush.msra.mxu0 0.0
          %504 = vmatpush.msra.mxu0 0.0
          %505 = vmatpush.msra.mxu0 0.0
          %506 = vmatpush.msra.mxu0 %v493
          %507 = vmatpush.msra.mxu0 %v492
          %508 = vmatpush.msra.mxu0 %v491
          %509 = vmatpush.msra.mxu0 %v490
          %510 = vmatmul.f32.gmra.mxu0 %v468
          %v511 = vpop.f32.mrf.mxu0
          %v512 = vadd.f32 0.0, %v511
          %513 = vdwg.mxu0
          %514 = vst.msk [vmem:[#allocation3] sm:$0xff] %vm466, %v488
          %515 = vst.msk [vmem:[#allocation4] sm:$0xff] %vm466, %v512
          %v516 = vsel %vm466, %v512, 0.0
          %v517 = vrot.slane %v516, 4
          %v518 = vadd.f32 %v516, %v517
          %v519 = vrot.slane %v518, 2
          %v520 = vadd.f32 %v518, %v519
          %v521 = vrot.slane %v520, 1
          %v522 = vadd.f32 %v520, %v521
          %vm523 = vcmask 253952
          %524 = vst.msk [vmem:[#allocation5] sm:$0x1] %vm523, %v522
        $region88: #{tpu_custom_call.1} parent=55 // pred_fallthru
          _
        %s525 = smul.u32 %s35, 8
        %s526 = scalar_lea.vmem %s390, %s525 [#allocation8]
        %v527 = vld [vmem:[%s526] sm:$0xff]
        %v528 = vld [vmem:[#allocation12] sm:$0xff]
        %v529 = vld [vmem:[#allocation12 + $0x8] sm:$0xff]
        %v530 = vld [vmem:[#allocation12 + $0x10] sm:$0xff]
        %v531 = vld [vmem:[#allocation12 + $0x18] sm:$0xff]
        %vm532 = vcmask 261120
        %v534 = vsel %vm532, %v527, 0
        %536 = vmatpush.msra.mxu0 0.0
        %537 = vmatpush.msra.mxu0 0.0
        %538 = vmatpush.msra.mxu0 0.0
        %539 = vmatpush.msra.mxu0 0.0
        %540 = vmatpush.msra.mxu0 0.0
        %541 = vmatpush.msra.mxu0 0.0
        %542 = vmatpush.msra.mxu0 0.0
        %543 = vmatpush.msra.mxu0 0.0
        %544 = vmatpush.msra.mxu0 0.0
        %545 = vmatpush.msra.mxu0 0.0
        %546 = vmatpush.msra.mxu0 0.0
        %547 = vmatpush.msra.mxu0 0.0
        %548 = vmatpush.msra.mxu0 %v531
        %549 = vmatpush.msra.mxu0 %v530
        %550 = vmatpush.msra.mxu0 %v529
        %551 = vmatpush.msra.mxu0 %v528
        %552 = vmatmul.f32.gmra.mxu0 %v534
        %v553 = vpop.f32.mrf.mxu0
        %v554 = vadd.f32 0.0, %v553
        %555 = vdwg.mxu0
        %556 = vst.msk [vmem:[#allocation2] sm:$0xff] %vm532, %v554
        %v557 = vld [vmem:[#allocation2] sm:$0xff]
        %v558 = vld [vmem:[#allocation3] sm:$0xff]
        %vm559 = vcmask 31744
        %v561 = vsel %vm559, %v557, 0
        %v564 = vsel %vm559, %v558, 0
        %566 = vmatpush.xpose.msra.mxu0 0.0
        %567 = vmatpush.xpose.msra.mxu0 0.0
        %568 = vmatpush.xpose.msra.mxu0 0.0
        %569 = vmatpush.xpose.msra.mxu0 0.0
        %570 = vmatpush.xpose.msra.mxu0 0.0
        %571 = vmatpush.xpose.msra.mxu0 0.0
        %572 = vmatpush.xpose.msra.mxu0 0.0
        %573 = vmatpush.xpose.msra.mxu0 0.0
        %574 = vmatpush.xpose.msra.mxu0 0.0
        %575 = vmatpush.xpose.msra.mxu0 0.0
        %576 = vmatpush.xpose.msra.mxu0 0.0
        %577 = vmatpush.xpose.msra.mxu0 0.0
        %578 = vmatpush.xpose.msra.mxu0 0.0
        %579 = vmatpush.xpose.msra.mxu0 0.0
        %580 = vmatpush.xpose.msra.mxu0 0.0
        %581 = vmatpush.xpose.msra.mxu0 %v564
        %582 = vmatmul.f32.gmra.mxu0 %v561
        %v583 = vpop.f32.mrf.mxu0
        %v584 = vadd.f32 0.0, %v583
        %585 = vdwg.mxu0
        %vm586 = vcmask 64512
        %587 = vst.msk [vmem:[#allocation6] sm:$0xff] %vm586, %v584
        %v588 = vld [vmem:[#allocation2] sm:$0xff]
        %v589 = vld [vmem:[#allocation3] sm:$0xff]
        %591 = vrot.lane.b32.xlu0 %v588, 124
        %v592 = vpop.permute.xlu0 %591
        %594 = vrot.lane.b32.xlu0 %v589, 124
        %v595 = vpop.permute.xlu0 %594
        %v596 = vsel %vm559, %v592, 0
        %v598 = vsel %vm559, %v595, 0
        %600 = vmatpush.xpose.msra.mxu0 0.0
        %601 = vmatpush.xpose.msra.mxu0 0.0
        %602 = vmatpush.xpose.msra.mxu0 0.0
        %603 = vmatpush.xpose.msra.mxu0 0.0
        %604 = vmatpush.xpose.msra.mxu0 0.0
        %605 = vmatpush.xpose.msra.mxu0 0.0
        %606 = vmatpush.xpose.msra.mxu0 0.0
        %607 = vmatpush.xpose.msra.mxu0 0.0
        %608 = vmatpush.xpose.msra.mxu0 0.0
        %609 = vmatpush.xpose.msra.mxu0 0.0
        %610 = vmatpush.xpose.msra.mxu0 0.0
        %611 = vmatpush.xpose.msra.mxu0 0.0
        %612 = vmatpush.xpose.msra.mxu0 0.0
        %613 = vmatpush.xpose.msra.mxu0 0.0
        %614 = vmatpush.xpose.msra.mxu0 0.0
        %615 = vmatpush.xpose.msra.mxu0 %v598
        %616 = vmatmul.f32.gmra.mxu0 %v596
        %v617 = vpop.f32.mrf.mxu0
        %v618 = vadd.f32 0.0, %v617
        %619 = vdwg.mxu0
        %s620 = scalar_lea.vmem [#allocation6], 8
        %621 = vst.msk [vmem:[%s620] sm:$0xff] %vm586, %v618
        %v622 = vld [vmem:[#allocation2] sm:$0xff]
        %v623 = vld [vmem:[#allocation3] sm:$0xff]
        %625 = vrot.lane.b32.xlu0 %v622, 120
        %v626 = vpop.permute.xlu0 %625
        %628 = vrot.lane.b32.xlu0 %v623, 120
        %v629 = vpop.permute.xlu0 %628
        %v630 = vsel %vm559, %v626, 0
        %v632 = vsel %vm559, %v629, 0
        %634 = vmatpush.xpose.msra.mxu0 0.0
        %635 = vmatpush.xpose.msra.mxu0 0.0
        %636 = vmatpush.xpose.msra.mxu0 0.0
        %637 = vmatpush.xpose.msra.mxu0 0.0
        %638 = vmatpush.xpose.msra.mxu0 0.0
        %639 = vmatpush.xpose.msra.mxu0 0.0
        %640 = vmatpush.xpose.msra.mxu0 0.0
        %641 = vmatpush.xpose.msra.mxu0 0.0
        %642 = vmatpush.xpose.msra.mxu0 0.0
        %643 = vmatpush.xpose.msra.mxu0 0.0
        %644 = vmatpush.xpose.msra.mxu0 0.0
        %645 = vmatpush.xpose.msra.mxu0 0.0
        %646 = vmatpush.xpose.msra.mxu0 0.0
        %647 = vmatpush.xpose.msra.mxu0 0.0
        %648 = vmatpush.xpose.msra.mxu0 0.0
        %649 = vmatpush.xpose.msra.mxu0 %v632
        %650 = vmatmul.f32.gmra.mxu0 %v630
        %v651 = vpop.f32.mrf.mxu0
        %v652 = vadd.f32 0.0, %v651
        %653 = vdwg.mxu0
        %s654 = scalar_lea.vmem [#allocation6], 16
        %655 = vst.msk [vmem:[%s654] sm:$0xff] %vm586, %v652
        %v656 = vld [vmem:[#allocation2] sm:$0xff]
        %v657 = vld [vmem:[#allocation3] sm:$0xff]
        %659 = vrot.lane.b32.xlu0 %v656, 116
        %v660 = vpop.permute.xlu0 %659
        %662 = vrot.lane.b32.xlu0 %v657, 116
        %v663 = vpop.permute.xlu0 %662
        %v664 = vsel %vm559, %v660, 0
        %v666 = vsel %vm559, %v663, 0
        %668 = vmatpush.xpose.msra.mxu0 0.0
        %669 = vmatpush.xpose.msra.mxu0 0.0
        %670 = vmatpush.xpose.msra.mxu0 0.0
        %671 = vmatpush.xpose.msra.mxu0 0.0
        %672 = vmatpush.xpose.msra.mxu0 0.0
        %673 = vmatpush.xpose.msra.mxu0 0.0
        %674 = vmatpush.xpose.msra.mxu0 0.0
        %675 = vmatpush.xpose.msra.mxu0 0.0
        %676 = vmatpush.xpose.msra.mxu0 0.0
        %677 = vmatpush.xpose.msra.mxu0 0.0
        %678 = vmatpush.xpose.msra.mxu0 0.0
        %679 = vmatpush.xpose.msra.mxu0 0.0
        %680 = vmatpush.xpose.msra.mxu0 0.0
        %681 = vmatpush.xpose.msra.mxu0 0.0
        %682 = vmatpush.xpose.msra.mxu0 0.0
        %683 = vmatpush.xpose.msra.mxu0 %v666
        %684 = vmatmul.f32.gmra.mxu0 %v664
        %v685 = vpop.f32.mrf.mxu0
        %v686 = vadd.f32 0.0, %v685
        %687 = vdwg.mxu0
        %s688 = scalar_lea.vmem [#allocation6], 24
        %689 = vst.msk [vmem:[%s688] sm:$0xff] %vm586, %v686
        %v690 = vld [vmem:[#allocation2] sm:$0xff]
        %v691 = vld [vmem:[#allocation3] sm:$0xff]
        %693 = vrot.lane.b32.xlu0 %v690, 112
        %v694 = vpop.permute.xlu0 %693
        %696 = vrot.lane.b32.xlu0 %v691, 112
        %v697 = vpop.permute.xlu0 %696
        %v698 = vsel %vm559, %v694, 0
        %v700 = vsel %vm559, %v697, 0
        %702 = vmatpush.xpose.msra.mxu0 0.0
        %703 = vmatpush.xpose.msra.mxu0 0.0
        %704 = vmatpush.xpose.msra.mxu0 0.0
        %705 = vmatpush.xpose.msra.mxu0 0.0
        %706 = vmatpush.xpose.msra.mxu0 0.0
        %707 = vmatpush.xpose.msra.mxu0 0.0
        %708 = vmatpush.xpose.msra.mxu0 0.0
        %709 = vmatpush.xpose.msra.mxu0 0.0
        %710 = vmatpush.xpose.msra.mxu0 0.0
        %711 = vmatpush.xpose.msra.mxu0 0.0
        %712 = vmatpush.xpose.msra.mxu0 0.0
        %713 = vmatpush.xpose.msra.mxu0 0.0
        %714 = vmatpush.xpose.msra.mxu0 0.0
        %715 = vmatpush.xpose.msra.mxu0 0.0
        %716 = vmatpush.xpose.msra.mxu0 0.0
        %717 = vmatpush.xpose.msra.mxu0 %v700
        %718 = vmatmul.f32.gmra.mxu0 %v698
        %v719 = vpop.f32.mrf.mxu0
        %v720 = vadd.f32 0.0, %v719
        %721 = vdwg.mxu0
        %s722 = scalar_lea.vmem [#allocation6], 32
        %723 = vst.msk [vmem:[%s722] sm:$0xff] %vm586, %v720
        %v724 = vld [vmem:[#allocation2] sm:$0xff]
        %v725 = vld [vmem:[#allocation3] sm:$0xff]
        %727 = vrot.lane.b32.xlu0 %v724, 108
        %v728 = vpop.permute.xlu0 %727
        %730 = vrot.lane.b32.xlu0 %v725, 108
        %v731 = vpop.permute.xlu0 %730
        %v732 = vsel %vm559, %v728, 0
        %v734 = vsel %vm559, %v731, 0
        %736 = vmatpush.xpose.msra.mxu0 0.0
        %737 = vmatpush.xpose.msra.mxu0 0.0
        %738 = vmatpush.xpose.msra.mxu0 0.0
        %739 = vmatpush.xpose.msra.mxu0 0.0
        %740 = vmatpush.xpose.msra.mxu0 0.0
        %741 = vmatpush.xpose.msra.mxu0 0.0
        %742 = vmatpush.xpose.msra.mxu0 0.0
        %743 = vmatpush.xpose.msra.mxu0 0.0
        %744 = vmatpush.xpose.msra.mxu0 0.0
        %745 = vmatpush.xpose.msra.mxu0 0.0
        %746 = vmatpush.xpose.msra.mxu0 0.0
        %747 = vmatpush.xpose.msra.mxu0 0.0
        %748 = vmatpush.xpose.msra.mxu0 0.0
        %749 = vmatpush.xpose.msra.mxu0 0.0
        %750 = vmatpush.xpose.msra.mxu0 0.0
        %751 = vmatpush.xpose.msra.mxu0 %v734
        %752 = vmatmul.f32.gmra.mxu0 %v732
        %v753 = vpop.f32.mrf.mxu0
        %v754 = vadd.f32 0.0, %v753
        %755 = vdwg.mxu0
        %s756 = scalar_lea.vmem [#allocation6], 40
        %757 = vst.msk [vmem:[%s756] sm:$0xff] %vm586, %v754
        %v758 = vld [vmem:[#allocation2] sm:$0xff]
        %v759 = vld [vmem:[#allocation3] sm:$0xff]
        %761 = vrot.lane.b32.xlu0 %v758, 104
        %v762 = vpop.permute.xlu0 %761
        %764 = vrot.lane.b32.xlu0 %v759, 104
        %v765 = vpop.permute.xlu0 %764
        %v766 = vsel %vm559, %v762, 0
        %v768 = vsel %vm559, %v765, 0
        %770 = vmatpush.xpose.msra.mxu0 0.0
        %771 = vmatpush.xpose.msra.mxu0 0.0
        %772 = vmatpush.xpose.msra.mxu0 0.0
        %773 = vmatpush.xpose.msra.mxu0 0.0
        %774 = vmatpush.xpose.msra.mxu0 0.0
        %775 = vmatpush.xpose.msra.mxu0 0.0
        %776 = vmatpush.xpose.msra.mxu0 0.0
        %777 = vmatpush.xpose.msra.mxu0 0.0
        %778 = vmatpush.xpose.msra.mxu0 0.0
        %779 = vmatpush.xpose.msra.mxu0 0.0
        %780 = vmatpush.xpose.msra.mxu0 0.0
        %781 = vmatpush.xpose.msra.mxu0 0.0
        %782 = vmatpush.xpose.msra.mxu0 0.0
        %783 = vmatpush.xpose.msra.mxu0 0.0
        %784 = vmatpush.xpose.msra.mxu0 0.0
        %785 = vmatpush.xpose.msra.mxu0 %v768
        %786 = vmatmul.f32.gmra.mxu0 %v766
        %v787 = vpop.f32.mrf.mxu0
        %v788 = vadd.f32 0.0, %v787
        %789 = vdwg.mxu0
        %s790 = scalar_lea.vmem [#allocation6], 48
        %791 = vst.msk [vmem:[%s790] sm:$0xff] %vm586, %v788
        %v792 = vld [vmem:[#allocation2] sm:$0xff]
        %v793 = vld [vmem:[#allocation3] sm:$0xff]
        %795 = vrot.lane.b32.xlu0 %v792, 100
        %v796 = vpop.permute.xlu0 %795
        %798 = vrot.lane.b32.xlu0 %v793, 100
        %v799 = vpop.permute.xlu0 %798
        %v800 = vsel %vm559, %v796, 0
        %v802 = vsel %vm559, %v799, 0
        %804 = vmatpush.xpose.msra.mxu0 0.0
        %805 = vmatpush.xpose.msra.mxu0 0.0
        %806 = vmatpush.xpose.msra.mxu0 0.0
        %807 = vmatpush.xpose.msra.mxu0 0.0
        %808 = vmatpush.xpose.msra.mxu0 0.0
        %809 = vmatpush.xpose.msra.mxu0 0.0
        %810 = vmatpush.xpose.msra.mxu0 0.0
        %811 = vmatpush.xpose.msra.mxu0 0.0
        %812 = vmatpush.xpose.msra.mxu0 0.0
        %813 = vmatpush.xpose.msra.mxu0 0.0
        %814 = vmatpush.xpose.msra.mxu0 0.0
        %815 = vmatpush.xpose.msra.mxu0 0.0
        %816 = vmatpush.xpose.msra.mxu0 0.0
        %817 = vmatpush.xpose.msra.mxu0 0.0
        %818 = vmatpush.xpose.msra.mxu0 0.0
        %819 = vmatpush.xpose.msra.mxu0 %v802
        %820 = vmatmul.f32.gmra.mxu0 %v800
        %v821 = vpop.f32.mrf.mxu0
        %v822 = vadd.f32 0.0, %v821
        %823 = vdwg.mxu0
        %s824 = scalar_lea.vmem [#allocation6], 56
        %825 = vst.msk [vmem:[%s824] sm:$0xff] %vm586, %v822
        %s826 = sld [smem:[#allocation17]]
        %v827 = vld [vmem:[#allocation6] sm:$0xff]
        %v828 = vstv %s826
        %v829 = vmul.f32 %v828, %v827
        %s830 = sld [smem:[#allocation17 + $0x1]]
        %v831 = vld [vmem:[%s620] sm:$0xff]
        %v832 = vstv %s830
        %v833 = vmul.f32 %v832, %v831
        %v834 = vadd.f32 %v829, %v833
        %s835 = sld [smem:[#allocation17 + $0x2]]
        %v836 = vld [vmem:[%s654] sm:$0xff]
        %v837 = vstv %s835
        %v838 = vmul.f32 %v837, %v836
        %v839 = vadd.f32 %v834, %v838
        %s840 = sld [smem:[#allocation17 + $0x3]]
        %v841 = vld [vmem:[%s688] sm:$0xff]
        %v842 = vstv %s840
        %v843 = vmul.f32 %v842, %v841
        %v844 = vadd.f32 %v839, %v843
        %s845 = sld [smem:[#allocation17 + $0x4]]
        %v846 = vld [vmem:[%s722] sm:$0xff]
        %v847 = vstv %s845
        %v848 = vmul.f32 %v847, %v846
        %v849 = vadd.f32 %v844, %v848
        %s850 = sld [smem:[#allocation17 + $0x5]]
        %v851 = vld [vmem:[%s756] sm:$0xff]
        %v852 = vstv %s850
        %v853 = vmul.f32 %v852, %v851
        %v854 = vadd.f32 %v849, %v853
        %s855 = sld [smem:[#allocation17 + $0x6]]
        %v856 = vld [vmem:[%s790] sm:$0xff]
        %v857 = vstv %s855
        %v858 = vmul.f32 %v857, %v856
        %v859 = vadd.f32 %v854, %v858
        %s860 = sld [smem:[#allocation17 + $0x7]]
        %v861 = vld [vmem:[%s824] sm:$0xff]
        %v862 = vstv %s860
        %v863 = vmul.f32 %v862, %v861
        %v864 = vadd.f32 %v859, %v863
        %v865 = vsel %vm586, %v864, -inf
        %866 = vmax.xlane.f32.xlu0 %v865
        %v867 = vpop.xlane.xlu0 %866
        %v868 = vsub.f32 %v864, %v867
        %v869 = vmul.f32 %v868, 1.442695
        %v870 = vpow.pop %v869
        %v871 = vsel %vm586, %v870, 0.0
        %872 = vadd.xlane.f32.xlu0 %v871
        %v873 = vpop.xlane.xlu0 %872
        %v874 = vrcp.pop %v873
        %v875 = vmul.f32 %v873, %v874
        %v876 = vsub.f32 1.0, %v875
        %v877 = vmul.f32 %v874, %v876
        %v878 = vadd.f32 %v874, %v877
        %vm879 = vweird.f32 %v873
        %vm880 = vweird.f32 %v874
        %vm881 = vmor %vm879, %vm880
        %v882 = vsel %vm881, %v874, %v878
        %v883 = vand.u32 2147483647, %v873
        %vm884 = vcmp.eq.f32.partialorder %v883, 8.507059e+37
        %v885 = vand.u32 %v873, 2147483648
        %v886 = vor.u32 1.1754944e-38, %v885
        %v887 = vsel %vm884, %v886, %v882
        %v888 = vmul.f32 %v870, %v887
        %889 = vst.msk [vmem:[#allocation7] sm:$0xff] %vm586, %v888
        %s890 = sld [smem:[#allocation17 + $0x80]]
        %v891 = vld [vmem:[#allocation6] sm:$0xff]
        %v892 = vstv %s890
        %v893 = vmul.f32 %v892, %v891
        %s894 = sld [smem:[#allocation17 + $0x81]]
        %v895 = vld [vmem:[%s620] sm:$0xff]
        %v896 = vstv %s894
        %v897 = vmul.f32 %v896, %v895
        %v898 = vadd.f32 %v893, %v897
        %s899 = sld [smem:[#allocation17 + $0x82]]
        %v900 = vld [vmem:[%s654] sm:$0xff]
        %v901 = vstv %s899
        %v902 = vmul.f32 %v901, %v900
        %v903 = vadd.f32 %v898, %v902
        %s904 = sld [smem:[#allocation17 + $0x83]]
        %v905 = vld [vmem:[%s688] sm:$0xff]
        %v906 = vstv %s904
        %v907 = vmul.f32 %v906, %v905
        %v908 = vadd.f32 %v903, %v907
        %s909 = sld [smem:[#allocation17 + $0x84]]
        %v910 = vld [vmem:[%s722] sm:$0xff]
        %v911 = vstv %s909
        %v912 = vmul.f32 %v911, %v910
        %v913 = vadd.f32 %v908, %v912
        %s914 = sld [smem:[#allocation17 + $0x85]]
        %v915 = vld [vmem:[%s756] sm:$0xff]
        %v916 = vstv %s914
        %v917 = vmul.f32 %v916, %v915
        %v918 = vadd.f32 %v913, %v917
        %s919 = sld [smem:[#allocation17 + $0x86]]
        %v920 = vld [vmem:[%s790] sm:$0xff]
        %v921 = vstv %s919
        %v922 = vmul.f32 %v921, %v920
        %v923 = vadd.f32 %v918, %v922
        %s924 = sld [smem:[#allocation17 + $0x87]]
        %v925 = vld [vmem:[%s824] sm:$0xff]
        %v926 = vstv %s924
        %v927 = vmul.f32 %v926, %v925
        %v928 = vadd.f32 %v923, %v927
        %v929 = vsel %vm586, %v928, -inf
        %930 = vmax.xlane.f32.xlu0 %v929
        %v931 = vpop.xlane.xlu0 %930
        %v932 = vsub.f32 %v928, %v931
        %v933 = vmul.f32 %v932, 1.442695
        %v934 = vpow.pop %v933
        %v935 = vsel %vm586, %v934, 0.0
        %936 = vadd.xlane.f32.xlu0 %v935
        %v937 = vpop.xlane.xlu0 %936
        %v938 = vrcp.pop %v937
        %v939 = vmul.f32 %v937, %v938
        %v940 = vsub.f32 1.0, %v939
        %v941 = vmul.f32 %v938, %v940
        %v942 = vadd.f32 %v938, %v941
        %vm943 = vweird.f32 %v937
        %vm944 = vweird.f32 %v938
        %vm945 = vmor %vm943, %vm944
        %v946 = vsel %vm945, %v938, %v942
        %v947 = vand.u32 2147483647, %v937
        %vm948 = vcmp.eq.f32.partialorder %v947, 8.507059e+37
        %v949 = vand.u32 %v937, 2147483648
        %v950 = vor.u32 1.1754944e-38, %v949
        %v951 = vsel %vm948, %v950, %v946
        %v952 = vmul.f32 %v934, %v951
        %s953 = scalar_lea.vmem [#allocation7], 8
        %954 = vst.msk [vmem:[%s953] sm:$0xff] %vm586, %v952
        %s955 = sld [smem:[#allocation17 + $0x100]]
        %v956 = vld [vmem:[#allocation6] sm:$0xff]
        %v957 = vstv %s955
        %v958 = vmul.f32 %v957, %v956
        %s959 = sld [smem:[#allocation17 + $0x101]]
        %v960 = vld [vmem:[%s620] sm:$0xff]
        %v961 = vstv %s959
        %v962 = vmul.f32 %v961, %v960
        %v963 = vadd.f32 %v958, %v962
        %s964 = sld [smem:[#allocation17 + $0x102]]
        %v965 = vld [vmem:[%s654] sm:$0xff]
        %v966 = vstv %s964
        %v967 = vmul.f32 %v966, %v965
        %v968 = vadd.f32 %v963, %v967
        %s969 = sld [smem:[#allocation17 + $0x103]]
        %v970 = vld [vmem:[%s688] sm:$0xff]
        %v971 = vstv %s969
        %v972 = vmul.f32 %v971, %v970
        %v973 = vadd.f32 %v968, %v972
        %s974 = sld [smem:[#allocation17 + $0x104]]
        %v975 = vld [vmem:[%s722] sm:$0xff]
        %v976 = vstv %s974
        %v977 = vmul.f32 %v976, %v975
        %v978 = vadd.f32 %v973, %v977
        %s979 = sld [smem:[#allocation17 + $0x105]]
        %v980 = vld [vmem:[%s756] sm:$0xff]
        %v981 = vstv %s979
        %v982 = vmul.f32 %v981, %v980
        %v983 = vadd.f32 %v978, %v982
        %s984 = sld [smem:[#allocation17 + $0x106]]
        %v985 = vld [vmem:[%s790] sm:$0xff]
        %v986 = vstv %s984
        %v987 = vmul.f32 %v986, %v985
        %v988 = vadd.f32 %v983, %v987
        %s989 = sld [smem:[#allocation17 + $0x107]]
        %v990 = vld [vmem:[%s824] sm:$0xff]
        %v991 = vstv %s989
        %v992 = vmul.f32 %v991, %v990
        %v993 = vadd.f32 %v988, %v992
        %v994 = vsel %vm586, %v993, -inf
        %995 = vmax.xlane.f32.xlu0 %v994
        %v996 = vpop.xlane.xlu0 %995
        %v997 = vsub.f32 %v993, %v996
        %v998 = vmul.f32 %v997, 1.442695
        %v999 = vpow.pop %v998
        %v1000 = vsel %vm586, %v999, 0.0
        %1001 = vadd.xlane.f32.xlu0 %v1000
        %v1002 = vpop.xlane.xlu0 %1001
        %v1003 = vrcp.pop %v1002
        %v1004 = vmul.f32 %v1002, %v1003
        %v1005 = vsub.f32 1.0, %v1004
        %v1006 = vmul.f32 %v1003, %v1005
        %v1007 = vadd.f32 %v1003, %v1006
        %vm1008 = vweird.f32 %v1002
        %vm1009 = vweird.f32 %v1003
        %vm1010 = vmor %vm1008, %vm1009
        %v1011 = vsel %vm1010, %v1003, %v1007
        %v1012 = vand.u32 2147483647, %v1002
        %vm1013 = vcmp.eq.f32.partialorder %v1012, 8.507059e+37
        %v1014 = vand.u32 %v1002, 2147483648
        %v1015 = vor.u32 1.1754944e-38, %v1014
        %v1016 = vsel %vm1013, %v1015, %v1011
        %v1017 = vmul.f32 %v999, %v1016
        %s1018 = scalar_lea.vmem [#allocation7], 16
        %1019 = vst.msk [vmem:[%s1018] sm:$0xff] %vm586, %v1017
        %s1020 = sld [smem:[#allocation17 + $0x180]]
        %v1021 = vld [vmem:[#allocation6] sm:$0xff]
        %v1022 = vstv %s1020
        %v1023 = vmul.f32 %v1022, %v1021
        %s1024 = sld [smem:[#allocation17 + $0x181]]
        %v1025 = vld [vmem:[%s620] sm:$0xff]
        %v1026 = vstv %s1024
        %v1027 = vmul.f32 %v1026, %v1025
        %v1028 = vadd.f32 %v1023, %v1027
        %s1029 = sld [smem:[#allocation17 + $0x182]]
        %v1030 = vld [vmem:[%s654] sm:$0xff]
        %v1031 = vstv %s1029
        %v1032 = vmul.f32 %v1031, %v1030
        %v1033 = vadd.f32 %v1028, %v1032
        %s1034 = sld [smem:[#allocation17 + $0x183]]
        %v1035 = vld [vmem:[%s688] sm:$0xff]
        %v1036 = vstv %s1034
        %v1037 = vmul.f32 %v1036, %v1035
        %v1038 = vadd.f32 %v1033, %v1037
        %s1039 = sld [smem:[#allocation17 + $0x184]]
        %v1040 = vld [vmem:[%s722] sm:$0xff]
        %v1041 = vstv %s1039
        %v1042 = vmul.f32 %v1041, %v1040
        %v1043 = vadd.f32 %v1038, %v1042
        %s1044 = sld [smem:[#allocation17 + $0x185]]
        %v1045 = vld [vmem:[%s756] sm:$0xff]
        %v1046 = vstv %s1044
        %v1047 = vmul.f32 %v1046, %v1045
        %v1048 = vadd.f32 %v1043, %v1047
        %s1049 = sld [smem:[#allocation17 + $0x186]]
        %v1050 = vld [vmem:[%s790] sm:$0xff]
        %v1051 = vstv %s1049
        %v1052 = vmul.f32 %v1051, %v1050
        %v1053 = vadd.f32 %v1048, %v1052
        %s1054 = sld [smem:[#allocation17 + $0x187]]
        %v1055 = vld [vmem:[%s824] sm:$0xff]
        %v1056 = vstv %s1054
        %v1057 = vmul.f32 %v1056, %v1055
        %v1058 = vadd.f32 %v1053, %v1057
        %v1059 = vsel %vm586, %v1058, -inf
        %1060 = vmax.xlane.f32.xlu0 %v1059
        %v1061 = vpop.xlane.xlu0 %1060
        %v1062 = vsub.f32 %v1058, %v1061
        %v1063 = vmul.f32 %v1062, 1.442695
        %v1064 = vpow.pop %v1063
        %v1065 = vsel %vm586, %v1064, 0.0
        %1066 = vadd.xlane.f32.xlu0 %v1065
        %v1067 = vpop.xlane.xlu0 %1066
        %v1068 = vrcp.pop %v1067
        %v1069 = vmul.f32 %v1067, %v1068
        %v1070 = vsub.f32 1.0, %v1069
        %v1071 = vmul.f32 %v1068, %v1070
        %v1072 = vadd.f32 %v1068, %v1071
        %vm1073 = vweird.f32 %v1067
        %vm1074 = vweird.f32 %v1068
        %vm1075 = vmor %vm1073, %vm1074
        %v1076 = vsel %vm1075, %v1068, %v1072
        %v1077 = vand.u32 2147483647, %v1067
        %vm1078 = vcmp.eq.f32.partialorder %v1077, 8.507059e+37
        %v1079 = vand.u32 %v1067, 2147483648
        %v1080 = vor.u32 1.1754944e-38, %v1079
        %v1081 = vsel %vm1078, %v1080, %v1076
        %v1082 = vmul.f32 %v1064, %v1081
        %s1083 = scalar_lea.vmem [#allocation7], 24
        %1084 = vst.msk [vmem:[%s1083] sm:$0xff] %vm586, %v1082
        %s1085 = sld [smem:[#allocation17 + $0x200]]
        %v1086 = vld [vmem:[#allocation6] sm:$0xff]
        %v1087 = vstv %s1085
        %v1088 = vmul.f32 %v1087, %v1086
        %s1089 = sld [smem:[#allocation17 + $0x201]]
        %v1090 = vld [vmem:[%s620] sm:$0xff]
        %v1091 = vstv %s1089
        %v1092 = vmul.f32 %v1091, %v1090
        %v1093 = vadd.f32 %v1088, %v1092
        %s1094 = sld [smem:[#allocation17 + $0x202]]
        %v1095 = vld [vmem:[%s654] sm:$0xff]
        %v1096 = vstv %s1094
        %v1097 = vmul.f32 %v1096, %v1095
        %v1098 = vadd.f32 %v1093, %v1097
        %s1099 = sld [smem:[#allocation17 + $0x203]]
        %v1100 = vld [vmem:[%s688] sm:$0xff]
        %v1101 = vstv %s1099
        %v1102 = vmul.f32 %v1101, %v1100
        %v1103 = vadd.f32 %v1098, %v1102
        %s1104 = sld [smem:[#allocation17 + $0x204]]
        %v1105 = vld [vmem:[%s722] sm:$0xff]
        %v1106 = vstv %s1104
        %v1107 = vmul.f32 %v1106, %v1105
        %v1108 = vadd.f32 %v1103, %v1107
        %s1109 = sld [smem:[#allocation17 + $0x205]]
        %v1110 = vld [vmem:[%s756] sm:$0xff]
        %v1111 = vstv %s1109
        %v1112 = vmul.f32 %v1111, %v1110
        %v1113 = vadd.f32 %v1108, %v1112
        %s1114 = sld [smem:[#allocation17 + $0x206]]
        %v1115 = vld [vmem:[%s790] sm:$0xff]
        %v1116 = vstv %s1114
        %v1117 = vmul.f32 %v1116, %v1115
        %v1118 = vadd.f32 %v1113, %v1117
        %s1119 = sld [smem:[#allocation17 + $0x207]]
        %v1120 = vld [vmem:[%s824] sm:$0xff]
        %v1121 = vstv %s1119
        %v1122 = vmul.f32 %v1121, %v1120
        %v1123 = vadd.f32 %v1118, %v1122
        %v1124 = vsel %vm586, %v1123, -inf
        %1125 = vmax.xlane.f32.xlu0 %v1124
        %v1126 = vpop.xlane.xlu0 %1125
        %v1127 = vsub.f32 %v1123, %v1126
        %v1128 = vmul.f32 %v1127, 1.442695
        %v1129 = vpow.pop %v1128
        %v1130 = vsel %vm586, %v1129, 0.0
        %1131 = vadd.xlane.f32.xlu0 %v1130
        %v1132 = vpop.xlane.xlu0 %1131
        %v1133 = vrcp.pop %v1132
        %v1134 = vmul.f32 %v1132, %v1133
        %v1135 = vsub.f32 1.0, %v1134
        %v1136 = vmul.f32 %v1133, %v1135
        %v1137 = vadd.f32 %v1133, %v1136
        %vm1138 = vweird.f32 %v1132
        %vm1139 = vweird.f32 %v1133
        %vm1140 = vmor %vm1138, %vm1139
        %v1141 = vsel %vm1140, %v1133, %v1137
        %v1142 = vand.u32 2147483647, %v1132
        %vm1143 = vcmp.eq.f32.partialorder %v1142, 8.507059e+37
        %v1144 = vand.u32 %v1132, 2147483648
        %v1145 = vor.u32 1.1754944e-38, %v1144
        %v1146 = vsel %vm1143, %v1145, %v1141
        %v1147 = vmul.f32 %v1129, %v1146
        %s1148 = scalar_lea.vmem [#allocation7], 32
        %1149 = vst.msk [vmem:[%s1148] sm:$0xff] %vm586, %v1147
        %s1150 = sld [smem:[#allocation17 + $0x280]]
        %v1151 = vld [vmem:[#allocation6] sm:$0xff]
        %v1152 = vstv %s1150
        %v1153 = vmul.f32 %v1152, %v1151
        %s1154 = sld [smem:[#allocation17 + $0x281]]
        %v1155 = vld [vmem:[%s620] sm:$0xff]
        %v1156 = vstv %s1154
        %v1157 = vmul.f32 %v1156, %v1155
        %v1158 = vadd.f32 %v1153, %v1157
        %s1159 = sld [smem:[#allocation17 + $0x282]]
        %v1160 = vld [vmem:[%s654] sm:$0xff]
        %v1161 = vstv %s1159
        %v1162 = vmul.f32 %v1161, %v1160
        %v1163 = vadd.f32 %v1158, %v1162
        %s1164 = sld [smem:[#allocation17 + $0x283]]
        %v1165 = vld [vmem:[%s688] sm:$0xff]
        %v1166 = vstv %s1164
        %v1167 = vmul.f32 %v1166, %v1165
        %v1168 = vadd.f32 %v1163, %v1167
        %s1169 = sld [smem:[#allocation17 + $0x284]]
        %v1170 = vld [vmem:[%s722] sm:$0xff]
        %v1171 = vstv %s1169
        %v1172 = vmul.f32 %v1171, %v1170
        %v1173 = vadd.f32 %v1168, %v1172
        %s1174 = sld [smem:[#allocation17 + $0x285]]
        %v1175 = vld [vmem:[%s756] sm:$0xff]
        %v1176 = vstv %s1174
        %v1177 = vmul.f32 %v1176, %v1175
        %v1178 = vadd.f32 %v1173, %v1177
        %s1179 = sld [smem:[#allocation17 + $0x286]]
        %v1180 = vld [vmem:[%s790] sm:$0xff]
        %v1181 = vstv %s1179
        %v1182 = vmul.f32 %v1181, %v1180
        %v1183 = vadd.f32 %v1178, %v1182
        %s1184 = sld [smem:[#allocation17 + $0x287]]
        %v1185 = vld [vmem:[%s824] sm:$0xff]
        %v1186 = vstv %s1184
        %v1187 = vmul.f32 %v1186, %v1185
        %v1188 = vadd.f32 %v1183, %v1187
        %v1189 = vsel %vm586, %v1188, -inf
        %1190 = vmax.xlane.f32.xlu0 %v1189
        %v1191 = vpop.xlane.xlu0 %1190
        %v1192 = vsub.f32 %v1188, %v1191
        %v1193 = vmul.f32 %v1192, 1.442695
        %v1194 = vpow.pop %v1193
        %v1195 = vsel %vm586, %v1194, 0.0
        %1196 = vadd.xlane.f32.xlu0 %v1195
        %v1197 = vpop.xlane.xlu0 %1196
        %v1198 = vrcp.pop %v1197
        %v1199 = vmul.f32 %v1197, %v1198
        %v1200 = vsub.f32 1.0, %v1199
        %v1201 = vmul.f32 %v1198, %v1200
        %v1202 = vadd.f32 %v1198, %v1201
        %vm1203 = vweird.f32 %v1197
        %vm1204 = vweird.f32 %v1198
        %vm1205 = vmor %vm1203, %vm1204
        %v1206 = vsel %vm1205, %v1198, %v1202
        %v1207 = vand.u32 2147483647, %v1197
        %vm1208 = vcmp.eq.f32.partialorder %v1207, 8.507059e+37
        %v1209 = vand.u32 %v1197, 2147483648
        %v1210 = vor.u32 1.1754944e-38, %v1209
        %v1211 = vsel %vm1208, %v1210, %v1206
        %v1212 = vmul.f32 %v1194, %v1211
        %s1213 = scalar_lea.vmem [#allocation7], 40
        %1214 = vst.msk [vmem:[%s1213] sm:$0xff] %vm586, %v1212
        %s1215 = sld [smem:[#allocation17 + $0x300]]
        %v1216 = vld [vmem:[#allocation6] sm:$0xff]
        %v1217 = vstv %s1215
        %v1218 = vmul.f32 %v1217, %v1216
        %s1219 = sld [smem:[#allocation17 + $0x301]]
        %v1220 = vld [vmem:[%s620] sm:$0xff]
        %v1221 = vstv %s1219
        %v1222 = vmul.f32 %v1221, %v1220
        %v1223 = vadd.f32 %v1218, %v1222
        %s1224 = sld [smem:[#allocation17 + $0x302]]
        %v1225 = vld [vmem:[%s654] sm:$0xff]
        %v1226 = vstv %s1224
        %v1227 = vmul.f32 %v1226, %v1225
        %v1228 = vadd.f32 %v1223, %v1227
        %s1229 = sld [smem:[#allocation17 + $0x303]]
        %v1230 = vld [vmem:[%s688] sm:$0xff]
        %v1231 = vstv %s1229
        %v1232 = vmul.f32 %v1231, %v1230
        %v1233 = vadd.f32 %v1228, %v1232
        %s1234 = sld [smem:[#allocation17 + $0x304]]
        %v1235 = vld [vmem:[%s722] sm:$0xff]
        %v1236 = vstv %s1234
        %v1237 = vmul.f32 %v1236, %v1235
        %v1238 = vadd.f32 %v1233, %v1237
        %s1239 = sld [smem:[#allocation17 + $0x305]]
        %v1240 = vld [vmem:[%s756] sm:$0xff]
        %v1241 = vstv %s1239
        %v1242 = vmul.f32 %v1241, %v1240
        %v1243 = vadd.f32 %v1238, %v1242
        %s1244 = sld [smem:[#allocation17 + $0x306]]
        %v1245 = vld [vmem:[%s790] sm:$0xff]
        %v1246 = vstv %s1244
        %v1247 = vmul.f32 %v1246, %v1245
        %v1248 = vadd.f32 %v1243, %v1247
        %s1249 = sld [smem:[#allocation17 + $0x307]]
        %v1250 = vld [vmem:[%s824] sm:$0xff]
        %v1251 = vstv %s1249
        %v1252 = vmul.f32 %v1251, %v1250
        %v1253 = vadd.f32 %v1248, %v1252
        %v1254 = vsel %vm586, %v1253, -inf
        %1255 = vmax.xlane.f32.xlu0 %v1254
        %v1256 = vpop.xlane.xlu0 %1255
        %v1257 = vsub.f32 %v1253, %v1256
        %v1258 = vmul.f32 %v1257, 1.442695
        %v1259 = vpow.pop %v1258
        %v1260 = vsel %vm586, %v1259, 0.0
        %1261 = vadd.xlane.f32.xlu0 %v1260
        %v1262 = vpop.xlane.xlu0 %1261
        %v1263 = vrcp.pop %v1262
        %v1264 = vmul.f32 %v1262, %v1263
        %v1265 = vsub.f32 1.0, %v1264
        %v1266 = vmul.f32 %v1263, %v1265
        %v1267 = vadd.f32 %v1263, %v1266
        %vm1268 = vweird.f32 %v1262
        %vm1269 = vweird.f32 %v1263
        %vm1270 = vmor %vm1268, %vm1269
        %v1271 = vsel %vm1270, %v1263, %v1267
        %v1272 = vand.u32 2147483647, %v1262
        %vm1273 = vcmp.eq.f32.partialorder %v1272, 8.507059e+37
        %v1274 = vand.u32 %v1262, 2147483648
        %v1275 = vor.u32 1.1754944e-38, %v1274
        %v1276 = vsel %vm1273, %v1275, %v1271
        %v1277 = vmul.f32 %v1259, %v1276
        %s1278 = scalar_lea.vmem [#allocation7], 48
        %1279 = vst.msk [vmem:[%s1278] sm:$0xff] %vm586, %v1277
        %s1280 = sld [smem:[#allocation17 + $0x380]]
        %v1281 = vld [vmem:[#allocation6] sm:$0xff]
        %v1282 = vstv %s1280
        %v1283 = vmul.f32 %v1282, %v1281
        %s1284 = sld [smem:[#allocation17 + $0x381]]
        %v1285 = vld [vmem:[%s620] sm:$0xff]
        %v1286 = vstv %s1284
        %v1287 = vmul.f32 %v1286, %v1285
        %v1288 = vadd.f32 %v1283, %v1287
        %s1289 = sld [smem:[#allocation17 + $0x382]]
        %v1290 = vld [vmem:[%s654] sm:$0xff]
        %v1291 = vstv %s1289
        %v1292 = vmul.f32 %v1291, %v1290
        %v1293 = vadd.f32 %v1288, %v1292
        %s1294 = sld [smem:[#allocation17 + $0x383]]
        %v1295 = vld [vmem:[%s688] sm:$0xff]
        %v1296 = vstv %s1294
        %v1297 = vmul.f32 %v1296, %v1295
        %v1298 = vadd.f32 %v1293, %v1297
        %s1299 = sld [smem:[#allocation17 + $0x384]]
        %v1300 = vld [vmem:[%s722] sm:$0xff]
        %v1301 = vstv %s1299
        %v1302 = vmul.f32 %v1301, %v1300
        %v1303 = vadd.f32 %v1298, %v1302
        %s1304 = sld [smem:[#allocation17 + $0x385]]
        %v1305 = vld [vmem:[%s756] sm:$0xff]
        %v1306 = vstv %s1304
        %v1307 = vmul.f32 %v1306, %v1305
        %v1308 = vadd.f32 %v1303, %v1307
        %s1309 = sld [smem:[#allocation17 + $0x386]]
        %v1310 = vld [vmem:[%s790] sm:$0xff]
        %v1311 = vstv %s1309
        %v1312 = vmul.f32 %v1311, %v1310
        %v1313 = vadd.f32 %v1308, %v1312
        %s1314 = sld [smem:[#allocation17 + $0x387]]
        %v1315 = vld [vmem:[%s824] sm:$0xff]
        %v1316 = vstv %s1314
        %v1317 = vmul.f32 %v1316, %v1315
        %v1318 = vadd.f32 %v1313, %v1317
        %v1319 = vsel %vm586, %v1318, -inf
        %1320 = vmax.xlane.f32.xlu0 %v1319
        %v1321 = vpop.xlane.xlu0 %1320
        %v1322 = vsub.f32 %v1318, %v1321
        %v1323 = vmul.f32 %v1322, 1.442695
        %v1324 = vpow.pop %v1323
        %v1325 = vsel %vm586, %v1324, 0.0
        %1326 = vadd.xlane.f32.xlu0 %v1325
        %v1327 = vpop.xlane.xlu0 %1326
        %v1328 = vrcp.pop %v1327
        %v1329 = vmul.f32 %v1327, %v1328
        %v1330 = vsub.f32 1.0, %v1329
        %v1331 = vmul.f32 %v1328, %v1330
        %v1332 = vadd.f32 %v1328, %v1331
        %vm1333 = vweird.f32 %v1327
        %vm1334 = vweird.f32 %v1328
        %vm1335 = vmor %vm1333, %vm1334
        %v1336 = vsel %vm1335, %v1328, %v1332
        %v1337 = vand.u32 2147483647, %v1327
        %vm1338 = vcmp.eq.f32.partialorder %v1337, 8.507059e+37
        %v1339 = vand.u32 %v1327, 2147483648
        %v1340 = vor.u32 1.1754944e-38, %v1339
        %v1341 = vsel %vm1338, %v1340, %v1336
        %v1342 = vmul.f32 %v1324, %v1341
        %s1343 = scalar_lea.vmem [#allocation7], 56
        %1344 = vst.msk [vmem:[%s1343] sm:$0xff] %vm586, %v1342
        %s1345 = sld [smem:[#allocation18]]
        %v1346 = vld [vmem:[#allocation7] sm:$0xff]
        %v1347 = vstv %s1345
        %v1348 = vmul.f32 %v1347, %v1346
        %s1349 = sld [smem:[#allocation18 + $0x1]]
        %v1350 = vld [vmem:[%s953] sm:$0xff]
        %v1351 = vstv %s1349
        %v1352 = vmul.f32 %v1351, %v1350
        %v1353 = vadd.f32 %v1348, %v1352
        %s1354 = sld [smem:[#allocation18 + $0x2]]
        %v1355 = vld [vmem:[%s1018] sm:$0xff]
        %v1356 = vstv %s1354
        %v1357 = vmul.f32 %v1356, %v1355
        %v1358 = vadd.f32 %v1353, %v1357
        %s1359 = sld [smem:[#allocation18 + $0x3]]
        %v1360 = vld [vmem:[%s1083] sm:$0xff]
        %v1361 = vstv %s1359
        %v1362 = vmul.f32 %v1361, %v1360
        %v1363 = vadd.f32 %v1358, %v1362
        %s1364 = sld [smem:[#allocation18 + $0x4]]
        %v1365 = vld [vmem:[%s1148] sm:$0xff]
        %v1366 = vstv %s1364
        %v1367 = vmul.f32 %v1366, %v1365
        %v1368 = vadd.f32 %v1363, %v1367
        %s1369 = sld [smem:[#allocation18 + $0x5]]
        %v1370 = vld [vmem:[%s1213] sm:$0xff]
        %v1371 = vstv %s1369
        %v1372 = vmul.f32 %v1371, %v1370
        %v1373 = vadd.f32 %v1368, %v1372
        %s1374 = sld [smem:[#allocation18 + $0x6]]
        %v1375 = vld [vmem:[%s1278] sm:$0xff]
        %v1376 = vstv %s1374
        %v1377 = vmul.f32 %v1376, %v1375
        %v1378 = vadd.f32 %v1373, %v1377
        %s1379 = sld [smem:[#allocation18 + $0x7]]
        %v1380 = vld [vmem:[%s1343] sm:$0xff]
        %v1381 = vstv %s1379
        %v1382 = vmul.f32 %v1381, %v1380
        %v1383 = vadd.f32 %v1378, %v1382
        %v1384 = vld [vmem:[#allocation4] sm:$0xff]
        %v1386 = vsel %vm586, %v1383, 0
        %1388 = vmatpush.msra.mxu0 0.0
        %1389 = vmatpush.msra.mxu0 0.0
        %1390 = vmatpush.msra.mxu0 0.0
        %1391 = vmatpush.msra.mxu0 0.0
        %1392 = vmatpush.msra.mxu0 0.0
        %1393 = vmatpush.msra.mxu0 0.0
        %1394 = vmatpush.msra.mxu0 0.0
        %1395 = vmatpush.msra.mxu0 0.0
        %1396 = vmatpush.msra.mxu0 0.0
        %1397 = vmatpush.msra.mxu0 0.0
        %1398 = vmatpush.msra.mxu0 0.0
        %1399 = vmatpush.msra.mxu0 0.0
        %1400 = vmatpush.msra.mxu0 0.0
        %1401 = vmatpush.msra.mxu0 0.0
        %1402 = vmatpush.msra.mxu0 0.0
        %1403 = vmatpush.msra.mxu0 %v1384
        %1404 = vmatmul.f32.gmra.mxu0 %v1386
        %v1405 = vpop.f32.mrf.mxu0
        %v1406 = vadd.f32 0.0, %v1405
        %1407 = vdwg.mxu0
        %s1408 = sld [smem:[#allocation18 + $0x80]]
        %v1409 = vstv %s1408
        %v1410 = vmul.f32 %v1409, %v1346
        %s1411 = sld [smem:[#allocation18 + $0x81]]
        %v1412 = vstv %s1411
        %v1413 = vmul.f32 %v1412, %v1350
        %v1414 = vadd.f32 %v1410, %v1413
        %s1415 = sld [smem:[#allocation18 + $0x82]]
        %v1416 = vstv %s1415
        %v1417 = vmul.f32 %v1416, %v1355
        %v1418 = vadd.f32 %v1414, %v1417
        %s1419 = sld [smem:[#allocation18 + $0x83]]
        %v1420 = vstv %s1419
        %v1421 = vmul.f32 %v1420, %v1360
        %v1422 = vadd.f32 %v1418, %v1421
        %s1423 = sld [smem:[#allocation18 + $0x84]]
        %v1424 = vstv %s1423
        %v1425 = vmul.f32 %v1424, %v1365
        %v1426 = vadd.f32 %v1422, %v1425
        %s1427 = sld [smem:[#allocation18 + $0x85]]
        %v1428 = vstv %s1427
        %v1429 = vmul.f32 %v1428, %v1370
        %v1430 = vadd.f32 %v1426, %v1429
        %s1431 = sld [smem:[#allocation18 + $0x86]]
        %v1432 = vstv %s1431
        %v1433 = vmul.f32 %v1432, %v1375
        %v1434 = vadd.f32 %v1430, %v1433
        %s1435 = sld [smem:[#allocation18 + $0x87]]
        %v1436 = vstv %s1435
        %v1437 = vmul.f32 %v1436, %v1380
        %v1438 = vadd.f32 %v1434, %v1437
        %1440 = vrot.lane.b32.xlu0 %v1384, 124
        %v1441 = vpop.permute.xlu0 %1440
        %v1444 = vsel %vm586, %v1438, 0
        %1446 = vmatpush.msra.mxu0 0.0
        %1447 = vmatpush.msra.mxu0 0.0
        %1448 = vmatpush.msra.mxu0 0.0
        %1449 = vmatpush.msra.mxu0 0.0
        %1450 = vmatpush.msra.mxu0 0.0
        %1451 = vmatpush.msra.mxu0 0.0
        %1452 = vmatpush.msra.mxu0 0.0
        %1453 = vmatpush.msra.mxu0 0.0
        %1454 = vmatpush.msra.mxu0 0.0
        %1455 = vmatpush.msra.mxu0 0.0
        %1456 = vmatpush.msra.mxu0 0.0
        %1457 = vmatpush.msra.mxu0 0.0
        %1458 = vmatpush.msra.mxu0 0.0
        %1459 = vmatpush.msra.mxu0 0.0
        %1460 = vmatpush.msra.mxu0 0.0
        %1461 = vmatpush.msra.mxu0 %v1441
        %1462 = vmatmul.f32.gmra.mxu0 %v1444
        %v1463 = vpop.f32.mrf.mxu0
        %v1464 = vadd.f32 0.0, %v1463
        %1465 = vdwg.mxu0
        %s1466 = sld [smem:[#allocation18 + $0x100]]
        %v1467 = vstv %s1466
        %v1468 = vmul.f32 %v1467, %v1346
        %s1469 = sld [smem:[#allocation18 + $0x101]]
        %v1470 = vstv %s1469
        %v1471 = vmul.f32 %v1470, %v1350
        %v1472 = vadd.f32 %v1468, %v1471
        %s1473 = sld [smem:[#allocation18 + $0x102]]
        %v1474 = vstv %s1473
        %v1475 = vmul.f32 %v1474, %v1355
        %v1476 = vadd.f32 %v1472, %v1475
        %s1477 = sld [smem:[#allocation18 + $0x103]]
        %v1478 = vstv %s1477
        %v1479 = vmul.f32 %v1478, %v1360
        %v1480 = vadd.f32 %v1476, %v1479
        %s1481 = sld [smem:[#allocation18 + $0x104]]
        %v1482 = vstv %s1481
        %v1483 = vmul.f32 %v1482, %v1365
        %v1484 = vadd.f32 %v1480, %v1483
        %s1485 = sld [smem:[#allocation18 + $0x105]]
        %v1486 = vstv %s1485
        %v1487 = vmul.f32 %v1486, %v1370
        %v1488 = vadd.f32 %v1484, %v1487
        %s1489 = sld [smem:[#allocation18 + $0x106]]
        %v1490 = vstv %s1489
        %v1491 = vmul.f32 %v1490, %v1375
        %v1492 = vadd.f32 %v1488, %v1491
        %s1493 = sld [smem:[#allocation18 + $0x107]]
        %v1494 = vstv %s1493
        %v1495 = vmul.f32 %v1494, %v1380
        %v1496 = vadd.f32 %v1492, %v1495
        %1497 = vrot.lane.b32.xlu0 %v1384, 120
        %v1498 = vpop.permute.xlu0 %1497
        %v1501 = vsel %vm586, %v1496, 0
        %1503 = vmatpush.msra.mxu0 0.0
        %1504 = vmatpush.msra.mxu0 0.0
        %1505 = vmatpush.msra.mxu0 0.0
        %1506 = vmatpush.msra.mxu0 0.0
        %1507 = vmatpush.msra.mxu0 0.0
        %1508 = vmatpush.msra.mxu0 0.0
        %1509 = vmatpush.msra.mxu0 0.0
        %1510 = vmatpush.msra.mxu0 0.0
        %1511 = vmatpush.msra.mxu0 0.0
        %1512 = vmatpush.msra.mxu0 0.0
        %1513 = vmatpush.msra.mxu0 0.0
        %1514 = vmatpush.msra.mxu0 0.0
        %1515 = vmatpush.msra.mxu0 0.0
        %1516 = vmatpush.msra.mxu0 0.0
        %1517 = vmatpush.msra.mxu0 0.0
        %1518 = vmatpush.msra.mxu0 %v1498
        %1519 = vmatmul.f32.gmra.mxu0 %v1501
        %v1520 = vpop.f32.mrf.mxu0
        %v1521 = vadd.f32 0.0, %v1520
        %1522 = vdwg.mxu0
        %s1523 = sld [smem:[#allocation18 + $0x180]]
        %v1524 = vstv %s1523
        %v1525 = vmul.f32 %v1524, %v1346
        %s1526 = sld [smem:[#allocation18 + $0x181]]
        %v1527 = vstv %s1526
        %v1528 = vmul.f32 %v1527, %v1350
        %v1529 = vadd.f32 %v1525, %v1528
        %s1530 = sld [smem:[#allocation18 + $0x182]]
        %v1531 = vstv %s1530
        %v1532 = vmul.f32 %v1531, %v1355
        %v1533 = vadd.f32 %v1529, %v1532
        %s1534 = sld [smem:[#allocation18 + $0x183]]
        %v1535 = vstv %s1534
        %v1536 = vmul.f32 %v1535, %v1360
        %v1537 = vadd.f32 %v1533, %v1536
        %s1538 = sld [smem:[#allocation18 + $0x184]]
        %v1539 = vstv %s1538
        %v1540 = vmul.f32 %v1539, %v1365
        %v1541 = vadd.f32 %v1537, %v1540
        %s1542 = sld [smem:[#allocation18 + $0x185]]
        %v1543 = vstv %s1542
        %v1544 = vmul.f32 %v1543, %v1370
        %v1545 = vadd.f32 %v1541, %v1544
        %s1546 = sld [smem:[#allocation18 + $0x186]]
        %v1547 = vstv %s1546
        %v1548 = vmul.f32 %v1547, %v1375
        %v1549 = vadd.f32 %v1545, %v1548
        %s1550 = sld [smem:[#allocation18 + $0x187]]
        %v1551 = vstv %s1550
        %v1552 = vmul.f32 %v1551, %v1380
        %v1553 = vadd.f32 %v1549, %v1552
        %1554 = vrot.lane.b32.xlu0 %v1384, 116
        %v1555 = vpop.permute.xlu0 %1554
        %v1558 = vsel %vm586, %v1553, 0
        %1560 = vmatpush.msra.mxu0 0.0
        %1561 = vmatpush.msra.mxu0 0.0
        %1562 = vmatpush.msra.mxu0 0.0
        %1563 = vmatpush.msra.mxu0 0.0
        %1564 = vmatpush.msra.mxu0 0.0
        %1565 = vmatpush.msra.mxu0 0.0
        %1566 = vmatpush.msra.mxu0 0.0
        %1567 = vmatpush.msra.mxu0 0.0
        %1568 = vmatpush.msra.mxu0 0.0
        %1569 = vmatpush.msra.mxu0 0.0
        %1570 = vmatpush.msra.mxu0 0.0
        %1571 = vmatpush.msra.mxu0 0.0
        %1572 = vmatpush.msra.mxu0 0.0
        %1573 = vmatpush.msra.mxu0 0.0
        %1574 = vmatpush.msra.mxu0 0.0
        %1575 = vmatpush.msra.mxu0 %v1555
        %1576 = vmatmul.f32.gmra.mxu0 %v1558
        %v1577 = vpop.f32.mrf.mxu0
        %v1578 = vadd.f32 0.0, %v1577
        %1579 = vdwg.mxu0
        %s1580 = sld [smem:[#allocation18 + $0x200]]
        %v1581 = vstv %s1580
        %v1582 = vmul.f32 %v1581, %v1346
        %s1583 = sld [smem:[#allocation18 + $0x201]]
        %v1584 = vstv %s1583
        %v1585 = vmul.f32 %v1584, %v1350
        %v1586 = vadd.f32 %v1582, %v1585
        %s1587 = sld [smem:[#allocation18 + $0x202]]
        %v1588 = vstv %s1587
        %v1589 = vmul.f32 %v1588, %v1355
        %v1590 = vadd.f32 %v1586, %v1589
        %s1591 = sld [smem:[#allocation18 + $0x203]]
        %v1592 = vstv %s1591
        %v1593 = vmul.f32 %v1592, %v1360
        %v1594 = vadd.f32 %v1590, %v1593
        %s1595 = sld [smem:[#allocation18 + $0x204]]
        %v1596 = vstv %s1595
        %v1597 = vmul.f32 %v1596, %v1365
        %v1598 = vadd.f32 %v1594, %v1597
        %s1599 = sld [smem:[#allocation18 + $0x205]]
        %v1600 = vstv %s1599
        %v1601 = vmul.f32 %v1600, %v1370
        %v1602 = vadd.f32 %v1598, %v1601
        %s1603 = sld [smem:[#allocation18 + $0x206]]
        %v1604 = vstv %s1603
        %v1605 = vmul.f32 %v1604, %v1375
        %v1606 = vadd.f32 %v1602, %v1605
        %s1607 = sld [smem:[#allocation18 + $0x207]]
        %v1608 = vstv %s1607
        %v1609 = vmul.f32 %v1608, %v1380
        %v1610 = vadd.f32 %v1606, %v1609
        %1611 = vrot.lane.b32.xlu0 %v1384, 112
        %v1612 = vpop.permute.xlu0 %1611
        %v1615 = vsel %vm586, %v1610, 0
        %1617 = vmatpush.msra.mxu0 0.0
        %1618 = vmatpush.msra.mxu0 0.0
        %1619 = vmatpush.msra.mxu0 0.0
        %1620 = vmatpush.msra.mxu0 0.0
        %1621 = vmatpush.msra.mxu0 0.0
        %1622 = vmatpush.msra.mxu0 0.0
        %1623 = vmatpush.msra.mxu0 0.0
        %1624 = vmatpush.msra.mxu0 0.0
        %1625 = vmatpush.msra.mxu0 0.0
        %1626 = vmatpush.msra.mxu0 0.0
        %1627 = vmatpush.msra.mxu0 0.0
        %1628 = vmatpush.msra.mxu0 0.0
        %1629 = vmatpush.msra.mxu0 0.0
        %1630 = vmatpush.msra.mxu0 0.0
        %1631 = vmatpush.msra.mxu0 0.0
        %1632 = vmatpush.msra.mxu0 %v1612
        %1633 = vmatmul.f32.gmra.mxu0 %v1615
        %v1634 = vpop.f32.mrf.mxu0
        %v1635 = vadd.f32 0.0, %v1634
        %1636 = vdwg.mxu0
        %s1637 = sld [smem:[#allocation18 + $0x280]]
        %v1638 = vstv %s1637
        %v1639 = vmul.f32 %v1638, %v1346
        %s1640 = sld [smem:[#allocation18 + $0x281]]
        %v1641 = vstv %s1640
        %v1642 = vmul.f32 %v1641, %v1350
        %v1643 = vadd.f32 %v1639, %v1642
        %s1644 = sld [smem:[#allocation18 + $0x282]]
        %v1645 = vstv %s1644
        %v1646 = vmul.f32 %v1645, %v1355
        %v1647 = vadd.f32 %v1643, %v1646
        %s1648 = sld [smem:[#allocation18 + $0x283]]
        %v1649 = vstv %s1648
        %v1650 = vmul.f32 %v1649, %v1360
        %v1651 = vadd.f32 %v1647, %v1650
        %s1652 = sld [smem:[#allocation18 + $0x284]]
        %v1653 = vstv %s1652
        %v1654 = vmul.f32 %v1653, %v1365
        %v1655 = vadd.f32 %v1651, %v1654
        %s1656 = sld [smem:[#allocation18 + $0x285]]
        %v1657 = vstv %s1656
        %v1658 = vmul.f32 %v1657, %v1370
        %v1659 = vadd.f32 %v1655, %v1658
        %s1660 = sld [smem:[#allocation18 + $0x286]]
        %v1661 = vstv %s1660
        %v1662 = vmul.f32 %v1661, %v1375
        %v1663 = vadd.f32 %v1659, %v1662
        %s1664 = sld [smem:[#allocation18 + $0x287]]
        %v1665 = vstv %s1664
        %v1666 = vmul.f32 %v1665, %v1380
        %v1667 = vadd.f32 %v1663, %v1666
        %1668 = vrot.lane.b32.xlu0 %v1384, 108
        %v1669 = vpop.permute.xlu0 %1668
        %v1672 = vsel %vm586, %v1667, 0
        %1674 = vmatpush.msra.mxu0 0.0
        %1675 = vmatpush.msra.mxu0 0.0
        %1676 = vmatpush.msra.mxu0 0.0
        %1677 = vmatpush.msra.mxu0 0.0
        %1678 = vmatpush.msra.mxu0 0.0
        %1679 = vmatpush.msra.mxu0 0.0
        %1680 = vmatpush.msra.mxu0 0.0
        %1681 = vmatpush.msra.mxu0 0.0
        %1682 = vmatpush.msra.mxu0 0.0
        %1683 = vmatpush.msra.mxu0 0.0
        %1684 = vmatpush.msra.mxu0 0.0
        %1685 = vmatpush.msra.mxu0 0.0
        %1686 = vmatpush.msra.mxu0 0.0
        %1687 = vmatpush.msra.mxu0 0.0
        %1688 = vmatpush.msra.mxu0 0.0
        %1689 = vmatpush.msra.mxu0 %v1669
        %1690 = vmatmul.f32.gmra.mxu0 %v1672
        %v1691 = vpop.f32.mrf.mxu0
        %v1692 = vadd.f32 0.0, %v1691
        %1693 = vdwg.mxu0
        %s1694 = sld [smem:[#allocation18 + $0x300]]
        %v1695 = vstv %s1694
        %v1696 = vmul.f32 %v1695, %v1346
        %s1697 = sld [smem:[#allocation18 + $0x301]]
        %v1698 = vstv %s1697
        %v1699 = vmul.f32 %v1698, %v1350
        %v1700 = vadd.f32 %v1696, %v1699
        %s1701 = sld [smem:[#allocation18 + $0x302]]
        %v1702 = vstv %s1701
        %v1703 = vmul.f32 %v1702, %v1355
        %v1704 = vadd.f32 %v1700, %v1703
        %s1705 = sld [smem:[#allocation18 + $0x303]]
        %v1706 = vstv %s1705
        %v1707 = vmul.f32 %v1706, %v1360
        %v1708 = vadd.f32 %v1704, %v1707
        %s1709 = sld [smem:[#allocation18 + $0x304]]
        %v1710 = vstv %s1709
        %v1711 = vmul.f32 %v1710, %v1365
        %v1712 = vadd.f32 %v1708, %v1711
        %s1713 = sld [smem:[#allocation18 + $0x305]]
        %v1714 = vstv %s1713
        %v1715 = vmul.f32 %v1714, %v1370
        %v1716 = vadd.f32 %v1712, %v1715
        %s1717 = sld [smem:[#allocation18 + $0x306]]
        %v1718 = vstv %s1717
        %v1719 = vmul.f32 %v1718, %v1375
        %v1720 = vadd.f32 %v1716, %v1719
        %s1721 = sld [smem:[#allocation18 + $0x307]]
        %v1722 = vstv %s1721
        %v1723 = vmul.f32 %v1722, %v1380
        %v1724 = vadd.f32 %v1720, %v1723
        %1725 = vrot.lane.b32.xlu0 %v1384, 104
        %v1726 = vpop.permute.xlu0 %1725
        %v1729 = vsel %vm586, %v1724, 0
        %1731 = vmatpush.msra.mxu0 0.0
        %1732 = vmatpush.msra.mxu0 0.0
        %1733 = vmatpush.msra.mxu0 0.0
        %1734 = vmatpush.msra.mxu0 0.0
        %1735 = vmatpush.msra.mxu0 0.0
        %1736 = vmatpush.msra.mxu0 0.0
        %1737 = vmatpush.msra.mxu0 0.0
        %1738 = vmatpush.msra.mxu0 0.0
        %1739 = vmatpush.msra.mxu0 0.0
        %1740 = vmatpush.msra.mxu0 0.0
        %1741 = vmatpush.msra.mxu0 0.0
        %1742 = vmatpush.msra.mxu0 0.0
        %1743 = vmatpush.msra.mxu0 0.0
        %1744 = vmatpush.msra.mxu0 0.0
        %1745 = vmatpush.msra.mxu0 0.0
        %1746 = vmatpush.msra.mxu0 %v1726
        %1747 = vmatmul.f32.gmra.mxu0 %v1729
        %v1748 = vpop.f32.mrf.mxu0
        %v1749 = vadd.f32 0.0, %v1748
        %1750 = vdwg.mxu0
        %s1751 = sld [smem:[#allocation18 + $0x380]]
        %v1752 = vstv %s1751
        %v1753 = vmul.f32 %v1752, %v1346
        %s1754 = sld [smem:[#allocation18 + $0x381]]
        %v1755 = vstv %s1754
        %v1756 = vmul.f32 %v1755, %v1350
        %v1757 = vadd.f32 %v1753, %v1756
        %s1758 = sld [smem:[#allocation18 + $0x382]]
        %v1759 = vstv %s1758
        %v1760 = vmul.f32 %v1759, %v1355
        %v1761 = vadd.f32 %v1757, %v1760
        %s1762 = sld [smem:[#allocation18 + $0x383]]
        %v1763 = vstv %s1762
        %v1764 = vmul.f32 %v1763, %v1360
        %v1765 = vadd.f32 %v1761, %v1764
        %s1766 = sld [smem:[#allocation18 + $0x384]]
        %v1767 = vstv %s1766
        %v1768 = vmul.f32 %v1767, %v1365
        %v1769 = vadd.f32 %v1765, %v1768
        %s1770 = sld [smem:[#allocation18 + $0x385]]
        %v1771 = vstv %s1770
        %v1772 = vmul.f32 %v1771, %v1370
        %v1773 = vadd.f32 %v1769, %v1772
        %s1774 = sld [smem:[#allocation18 + $0x386]]
        %v1775 = vstv %s1774
        %v1776 = vmul.f32 %v1775, %v1375
        %v1777 = vadd.f32 %v1773, %v1776
        %s1778 = sld [smem:[#allocation18 + $0x387]]
        %v1779 = vstv %s1778
        %v1780 = vmul.f32 %v1779, %v1380
        %v1781 = vadd.f32 %v1777, %v1780
        %1782 = vrot.lane.b32.xlu0 %v1384, 100
        %v1783 = vpop.permute.xlu0 %1782
        %v1786 = vsel %vm586, %v1781, 0
        %1788 = vmatpush.msra.mxu0 0.0
        %1789 = vmatpush.msra.mxu0 0.0
        %1790 = vmatpush.msra.mxu0 0.0
        %1791 = vmatpush.msra.mxu0 0.0
        %1792 = vmatpush.msra.mxu0 0.0
        %1793 = vmatpush.msra.mxu0 0.0
        %1794 = vmatpush.msra.mxu0 0.0
        %1795 = vmatpush.msra.mxu0 0.0
        %1796 = vmatpush.msra.mxu0 0.0
        %1797 = vmatpush.msra.mxu0 0.0
        %1798 = vmatpush.msra.mxu0 0.0
        %1799 = vmatpush.msra.mxu0 0.0
        %1800 = vmatpush.msra.mxu0 0.0
        %1801 = vmatpush.msra.mxu0 0.0
        %1802 = vmatpush.msra.mxu0 0.0
        %1803 = vmatpush.msra.mxu0 %v1783
        %1804 = vmatmul.f32.gmra.mxu0 %v1786
        %v1805 = vpop.f32.mrf.mxu0
        %v1806 = vadd.f32 0.0, %v1805
        %1807 = vdwg.mxu0
        %1809 = vrot.lane.b32.xlu0 %v1464, 4
        %v1810 = vpop.permute.xlu0 %1809
        %1813 = vrot.lane.b32.xlu0 %v1521, 8
        %v1814 = vpop.permute.xlu0 %1813
        %1817 = vrot.lane.b32.xlu0 %v1578, 12
        %v1818 = vpop.permute.xlu0 %1817
        %1821 = vrot.lane.b32.xlu0 %v1635, 16
        %v1822 = vpop.permute.xlu0 %1821
        %1825 = vrot.lane.b32.xlu0 %v1692, 20
        %v1826 = vpop.permute.xlu0 %1825
        %1829 = vrot.lane.b32.xlu0 %v1749, 24
        %v1830 = vpop.permute.xlu0 %1829
        %1833 = vrot.lane.b32.xlu0 %v1806, 28
        %v1834 = vpop.permute.xlu0 %1833
        %v1836 = vsel %vm559, %v1406, %v1810
        %v1837 = vsel %vm586, %v1836, %v1814
        %vm1838 = vcmask 97280
        %v1839 = vsel %vm1838, %v1837, %v1818
        %vm1840 = vcmask 130048
        %v1841 = vsel %vm1840, %v1839, %v1822
        %vm1842 = vcmask 162816
        %v1843 = vsel %vm1842, %v1841, %v1826
        %vm1844 = vcmask 195584
        %v1845 = vsel %vm1844, %v1843, %v1830
        %vm1846 = vcmask 228352
        %v1847 = vsel %vm1846, %v1845, %v1834
        %v1848 = vld [vmem:[#allocation5] sm:$0x1]
        %v1849 = vld [vmem:[%s6] sm:$0x1]
        %v1850 = vmul.f32 %v1848, %v1849
        %v1852 = vperm.slane %v1850, 0
        %v1854 = vadd.f32 %v1847, %v1852
        %v1855 = vld [vmem:[#allocation20] sm:$0xff]
        %v1856 = vld [vmem:[#allocation20 + $0x8] sm:$0xff]
        %v1857 = vld [vmem:[#allocation20 + $0x10] sm:$0xff]
        %v1858 = vld [vmem:[#allocation20 + $0x18] sm:$0xff]
        %v1859 = vld [vmem:[%s8] sm:$0x1]
        %v1861 = vperm.slane %v1859, 0
        %v1864 = vsel %vm532, %v1854, 0
        %1866 = vmatpush.msra.mxu0 0.0
        %1867 = vmatpush.msra.mxu0 0.0
        %1868 = vmatpush.msra.mxu0 0.0
        %1869 = vmatpush.msra.mxu0 0.0
        %1870 = vmatpush.msra.mxu0 0.0
        %1871 = vmatpush.msra.mxu0 0.0
        %1872 = vmatpush.msra.mxu0 0.0
        %1873 = vmatpush.msra.mxu0 0.0
        %1874 = vmatpush.msra.mxu0 0.0
        %1875 = vmatpush.msra.mxu0 0.0
        %1876 = vmatpush.msra.mxu0 0.0
        %1877 = vmatpush.msra.mxu0 0.0
        %1878 = vmatpush.msra.mxu0 %v1858
        %1879 = vmatpush.msra.mxu0 %v1857
        %1880 = vmatpush.msra.mxu0 %v1856
        %1881 = vmatpush.msra.mxu0 %v1855
        %1882 = vmatmul.f32.gmra.mxu0 %v1864
        %v1883 = vpop.f32.mrf.mxu0
        %v1884 = vadd.f32 %v1861, %v1883
        %1885 = vdwg.mxu0
        %1886 = vst.msk [vmem:[%s456] sm:$0xff] %vm532, %v1884
        %s1887 = sand.u32 %s246, 1
        %s1888 = scalar_lea.sflag [#allocation10], %s1887
        %s1889 = sand.u32 %s246, 1
        %s1890 = smul.addr %s1889, 8
        %s1891 = scalar_lea.vmem [#allocation21], %s1890
        // Predicated region
        $region89: #{tpu_custom_call.1} parent=55 // pred_check
          %p1892 = pneg %p256
        $region90: #{tpu_custom_call.1} parent=55 // pred_check_branch
          %1894 = sbr.rel (%p1892) target = $region92
        $region91: #{tpu_custom_call.1} parent=55 // pred_region
          %1896 = vsyncadd %s1888, 0
          %s1897 = sadd.s32 %s35, %s34
          %s1898 = smul.addr %s1897, 8
          %s1899 = scalar_lea.hbm %s9, %s1898
          %s1901 = sshll.u32 %s1891, 4
          %s1902 = int_to_ptr.vmem [resolvable:$true] %s1901
          %s1903 = sshll.u32 %s1899, 4
          %s1904 = int_to_ptr.hbm [resolvable:$true] %s1903
          %1906 = dma.vmem_to_hbm [thread:$0]  %s1902, 128, %s1904, %s1888
        $region92: #{tpu_custom_call.1} parent=55 // pred_fallthru
          _
      $region56: #{tpu_custom_call.1} parent=5 // pred_fallthru
        _
      %p1907 = scmp.le.s32.totalorder 2, %s25
      // Predicated region
      $region93: #{tpu_custom_call.1} parent=5 // pred_check
        %p1908 = pneg %p1907
      $region94: #{tpu_custom_call.1} parent=5 // pred_check_branch
        %1910 = sbr.rel (%p1908) target = $region96
      $region95: #{tpu_custom_call.1} parent=5 // pred_region
        %s1911 = ssub.s32 %s25, 2
        // Predicated region
        $region97: #{tpu_custom_call.1} parent=95 // pred_check
          %p1912 = pneg %p262
        $region98: #{tpu_custom_call.1} parent=95 // pred_check_branch
          %1914 = sbr.rel (%p1912) target = $region100
        $region99: #{tpu_custom_call.1} parent=95 // pred_region
          %s1915 = sand.u32 %s247, 1
          %s1916 = scalar_lea.sflag [#allocation10], %s1915
          %s1917 = sand.u32 %s247, 1
          %s1918 = smul.addr %s1917, 8
          %s1919 = scalar_lea.vmem [#allocation21], %s1918
          %1921 = dma.done %s1916, 128
        $region100: #{tpu_custom_call.1} parent=95 // pred_fallthru
          _
      $region96: #{tpu_custom_call.1} parent=5 // pred_fallthru
        _
    $region6: #{tpu_custom_call.1} parent=1 // loop_footer
      %s29 = sadd.s32 1, %s25
    $region7: #{tpu_custom_call.1} parent=1 // loop_footer_branch
      %24 = sbr.rel target = $region3
    $region8: #{tpu_custom_call.1} parent=1 // loop_exit
      _
    %1922 = vsyncpa [#allocation9], 1
    %s1923 = scalar_lea.sflag [#allocation9], 1
    %1924 = vsyncpa %s1923, 1
    %1925 = vsyncpa [#allocation13], 1
    %1926 = vsyncpa [#allocation16], 1
    %1927 = vsyncpa [#allocation10], 1
    %s1928 = scalar_lea.sflag [#allocation10], 1
    %1929 = vsyncpa %s1928, 1
    %1930 = vsyncpa [#allocation11], 1
    %s1931 = scalar_lea.sflag [#allocation11], 1
    %1932 = vsyncpa %s1931, 1
    %1933 = vsyncpa [#allocation19], 1

</llo_original>
